<compile_context>
chip_gen: v7x
topology: tpu7x:2x2x1
jax: 0.10.0
libtpu: 0.0.40
codegen_flags: <defaults>
</compile_context>

<pallas_src>
import numpy as np

import jax
import jax.numpy as jnp
from jax import lax
from jax.experimental import pallas as pl
from jax.experimental.pallas import tpu as pltpu

EPS = 1e-5  # nn.BatchNorm2d default eps

# SubBRC configs of NetSimpleConv2FC (BN -> ReLU -> Conv2d)
_BLOCK_CFGS = (
    dict(kh=3, kw=3, stride=2, pad=1, has_bn=0, has_nonlinear=0),  # conv1_sub
    dict(kh=3, kw=3, stride=2, pad=1, has_bn=1, has_nonlinear=1),  # conv2_sub
    dict(kh=3, kw=3, stride=2, pad=1, has_bn=1, has_nonlinear=1),  # conv3_sub
    dict(kh=3, kw=3, stride=2, pad=1, has_bn=1, has_nonlinear=1),  # conv4_sub
    dict(kh=2, kw=2, stride=1, pad=0, has_bn=1, has_nonlinear=1),  # conv5_sub ('valid')
    dict(kh=1, kw=1, stride=1, pad=0, has_bn=1, has_nonlinear=1),  # conv6_sub ('valid')
)


# ---------------------------------------------------------------------------
# Fused whole-network kernel
# ---------------------------------------------------------------------------
def _make_kernel(metas, batch, use_softmax):
    """Fused whole-net kernel.  Input refs, in order:
         x : (N*H0, W0*C0) f32 lane-packed, batch-stacked input
         per layer: [sel (kh, N*Ho, N*H) bf16]  G (kh*W*C, Wo*O) bf16
                    b (1, Wo*O) f32
       followed by the (N, numClass) f32 output ref."""

    def kernel(*refs):
        out_ref = refs[-1]
        refs = refs[:-1]
        a = refs[0][...].astype(jnp.float32)          # stacked (N*H, W*C)
        cursor = 1

        for meta in metas:
            H, W, C = meta["H"], meta["W"], meta["C"]
            kh = meta["kh"]

            if meta["need_sel"]:
                sel_ref = refs[cursor]
                cursor += 1
            else:
                sel_ref = None
            g_ref = refs[cursor]
            b_ref = refs[cursor + 1]
            cursor += 2

            # ---- BatchNorm (training-mode batch stats, gamma=1, beta=0) ----
            if meta["has_bn"]:
                tot = jnp.sum(a, axis=0, keepdims=True)          # (1, W*C)
                totsq = jnp.sum(a * a, axis=0, keepdims=True)    # (1, W*C)
                st = jnp.concatenate([tot, totsq], axis=0)       # (2, W*C)
                # log2(W) circular-roll tree over the exact W*C lane axis:
                # afterwards EVERY lane w*C+c holds the channel-c total, i.e.
                # the lane->channel fold and the channel->lane broadcast happen
                # in one pass on the XLU (no comb matmuls, no masks).
                k = W // 2
                while k >= 1:
                    st = st + pltpu.roll(st, shift=k * C, axis=1)
                    k //= 2
                inv_cnt = 1.0 / float(batch * H * W)
                mean_l = st[0:1, :] * inv_cnt
                var_l = st[1:2, :] * inv_cnt - mean_l * mean_l   # biased variance
                var_l = jnp.maximum(var_l, 0.0)                  # cancellation guard
                scale_l = lax.rsqrt(var_l + EPS)                 # EUP
                shift_l = -mean_l * scale_l
                a = a * scale_l + shift_l

            if meta["has_relu"]:
                a = jnp.maximum(a, 0.0)

            # ---- Conv2d: H-tap selection + ONE fused deep-K MXU matmul ----
            a_bf = a.astype(jnp.bfloat16)                        # (N*H, W*C)
            if sel_ref is None:                                  # 1x1 'valid' conv
                cat = a_bf
            else:
                # 0/1 block-diagonal row selection (H-taps, stride, zero
                # padding, batch interleave) precomputed host-side; exact
                # under f32 accumulation, downcast to bf16 is lossless.
                taps = [
                    jnp.dot(sel_ref[i], a_bf,
                            preferred_element_type=jnp.float32).astype(jnp.bfloat16)
                    for i in range(kh)
                ]
                cat = taps[0] if kh == 1 else jnp.concatenate(taps, axis=-1)
            # (N*Ho, kh*W*C) @ (kh*W*C, Wo*O): one MXU launch per layer.
            a = jnp.dot(cat, g_ref[...],
                        preferred_element_type=jnp.float32) + b_ref[...]

        # ---- squeeze(3).squeeze(2) + Softmax(dim=1), single block store ----
        z = a                                                    # (N, numClass)
        if use_softmax:
            z = z - jnp.max(z, axis=1, keepdims=True)
            e = jnp.exp(z)
            z = e * pl.reciprocal(jnp.sum(e, axis=1, keepdims=True), approx=True)
        out_ref[...] = z

    return kernel


# ---------------------------------------------------------------------------
# Wrapper: weight / selection packing (trace-time) + the single pallas_call
# ---------------------------------------------------------------------------
def net_simple_conv2fc_forward(params, x, use_softmax=True):
    n, c, h, w = x.shape
    num_class = params[-1][0].shape[0]

    # Lane-packed, batch-stacked activation: rows = (n, h), lanes = (w, c).
    x_l = jnp.transpose(x, (0, 2, 3, 1)).reshape(n * h, w * c).astype(jnp.float32)

    inputs = [x_l]
    metas = []
    H, W, C = h, w, c
    for (wt, bs), cfg in zip(params, _BLOCK_CFGS):
        O = wt.shape[0]
        kh, kw, s, p = cfg["kh"], cfg["kw"], cfg["stride"], cfg["pad"]
        Ho = (H + 2 * p - kh) // s + 1
        Wo = (W + 2 * p - kw) // s + 1

        need_sel = not (kh == 1 and s == 1 and p == 0 and Ho == H)
        if need_sel:
            # Block-diagonal H-tap selection: output row (img*Ho + ho) of tap i
            # picks input row (img*H + s*ho + i - p); out-of-range rows are
            # all-zero (= zero padding).
            S = np.zeros((kh, n * Ho, n * H), np.float32)
            for i in range(kh):
                for img in range(n):
                    for ho in range(Ho):
                        hh = s * ho + i - p
                        if 0 <= hh < H:
                            S[i, img * Ho + ho, img * H + hh] = 1.0
            inputs.append(jnp.asarray(S, dtype=jnp.bfloat16))

        # Placement tensor folds W-taps + stride + zero padding into the packed
        # weight; K-axis order (i, w, c) matches the lane-concatenated taps.
        P = np.zeros((W, kw, Wo), np.float32)
        for wcol in range(W):
            for j in range(kw):
                wo, rem = divmod(wcol + p - j, s)
                if rem == 0 and 0 <= wo < Wo:
                    P[wcol, j, wo] = 1.0
        G = jnp.einsum("wjq,ocij->iwcqo", jnp.asarray(P), wt)
        G = G.reshape(kh * W * C, Wo * O).astype(jnp.bfloat16)   # fused-K operand
        b_row = jnp.tile(bs, Wo).reshape(1, Wo * O).astype(jnp.float32)
        inputs += [G, b_row]

        if cfg["has_bn"]:
            assert (W & (W - 1)) == 0, "BN roll tree assumes power-of-two W"

        metas.append(dict(kh=kh, H=H, W=W, C=C, Ho=Ho, Wo=Wo, O=O,
                          need_sel=need_sel,
                          has_bn=cfg["has_bn"], has_relu=cfg["has_nonlinear"]))
        H, W, C = Ho, Wo, O

    kernel = _make_kernel(tuple(metas), n, use_softmax)
    # Whole net fits comfortably in VMEM at these sizes -> single ungridded
    # call, default full-array VMEM blocks for all operands.
    out = pl.pallas_call(
        kernel,
        out_shape=jax.ShapeDtypeStruct((n, num_class), jnp.float32),
    )(*inputs)
    return out


# ---------------------------------------------------------------------------
# Deterministic parameter init (mirrors init_convnet 'const_norm', init_scale=1)
# ---------------------------------------------------------------------------
def _const_norm_conv_init(key, out_c, in_c, kh, kw, init_scale=1.0):
    kw_key, kb_key = jax.random.split(key)
    wmat = 0.05 * jax.random.normal(kw_key, (out_c, in_c, kh, kw), jnp.float32)
    wmat = init_scale * wmat / jnp.linalg.norm(wmat.reshape(-1), 2)
    fan_in = in_c * kh * kw
    bound = 1.0 / jnp.sqrt(fan_in)           # Conv2d bias default init (not zeroed)
    b = jax.random.uniform(kb_key, (out_c,), jnp.float32, -bound, bound)
    return wmat, b


if __name__ == "__main__":
    key = jax.random.PRNGKey(0)
    input_channels, hidden, num_class, fc_width = 4, 8, 10, 32
    batch, spatial = 2, 32  # 32 -> 16 -> 8 -> 4 -> 2 -> 1 -> 1

    k_in, *k_layers = jax.random.split(key, 7)
    x = jax.random.normal(k_in, (batch, input_channels, spatial, spatial),
                          jnp.float32)

    layer_io = [
        (input_channels, hidden, 3),
        (hidden, hidden * 2, 3),
        (hidden * 2, hidden * 4, 3),
        (hidden * 4, hidden * 8, 3),
        (hidden * 8, fc_width, 2),
        (fc_width, num_class, 1),
    ]
    params = [_const_norm_conv_init(kk, oc, ic, ks, ks)
              for kk, (ic, oc, ks) in zip(k_layers, layer_io)]

    out = jax.jit(net_simple_conv2fc_forward)(params, x)
    out = jax.block_until_ready(out)
    assert out.shape == (batch, num_class)
    assert bool(jnp.all(jnp.isfinite(out)))
    # softmax rows should sum to ~1 (approx-reciprocal tolerance)
    assert bool(jnp.all(jnp.abs(jnp.sum(out, axis=1) - 1.0) < 1e-2))
    print("KERNEL_OK")
</pallas_src>

<mosaic_0001>
module attributes {stable_mosaic.version = 11 : i64} {
  func.func @kernel(%arg0: memref<64x128xf32, #tpu.memory_space<vmem>>, %arg1: memref<3x32x64xbf16, #tpu.memory_space<vmem>>, %arg2: memref<384x128xbf16, #tpu.memory_space<vmem>>, %arg3: memref<1x128xf32, #tpu.memory_space<vmem>>, %arg4: memref<3x16x32xbf16, #tpu.memory_space<vmem>>, %arg5: memref<384x128xbf16, #tpu.memory_space<vmem>>, %arg6: memref<1x128xf32, #tpu.memory_space<vmem>>, %arg7: memref<3x8x16xbf16, #tpu.memory_space<vmem>>, %arg8: memref<384x128xbf16, #tpu.memory_space<vmem>>, %arg9: memref<1x128xf32, #tpu.memory_space<vmem>>, %arg10: memref<3x4x8xbf16, #tpu.memory_space<vmem>>, %arg11: memref<384x128xbf16, #tpu.memory_space<vmem>>, %arg12: memref<1x128xf32, #tpu.memory_space<vmem>>, %arg13: memref<2x2x4xbf16, #tpu.memory_space<vmem>>, %arg14: memref<256x32xbf16, #tpu.memory_space<vmem>>, %arg15: memref<1x32xf32, #tpu.memory_space<vmem>>, %arg16: memref<32x10xbf16, #tpu.memory_space<vmem>>, %arg17: memref<1x10xf32, #tpu.memory_space<vmem>>, %arg18: memref<2x10xf32, #tpu.memory_space<vmem>>) attributes {dimension_semantics = [], scalar_prefetch = 0 : i64, scratch_operands = 0 : i64, tpu.core_type = #tpu.core_type<tc>} {
    %c0 = arith.constant 0 : index
    %c0_0 = arith.constant 0 : index
    %0 = vector.load %arg0[%c0, %c0_0] : memref<64x128xf32, #tpu.memory_space<vmem>>, vector<64x128xf32>
    %1 = arith.truncf %0 : vector<64x128xf32> to vector<64x128xbf16>
    %c0_1 = arith.constant 0 : index
    %c0_2 = arith.constant 0 : index
    %c0_3 = arith.constant 0 : index
    %2 = vector.load %arg1[%c0_1, %c0_2, %c0_3] : memref<3x32x64xbf16, #tpu.memory_space<vmem>>, vector<1x32x64xbf16>
    %3 = vector.shape_cast %2 : vector<1x32x64xbf16> to vector<32x64xbf16>
    %cst = arith.constant dense<0.000000e+00> : vector<32x128xf32>
    %4 = tpu.matmul %3, %1, %cst {dimension_numbers = #tpu.dot_dimension_numbers<[1], [0], [0], [1], [0, 0, 1, 1], [], []>} : vector<32x64xbf16>, vector<64x128xbf16>, vector<32x128xf32> -> vector<32x128xf32>
    %5 = arith.truncf %4 : vector<32x128xf32> to vector<32x128xbf16>
    %c1 = arith.constant 1 : index
    %c0_4 = arith.constant 0 : index
    %c0_5 = arith.constant 0 : index
    %6 = vector.load %arg1[%c1, %c0_4, %c0_5] : memref<3x32x64xbf16, #tpu.memory_space<vmem>>, vector<1x32x64xbf16>
    %7 = vector.shape_cast %6 : vector<1x32x64xbf16> to vector<32x64xbf16>
    %cst_6 = arith.constant dense<0.000000e+00> : vector<32x128xf32>
    %8 = tpu.matmul %7, %1, %cst_6 {dimension_numbers = #tpu.dot_dimension_numbers<[1], [0], [0], [1], [0, 0, 1, 1], [], []>} : vector<32x64xbf16>, vector<64x128xbf16>, vector<32x128xf32> -> vector<32x128xf32>
    %9 = arith.truncf %8 : vector<32x128xf32> to vector<32x128xbf16>
    %c2 = arith.constant 2 : index
    %c0_7 = arith.constant 0 : index
    %c0_8 = arith.constant 0 : index
    %10 = vector.load %arg1[%c2, %c0_7, %c0_8] : memref<3x32x64xbf16, #tpu.memory_space<vmem>>, vector<1x32x64xbf16>
    %11 = vector.shape_cast %10 : vector<1x32x64xbf16> to vector<32x64xbf16>
    %cst_9 = arith.constant dense<0.000000e+00> : vector<32x128xf32>
    %12 = tpu.matmul %11, %1, %cst_9 {dimension_numbers = #tpu.dot_dimension_numbers<[1], [0], [0], [1], [0, 0, 1, 1], [], []>} : vector<32x64xbf16>, vector<64x128xbf16>, vector<32x128xf32> -> vector<32x128xf32>
    %13 = arith.truncf %12 : vector<32x128xf32> to vector<32x128xbf16>
    %14 = tpu.concatenate %5, %9, %13 in 1 : vector<32x128xbf16>, vector<32x128xbf16>, vector<32x128xbf16> -> vector<32x384xbf16>
    %c0_10 = arith.constant 0 : index
    %c0_11 = arith.constant 0 : index
    %15 = vector.load %arg2[%c0_10, %c0_11] : memref<384x128xbf16, #tpu.memory_space<vmem>>, vector<384x128xbf16>
    %cst_12 = arith.constant dense<0.000000e+00> : vector<32x128xf32>
    %16 = tpu.matmul %14, %15, %cst_12 {dimension_numbers = #tpu.dot_dimension_numbers<[1], [0], [0], [1], [0, 0, 1, 1], [], []>} : vector<32x384xbf16>, vector<384x128xbf16>, vector<32x128xf32> -> vector<32x128xf32>
    %c0_13 = arith.constant 0 : index
    %c0_14 = arith.constant 0 : index
    %17 = vector.load %arg3[%c0_13, %c0_14] : memref<1x128xf32, #tpu.memory_space<vmem>>, vector<1x128xf32>
    %18 = vector.broadcast %17 : vector<1x128xf32> to vector<32x128xf32>
    %19 = arith.addf %16, %18 : vector<32x128xf32>
    %cst_15 = arith.constant dense<0.000000e+00> : vector<128xf32>
    %20 = vector.multi_reduction <add>, %19, %cst_15 [0] : vector<32x128xf32> to vector<128xf32>
    %21 = vector.shape_cast %20 : vector<128xf32> to vector<1x128xf32>
    %22 = arith.mulf %19, %19 : vector<32x128xf32>
    %cst_16 = arith.constant dense<0.000000e+00> : vector<128xf32>
    %23 = vector.multi_reduction <add>, %22, %cst_16 [0] : vector<32x128xf32> to vector<128xf32>
    %24 = vector.shape_cast %23 : vector<128xf32> to vector<1x128xf32>
    %25 = tpu.concatenate %21, %24 in 0 : vector<1x128xf32>, vector<1x128xf32> -> vector<2x128xf32>
    %c64_i32 = arith.constant 64 : i32
    %26 = tpu.dynamic_rotate %25 by %c64_i32 dim 1 : vector<2x128xf32>, i32 -> vector<2x128xf32>
    %27 = arith.addf %25, %26 : vector<2x128xf32>
    %c32_i32 = arith.constant 32 : i32
    %28 = tpu.dynamic_rotate %27 by %c32_i32 dim 1 : vector<2x128xf32>, i32 -> vector<2x128xf32>
    %29 = arith.addf %27, %28 : vector<2x128xf32>
    %c16_i32 = arith.constant 16 : i32
    %30 = tpu.dynamic_rotate %29 by %c16_i32 dim 1 : vector<2x128xf32>, i32 -> vector<2x128xf32>
    %31 = arith.addf %29, %30 : vector<2x128xf32>
    %c8_i32 = arith.constant 8 : i32
    %32 = tpu.dynamic_rotate %31 by %c8_i32 dim 1 : vector<2x128xf32>, i32 -> vector<2x128xf32>
    %33 = arith.addf %31, %32 : vector<2x128xf32>
    %34 = vector.extract_strided_slice %33 {offsets = [0, 0], sizes = [1, 128], strides = [1, 1]} : vector<2x128xf32> to vector<1x128xf32>
    %cst_17 = arith.constant 0.001953125 : f32
    %35 = vector.broadcast %cst_17 : f32 to vector<1x128xf32>
    %36 = arith.mulf %34, %35 : vector<1x128xf32>
    %37 = vector.extract_strided_slice %33 {offsets = [1, 0], sizes = [1, 128], strides = [1, 1]} : vector<2x128xf32> to vector<1x128xf32>
    %cst_18 = arith.constant 0.001953125 : f32
    %38 = vector.broadcast %cst_18 : f32 to vector<1x128xf32>
    %39 = arith.mulf %37, %38 : vector<1x128xf32>
    %40 = arith.mulf %36, %36 : vector<1x128xf32>
    %41 = arith.subf %39, %40 : vector<1x128xf32>
    %cst_19 = arith.constant 0.000000e+00 : f32
    %42 = vector.broadcast %cst_19 : f32 to vector<1x128xf32>
    %43 = arith.maximumf %41, %42 : vector<1x128xf32>
    %cst_20 = arith.constant 9.99999974E-6 : f32
    %44 = vector.broadcast %cst_20 : f32 to vector<1x128xf32>
    %45 = arith.addf %43, %44 : vector<1x128xf32>
    %46 = math.rsqrt %45 : vector<1x128xf32>
    %cst_21 = arith.constant 0.000000e+00 : f32
    %47 = vector.broadcast %cst_21 : f32 to vector<1x128xf32>
    %48 = arith.subf %47, %36 : vector<1x128xf32>
    %49 = arith.mulf %48, %46 : vector<1x128xf32>
    %50 = vector.broadcast %46 : vector<1x128xf32> to vector<32x128xf32>
    %51 = arith.mulf %19, %50 : vector<32x128xf32>
    %52 = vector.broadcast %49 : vector<1x128xf32> to vector<32x128xf32>
    %53 = arith.addf %51, %52 : vector<32x128xf32>
    %cst_22 = arith.constant 0.000000e+00 : f32
    %54 = vector.broadcast %cst_22 : f32 to vector<32x128xf32>
    %55 = arith.maximumf %53, %54 : vector<32x128xf32>
    %56 = arith.truncf %55 : vector<32x128xf32> to vector<32x128xbf16>
    %c0_23 = arith.constant 0 : index
    %c0_24 = arith.constant 0 : index
    %c0_25 = arith.constant 0 : index
    %57 = vector.load %arg4[%c0_23, %c0_24, %c0_25] : memref<3x16x32xbf16, #tpu.memory_space<vmem>>, vector<1x16x32xbf16>
    %58 = vector.shape_cast %57 : vector<1x16x32xbf16> to vector<16x32xbf16>
    %cst_26 = arith.constant dense<0.000000e+00> : vector<16x128xf32>
    %59 = tpu.matmul %58, %56, %cst_26 {dimension_numbers = #tpu.dot_dimension_numbers<[1], [0], [0], [1], [0, 0, 1, 1], [], []>} : vector<16x32xbf16>, vector<32x128xbf16>, vector<16x128xf32> -> vector<16x128xf32>
    %60 = arith.truncf %59 : vector<16x128xf32> to vector<16x128xbf16>
    %c1_27 = arith.constant 1 : index
    %c0_28 = arith.constant 0 : index
    %c0_29 = arith.constant 0 : index
    %61 = vector.load %arg4[%c1_27, %c0_28, %c0_29] : memref<3x16x32xbf16, #tpu.memory_space<vmem>>, vector<1x16x32xbf16>
    %62 = vector.shape_cast %61 : vector<1x16x32xbf16> to vector<16x32xbf16>
    %cst_30 = arith.constant dense<0.000000e+00> : vector<16x128xf32>
    %63 = tpu.matmul %62, %56, %cst_30 {dimension_numbers = #tpu.dot_dimension_numbers<[1], [0], [0], [1], [0, 0, 1, 1], [], []>} : vector<16x32xbf16>, vector<32x128xbf16>, vector<16x128xf32> -> vector<16x128xf32>
    %64 = arith.truncf %63 : vector<16x128xf32> to vector<16x128xbf16>
    %c2_31 = arith.constant 2 : index
    %c0_32 = arith.constant 0 : index
    %c0_33 = arith.constant 0 : index
    %65 = vector.load %arg4[%c2_31, %c0_32, %c0_33] : memref<3x16x32xbf16, #tpu.memory_space<vmem>>, vector<1x16x32xbf16>
    %66 = vector.shape_cast %65 : vector<1x16x32xbf16> to vector<16x32xbf16>
    %cst_34 = arith.constant dense<0.000000e+00> : vector<16x128xf32>
    %67 = tpu.matmul %66, %56, %cst_34 {dimension_numbers = #tpu.dot_dimension_numbers<[1], [0], [0], [1], [0, 0, 1, 1], [], []>} : vector<16x32xbf16>, vector<32x128xbf16>, vector<16x128xf32> -> vector<16x128xf32>
    %68 = arith.truncf %67 : vector<16x128xf32> to vector<16x128xbf16>
    %69 = tpu.concatenate %60, %64, %68 in 1 : vector<16x128xbf16>, vector<16x128xbf16>, vector<16x128xbf16> -> vector<16x384xbf16>
    %c0_35 = arith.constant 0 : index
    %c0_36 = arith.constant 0 : index
    %70 = vector.load %arg5[%c0_35, %c0_36] : memref<384x128xbf16, #tpu.memory_space<vmem>>, vector<384x128xbf16>
    %cst_37 = arith.constant dense<0.000000e+00> : vector<16x128xf32>
    %71 = tpu.matmul %69, %70, %cst_37 {dimension_numbers = #tpu.dot_dimension_numbers<[1], [0], [0], [1], [0, 0, 1, 1], [], []>} : vector<16x384xbf16>, vector<384x128xbf16>, vector<16x128xf32> -> vector<16x128xf32>
    %c0_38 = arith.constant 0 : index
    %c0_39 = arith.constant 0 : index
    %72 = vector.load %arg6[%c0_38, %c0_39] : memref<1x128xf32, #tpu.memory_space<vmem>>, vector<1x128xf32>
    %73 = vector.broadcast %72 : vector<1x128xf32> to vector<16x128xf32>
    %74 = arith.addf %71, %73 : vector<16x128xf32>
    %cst_40 = arith.constant dense<0.000000e+00> : vector<128xf32>
    %75 = vector.multi_reduction <add>, %74, %cst_40 [0] : vector<16x128xf32> to vector<128xf32>
    %76 = vector.shape_cast %75 : vector<128xf32> to vector<1x128xf32>
    %77 = arith.mulf %74, %74 : vector<16x128xf32>
    %cst_41 = arith.constant dense<0.000000e+00> : vector<128xf32>
    %78 = vector.multi_reduction <add>, %77, %cst_41 [0] : vector<16x128xf32> to vector<128xf32>
    %79 = vector.shape_cast %78 : vector<128xf32> to vector<1x128xf32>
    %80 = tpu.concatenate %76, %79 in 0 : vector<1x128xf32>, vector<1x128xf32> -> vector<2x128xf32>
    %c64_i32_42 = arith.constant 64 : i32
    %81 = tpu.dynamic_rotate %80 by %c64_i32_42 dim 1 : vector<2x128xf32>, i32 -> vector<2x128xf32>
    %82 = arith.addf %80, %81 : vector<2x128xf32>
    %c32_i32_43 = arith.constant 32 : i32
    %83 = tpu.dynamic_rotate %82 by %c32_i32_43 dim 1 : vector<2x128xf32>, i32 -> vector<2x128xf32>
    %84 = arith.addf %82, %83 : vector<2x128xf32>
    %c16_i32_44 = arith.constant 16 : i32
    %85 = tpu.dynamic_rotate %84 by %c16_i32_44 dim 1 : vector<2x128xf32>, i32 -> vector<2x128xf32>
    %86 = arith.addf %84, %85 : vector<2x128xf32>
    %87 = vector.extract_strided_slice %86 {offsets = [0, 0], sizes = [1, 128], strides = [1, 1]} : vector<2x128xf32> to vector<1x128xf32>
    %cst_45 = arith.constant 7.812500e-03 : f32
    %88 = vector.broadcast %cst_45 : f32 to vector<1x128xf32>
    %89 = arith.mulf %87, %88 : vector<1x128xf32>
    %90 = vector.extract_strided_slice %86 {offsets = [1, 0], sizes = [1, 128], strides = [1, 1]} : vector<2x128xf32> to vector<1x128xf32>
    %cst_46 = arith.constant 7.812500e-03 : f32
    %91 = vector.broadcast %cst_46 : f32 to vector<1x128xf32>
    %92 = arith.mulf %90, %91 : vector<1x128xf32>
    %93 = arith.mulf %89, %89 : vector<1x128xf32>
    %94 = arith.subf %92, %93 : vector<1x128xf32>
    %cst_47 = arith.constant 0.000000e+00 : f32
    %95 = vector.broadcast %cst_47 : f32 to vector<1x128xf32>
    %96 = arith.maximumf %94, %95 : vector<1x128xf32>
    %cst_48 = arith.constant 9.99999974E-6 : f32
    %97 = vector.broadcast %cst_48 : f32 to vector<1x128xf32>
    %98 = arith.addf %96, %97 : vector<1x128xf32>
    %99 = math.rsqrt %98 : vector<1x128xf32>
    %cst_49 = arith.constant 0.000000e+00 : f32
    %100 = vector.broadcast %cst_49 : f32 to vector<1x128xf32>
    %101 = arith.subf %100, %89 : vector<1x128xf32>
    %102 = arith.mulf %101, %99 : vector<1x128xf32>
    %103 = vector.broadcast %99 : vector<1x128xf32> to vector<16x128xf32>
    %104 = arith.mulf %74, %103 : vector<16x128xf32>
    %105 = vector.broadcast %102 : vector<1x128xf32> to vector<16x128xf32>
    %106 = arith.addf %104, %105 : vector<16x128xf32>
    %cst_50 = arith.constant 0.000000e+00 : f32
    %107 = vector.broadcast %cst_50 : f32 to vector<16x128xf32>
    %108 = arith.maximumf %106, %107 : vector<16x128xf32>
    %109 = arith.truncf %108 : vector<16x128xf32> to vector<16x128xbf16>
    %c0_51 = arith.constant 0 : index
    %c0_52 = arith.constant 0 : index
    %c0_53 = arith.constant 0 : index
    %110 = vector.load %arg7[%c0_51, %c0_52, %c0_53] : memref<3x8x16xbf16, #tpu.memory_space<vmem>>, vector<1x8x16xbf16>
    %111 = vector.shape_cast %110 : vector<1x8x16xbf16> to vector<8x16xbf16>
    %cst_54 = arith.constant dense<0.000000e+00> : vector<8x128xf32>
    %112 = tpu.matmul %111, %109, %cst_54 {dimension_numbers = #tpu.dot_dimension_numbers<[1], [0], [0], [1], [0, 0, 1, 1], [], []>} : vector<8x16xbf16>, vector<16x128xbf16>, vector<8x128xf32> -> vector<8x128xf32>
    %113 = arith.truncf %112 : vector<8x128xf32> to vector<8x128xbf16>
    %c1_55 = arith.constant 1 : index
    %c0_56 = arith.constant 0 : index
    %c0_57 = arith.constant 0 : index
    %114 = vector.load %arg7[%c1_55, %c0_56, %c0_57] : memref<3x8x16xbf16, #tpu.memory_space<vmem>>, vector<1x8x16xbf16>
    %115 = vector.shape_cast %114 : vector<1x8x16xbf16> to vector<8x16xbf16>
    %cst_58 = arith.constant dense<0.000000e+00> : vector<8x128xf32>
    %116 = tpu.matmul %115, %109, %cst_58 {dimension_numbers = #tpu.dot_dimension_numbers<[1], [0], [0], [1], [0, 0, 1, 1], [], []>} : vector<8x16xbf16>, vector<16x128xbf16>, vector<8x128xf32> -> vector<8x128xf32>
    %117 = arith.truncf %116 : vector<8x128xf32> to vector<8x128xbf16>
    %c2_59 = arith.constant 2 : index
    %c0_60 = arith.constant 0 : index
    %c0_61 = arith.constant 0 : index
    %118 = vector.load %arg7[%c2_59, %c0_60, %c0_61] : memref<3x8x16xbf16, #tpu.memory_space<vmem>>, vector<1x8x16xbf16>
    %119 = vector.shape_cast %118 : vector<1x8x16xbf16> to vector<8x16xbf16>
    %cst_62 = arith.constant dense<0.000000e+00> : vector<8x128xf32>
    %120 = tpu.matmul %119, %109, %cst_62 {dimension_numbers = #tpu.dot_dimension_numbers<[1], [0], [0], [1], [0, 0, 1, 1], [], []>} : vector<8x16xbf16>, vector<16x128xbf16>, vector<8x128xf32> -> vector<8x128xf32>
    %121 = arith.truncf %120 : vector<8x128xf32> to vector<8x128xbf16>
    %122 = tpu.concatenate %113, %117, %121 in 1 : vector<8x128xbf16>, vector<8x128xbf16>, vector<8x128xbf16> -> vector<8x384xbf16>
    %c0_63 = arith.constant 0 : index
    %c0_64 = arith.constant 0 : index
    %123 = vector.load %arg8[%c0_63, %c0_64] : memref<384x128xbf16, #tpu.memory_space<vmem>>, vector<384x128xbf16>
    %cst_65 = arith.constant dense<0.000000e+00> : vector<8x128xf32>
    %124 = tpu.matmul %122, %123, %cst_65 {dimension_numbers = #tpu.dot_dimension_numbers<[1], [0], [0], [1], [0, 0, 1, 1], [], []>} : vector<8x384xbf16>, vector<384x128xbf16>, vector<8x128xf32> -> vector<8x128xf32>
    %c0_66 = arith.constant 0 : index
    %c0_67 = arith.constant 0 : index
    %125 = vector.load %arg9[%c0_66, %c0_67] : memref<1x128xf32, #tpu.memory_space<vmem>>, vector<1x128xf32>
    %126 = vector.broadcast %125 : vector<1x128xf32> to vector<8x128xf32>
    %127 = arith.addf %124, %126 : vector<8x128xf32>
    %cst_68 = arith.constant dense<0.000000e+00> : vector<128xf32>
    %128 = vector.multi_reduction <add>, %127, %cst_68 [0] : vector<8x128xf32> to vector<128xf32>
    %129 = vector.shape_cast %128 : vector<128xf32> to vector<1x128xf32>
    %130 = arith.mulf %127, %127 : vector<8x128xf32>
    %cst_69 = arith.constant dense<0.000000e+00> : vector<128xf32>
    %131 = vector.multi_reduction <add>, %130, %cst_69 [0] : vector<8x128xf32> to vector<128xf32>
    %132 = vector.shape_cast %131 : vector<128xf32> to vector<1x128xf32>
    %133 = tpu.concatenate %129, %132 in 0 : vector<1x128xf32>, vector<1x128xf32> -> vector<2x128xf32>
    %c64_i32_70 = arith.constant 64 : i32
    %134 = tpu.dynamic_rotate %133 by %c64_i32_70 dim 1 : vector<2x128xf32>, i32 -> vector<2x128xf32>
    %135 = arith.addf %133, %134 : vector<2x128xf32>
    %c32_i32_71 = arith.constant 32 : i32
    %136 = tpu.dynamic_rotate %135 by %c32_i32_71 dim 1 : vector<2x128xf32>, i32 -> vector<2x128xf32>
    %137 = arith.addf %135, %136 : vector<2x128xf32>
    %138 = vector.extract_strided_slice %137 {offsets = [0, 0], sizes = [1, 128], strides = [1, 1]} : vector<2x128xf32> to vector<1x128xf32>
    %cst_72 = arith.constant 3.125000e-02 : f32
    %139 = vector.broadcast %cst_72 : f32 to vector<1x128xf32>
    %140 = arith.mulf %138, %139 : vector<1x128xf32>
    %141 = vector.extract_strided_slice %137 {offsets = [1, 0], sizes = [1, 128], strides = [1, 1]} : vector<2x128xf32> to vector<1x128xf32>
    %cst_73 = arith.constant 3.125000e-02 : f32
    %142 = vector.broadcast %cst_73 : f32 to vector<1x128xf32>
    %143 = arith.mulf %141, %142 : vector<1x128xf32>
    %144 = arith.mulf %140, %140 : vector<1x128xf32>
    %145 = arith.subf %143, %144 : vector<1x128xf32>
    %cst_74 = arith.constant 0.000000e+00 : f32
    %146 = vector.broadcast %cst_74 : f32 to vector<1x128xf32>
    %147 = arith.maximumf %145, %146 : vector<1x128xf32>
    %cst_75 = arith.constant 9.99999974E-6 : f32
    %148 = vector.broadcast %cst_75 : f32 to vector<1x128xf32>
    %149 = arith.addf %147, %148 : vector<1x128xf32>
    %150 = math.rsqrt %149 : vector<1x128xf32>
    %cst_76 = arith.constant 0.000000e+00 : f32
    %151 = vector.broadcast %cst_76 : f32 to vector<1x128xf32>
    %152 = arith.subf %151, %140 : vector<1x128xf32>
    %153 = arith.mulf %152, %150 : vector<1x128xf32>
    %154 = vector.broadcast %150 : vector<1x128xf32> to vector<8x128xf32>
    %155 = arith.mulf %127, %154 : vector<8x128xf32>
    %156 = vector.broadcast %153 : vector<1x128xf32> to vector<8x128xf32>
    %157 = arith.addf %155, %156 : vector<8x128xf32>
    %cst_77 = arith.constant 0.000000e+00 : f32
    %158 = vector.broadcast %cst_77 : f32 to vector<8x128xf32>
    %159 = arith.maximumf %157, %158 : vector<8x128xf32>
    %160 = arith.truncf %159 : vector<8x128xf32> to vector<8x128xbf16>
    %c0_78 = arith.constant 0 : index
    %c0_79 = arith.constant 0 : index
    %c0_80 = arith.constant 0 : index
    %161 = vector.load %arg10[%c0_78, %c0_79, %c0_80] : memref<3x4x8xbf16, #tpu.memory_space<vmem>>, vector<1x4x8xbf16>
    %162 = vector.shape_cast %161 : vector<1x4x8xbf16> to vector<4x8xbf16>
    %cst_81 = arith.constant dense<0.000000e+00> : vector<4x128xf32>
    %163 = tpu.matmul %162, %160, %cst_81 {dimension_numbers = #tpu.dot_dimension_numbers<[1], [0], [0], [1], [0, 0, 1, 1], [], []>} : vector<4x8xbf16>, vector<8x128xbf16>, vector<4x128xf32> -> vector<4x128xf32>
    %164 = arith.truncf %163 : vector<4x128xf32> to vector<4x128xbf16>
    %c1_82 = arith.constant 1 : index
    %c0_83 = arith.constant 0 : index
    %c0_84 = arith.constant 0 : index
    %165 = vector.load %arg10[%c1_82, %c0_83, %c0_84] : memref<3x4x8xbf16, #tpu.memory_space<vmem>>, vector<1x4x8xbf16>
    %166 = vector.shape_cast %165 : vector<1x4x8xbf16> to vector<4x8xbf16>
    %cst_85 = arith.constant dense<0.000000e+00> : vector<4x128xf32>
    %167 = tpu.matmul %166, %160, %cst_85 {dimension_numbers = #tpu.dot_dimension_numbers<[1], [0], [0], [1], [0, 0, 1, 1], [], []>} : vector<4x8xbf16>, vector<8x128xbf16>, vector<4x128xf32> -> vector<4x128xf32>
    %168 = arith.truncf %167 : vector<4x128xf32> to vector<4x128xbf16>
    %c2_86 = arith.constant 2 : index
    %c0_87 = arith.constant 0 : index
    %c0_88 = arith.constant 0 : index
    %169 = vector.load %arg10[%c2_86, %c0_87, %c0_88] : memref<3x4x8xbf16, #tpu.memory_space<vmem>>, vector<1x4x8xbf16>
    %170 = vector.shape_cast %169 : vector<1x4x8xbf16> to vector<4x8xbf16>
    %cst_89 = arith.constant dense<0.000000e+00> : vector<4x128xf32>
    %171 = tpu.matmul %170, %160, %cst_89 {dimension_numbers = #tpu.dot_dimension_numbers<[1], [0], [0], [1], [0, 0, 1, 1], [], []>} : vector<4x8xbf16>, vector<8x128xbf16>, vector<4x128xf32> -> vector<4x128xf32>
    %172 = arith.truncf %171 : vector<4x128xf32> to vector<4x128xbf16>
    %173 = tpu.concatenate %164, %168, %172 in 1 : vector<4x128xbf16>, vector<4x128xbf16>, vector<4x128xbf16> -> vector<4x384xbf16>
    %c0_90 = arith.constant 0 : index
    %c0_91 = arith.constant 0 : index
    %174 = vector.load %arg11[%c0_90, %c0_91] : memref<384x128xbf16, #tpu.memory_space<vmem>>, vector<384x128xbf16>
    %cst_92 = arith.constant dense<0.000000e+00> : vector<4x128xf32>
    %175 = tpu.matmul %173, %174, %cst_92 {dimension_numbers = #tpu.dot_dimension_numbers<[1], [0], [0], [1], [0, 0, 1, 1], [], []>} : vector<4x384xbf16>, vector<384x128xbf16>, vector<4x128xf32> -> vector<4x128xf32>
    %c0_93 = arith.constant 0 : index
    %c0_94 = arith.constant 0 : index
    %176 = vector.load %arg12[%c0_93, %c0_94] : memref<1x128xf32, #tpu.memory_space<vmem>>, vector<1x128xf32>
    %177 = vector.broadcast %176 : vector<1x128xf32> to vector<4x128xf32>
    %178 = arith.addf %175, %177 : vector<4x128xf32>
    %cst_95 = arith.constant dense<0.000000e+00> : vector<128xf32>
    %179 = vector.multi_reduction <add>, %178, %cst_95 [0] : vector<4x128xf32> to vector<128xf32>
    %180 = vector.shape_cast %179 : vector<128xf32> to vector<1x128xf32>
    %181 = arith.mulf %178, %178 : vector<4x128xf32>
    %cst_96 = arith.constant dense<0.000000e+00> : vector<128xf32>
    %182 = vector.multi_reduction <add>, %181, %cst_96 [0] : vector<4x128xf32> to vector<128xf32>
    %183 = vector.shape_cast %182 : vector<128xf32> to vector<1x128xf32>
    %184 = tpu.concatenate %180, %183 in 0 : vector<1x128xf32>, vector<1x128xf32> -> vector<2x128xf32>
    %c64_i32_97 = arith.constant 64 : i32
    %185 = tpu.dynamic_rotate %184 by %c64_i32_97 dim 1 : vector<2x128xf32>, i32 -> vector<2x128xf32>
    %186 = arith.addf %184, %185 : vector<2x128xf32>
    %187 = vector.extract_strided_slice %186 {offsets = [0, 0], sizes = [1, 128], strides = [1, 1]} : vector<2x128xf32> to vector<1x128xf32>
    %cst_98 = arith.constant 1.250000e-01 : f32
    %188 = vector.broadcast %cst_98 : f32 to vector<1x128xf32>
    %189 = arith.mulf %187, %188 : vector<1x128xf32>
    %190 = vector.extract_strided_slice %186 {offsets = [1, 0], sizes = [1, 128], strides = [1, 1]} : vector<2x128xf32> to vector<1x128xf32>
    %cst_99 = arith.constant 1.250000e-01 : f32
    %191 = vector.broadcast %cst_99 : f32 to vector<1x128xf32>
    %192 = arith.mulf %190, %191 : vector<1x128xf32>
    %193 = arith.mulf %189, %189 : vector<1x128xf32>
    %194 = arith.subf %192, %193 : vector<1x128xf32>
    %cst_100 = arith.constant 0.000000e+00 : f32
    %195 = vector.broadcast %cst_100 : f32 to vector<1x128xf32>
    %196 = arith.maximumf %194, %195 : vector<1x128xf32>
    %cst_101 = arith.constant 9.99999974E-6 : f32
    %197 = vector.broadcast %cst_101 : f32 to vector<1x128xf32>
    %198 = arith.addf %196, %197 : vector<1x128xf32>
    %199 = math.rsqrt %198 : vector<1x128xf32>
    %cst_102 = arith.constant 0.000000e+00 : f32
    %200 = vector.broadcast %cst_102 : f32 to vector<1x128xf32>
    %201 = arith.subf %200, %189 : vector<1x128xf32>
    %202 = arith.mulf %201, %199 : vector<1x128xf32>
    %203 = vector.broadcast %199 : vector<1x128xf32> to vector<4x128xf32>
    %204 = arith.mulf %178, %203 : vector<4x128xf32>
    %205 = vector.broadcast %202 : vector<1x128xf32> to vector<4x128xf32>
    %206 = arith.addf %204, %205 : vector<4x128xf32>
    %cst_103 = arith.constant 0.000000e+00 : f32
    %207 = vector.broadcast %cst_103 : f32 to vector<4x128xf32>
    %208 = arith.maximumf %206, %207 : vector<4x128xf32>
    %209 = arith.truncf %208 : vector<4x128xf32> to vector<4x128xbf16>
    %c0_104 = arith.constant 0 : index
    %c0_105 = arith.constant 0 : index
    %c0_106 = arith.constant 0 : index
    %210 = vector.load %arg13[%c0_104, %c0_105, %c0_106] : memref<2x2x4xbf16, #tpu.memory_space<vmem>>, vector<1x2x4xbf16>
    %211 = vector.shape_cast %210 : vector<1x2x4xbf16> to vector<2x4xbf16>
    %cst_107 = arith.constant dense<0.000000e+00> : vector<2x128xf32>
    %212 = tpu.matmul %211, %209, %cst_107 {dimension_numbers = #tpu.dot_dimension_numbers<[1], [0], [0], [1], [0, 0, 1, 1], [], []>} : vector<2x4xbf16>, vector<4x128xbf16>, vector<2x128xf32> -> vector<2x128xf32>
    %213 = arith.truncf %212 : vector<2x128xf32> to vector<2x128xbf16>
    %c1_108 = arith.constant 1 : index
    %c0_109 = arith.constant 0 : index
    %c0_110 = arith.constant 0 : index
    %214 = vector.load %arg13[%c1_108, %c0_109, %c0_110] : memref<2x2x4xbf16, #tpu.memory_space<vmem>>, vector<1x2x4xbf16>
    %215 = vector.shape_cast %214 : vector<1x2x4xbf16> to vector<2x4xbf16>
    %cst_111 = arith.constant dense<0.000000e+00> : vector<2x128xf32>
    %216 = tpu.matmul %215, %209, %cst_111 {dimension_numbers = #tpu.dot_dimension_numbers<[1], [0], [0], [1], [0, 0, 1, 1], [], []>} : vector<2x4xbf16>, vector<4x128xbf16>, vector<2x128xf32> -> vector<2x128xf32>
    %217 = arith.truncf %216 : vector<2x128xf32> to vector<2x128xbf16>
    %218 = tpu.concatenate %213, %217 in 1 : vector<2x128xbf16>, vector<2x128xbf16> -> vector<2x256xbf16>
    %c0_112 = arith.constant 0 : index
    %c0_113 = arith.constant 0 : index
    %219 = vector.load %arg14[%c0_112, %c0_113] : memref<256x32xbf16, #tpu.memory_space<vmem>>, vector<256x32xbf16>
    %cst_114 = arith.constant dense<0.000000e+00> : vector<2x32xf32>
    %220 = tpu.matmul %218, %219, %cst_114 {dimension_numbers = #tpu.dot_dimension_numbers<[1], [0], [0], [1], [0, 0, 1, 1], [], []>} : vector<2x256xbf16>, vector<256x32xbf16>, vector<2x32xf32> -> vector<2x32xf32>
    %c0_115 = arith.constant 0 : index
    %c0_116 = arith.constant 0 : index
    %221 = vector.load %arg15[%c0_115, %c0_116] : memref<1x32xf32, #tpu.memory_space<vmem>>, vector<1x32xf32>
    %222 = vector.broadcast %221 : vector<1x32xf32> to vector<2x32xf32>
    %223 = arith.addf %220, %222 : vector<2x32xf32>
    %cst_117 = arith.constant dense<0.000000e+00> : vector<32xf32>
    %224 = vector.multi_reduction <add>, %223, %cst_117 [0] : vector<2x32xf32> to vector<32xf32>
    %225 = vector.shape_cast %224 : vector<32xf32> to vector<1x32xf32>
    %226 = arith.mulf %223, %223 : vector<2x32xf32>
    %cst_118 = arith.constant dense<0.000000e+00> : vector<32xf32>
    %227 = vector.multi_reduction <add>, %226, %cst_118 [0] : vector<2x32xf32> to vector<32xf32>
    %228 = vector.shape_cast %227 : vector<32xf32> to vector<1x32xf32>
    %229 = tpu.concatenate %225, %228 in 0 : vector<1x32xf32>, vector<1x32xf32> -> vector<2x32xf32>
    %230 = vector.extract_strided_slice %229 {offsets = [0, 0], sizes = [1, 32], strides = [1, 1]} : vector<2x32xf32> to vector<1x32xf32>
    %cst_119 = arith.constant 5.000000e-01 : f32
    %231 = vector.broadcast %cst_119 : f32 to vector<1x32xf32>
    %232 = arith.mulf %230, %231 : vector<1x32xf32>
    %233 = vector.extract_strided_slice %229 {offsets = [1, 0], sizes = [1, 32], strides = [1, 1]} : vector<2x32xf32> to vector<1x32xf32>
    %cst_120 = arith.constant 5.000000e-01 : f32
    %234 = vector.broadcast %cst_120 : f32 to vector<1x32xf32>
    %235 = arith.mulf %233, %234 : vector<1x32xf32>
    %236 = arith.mulf %232, %232 : vector<1x32xf32>
    %237 = arith.subf %235, %236 : vector<1x32xf32>
    %cst_121 = arith.constant 0.000000e+00 : f32
    %238 = vector.broadcast %cst_121 : f32 to vector<1x32xf32>
    %239 = arith.maximumf %237, %238 : vector<1x32xf32>
    %cst_122 = arith.constant 9.99999974E-6 : f32
    %240 = vector.broadcast %cst_122 : f32 to vector<1x32xf32>
    %241 = arith.addf %239, %240 : vector<1x32xf32>
    %242 = math.rsqrt %241 : vector<1x32xf32>
    %cst_123 = arith.constant 0.000000e+00 : f32
    %243 = vector.broadcast %cst_123 : f32 to vector<1x32xf32>
    %244 = arith.subf %243, %232 : vector<1x32xf32>
    %245 = arith.mulf %244, %242 : vector<1x32xf32>
    %246 = vector.broadcast %242 : vector<1x32xf32> to vector<2x32xf32>
    %247 = arith.mulf %223, %246 : vector<2x32xf32>
    %248 = vector.broadcast %245 : vector<1x32xf32> to vector<2x32xf32>
    %249 = arith.addf %247, %248 : vector<2x32xf32>
    %cst_124 = arith.constant 0.000000e+00 : f32
    %250 = vector.broadcast %cst_124 : f32 to vector<2x32xf32>
    %251 = arith.maximumf %249, %250 : vector<2x32xf32>
    %252 = arith.truncf %251 : vector<2x32xf32> to vector<2x32xbf16>
    %c0_125 = arith.constant 0 : index
    %c0_126 = arith.constant 0 : index
    %253 = vector.load %arg16[%c0_125, %c0_126] : memref<32x10xbf16, #tpu.memory_space<vmem>>, vector<32x10xbf16>
    %cst_127 = arith.constant dense<0.000000e+00> : vector<2x10xf32>
    %254 = tpu.matmul %252, %253, %cst_127 {dimension_numbers = #tpu.dot_dimension_numbers<[1], [0], [0], [1], [0, 0, 1, 1], [], []>} : vector<2x32xbf16>, vector<32x10xbf16>, vector<2x10xf32> -> vector<2x10xf32>
    %c0_128 = arith.constant 0 : index
    %c0_129 = arith.constant 0 : index
    %255 = vector.load %arg17[%c0_128, %c0_129] : memref<1x10xf32, #tpu.memory_space<vmem>>, vector<1x10xf32>
    %256 = vector.broadcast %255 : vector<1x10xf32> to vector<2x10xf32>
    %257 = arith.addf %254, %256 : vector<2x10xf32>
    %cst_130 = arith.constant dense<0xFF800000> : vector<2xf32>
    %258 = vector.multi_reduction <maximumf>, %257, %cst_130 [1] : vector<2x10xf32> to vector<2xf32>
    %259 = vector.shape_cast %258 : vector<2xf32> to vector<2x1xf32>
    %260 = vector.broadcast %259 : vector<2x1xf32> to vector<2x10xf32>
    %261 = arith.subf %257, %260 : vector<2x10xf32>
    %262 = math.exp %261 : vector<2x10xf32>
    %cst_131 = arith.constant dense<0.000000e+00> : vector<2xf32>
    %263 = vector.multi_reduction <add>, %262, %cst_131 [1] : vector<2x10xf32> to vector<2xf32>
    %264 = vector.shape_cast %263 : vector<2xf32> to vector<2x1xf32>
    %265 = tpu.reciprocal %264 {approx = true} : vector<2x1xf32> -> vector<2x1xf32>
    %266 = vector.broadcast %265 : vector<2x1xf32> to vector<2x10xf32>
    %267 = arith.mulf %262, %266 : vector<2x10xf32>
    %c0_132 = arith.constant 0 : index
    %c0_133 = arith.constant 0 : index
    %268 = vector.load %arg18[%c0_132, %c0_133] : memref<2x10xf32, #tpu.memory_space<vmem>>, vector<2x10xf32>
    tpu.vector_store %arg18[%c0_132, %c0_133], %267 {strides = array<i32>} : memref<2x10xf32, #tpu.memory_space<vmem>>, vector<2x10xf32>,
    return
  }
}

</mosaic_0001>

<llo_original>
// kernel: tile.25
$region0: #{tile.25}
  #allocation0 [shape = 's32[1]{0}', space=sflag, size = 0x4, scoped, tag = 'scoped memory for tile.25']
  %s0 = inlined_call_operand.vmem [shape: f32[8], index: 0, kind: input, shape index: {}]
  %s1 = inlined_call_operand.vmem [shape: f32[16,8], index: 1, kind: output, shape index: {}]
  // Predicated region
  $region2: #{tile.25} parent=0 // pred_check
    _
  $region3: #{tile.25} parent=0 // pred_check_branch
    %3 = sbr.rel (0) target = $region5
  $region4: #{tile.25} parent=0 // pred_region
    _
  $region5: #{tile.25} parent=0 // pred_fallthru
    _
  %v4 = vld [vmem:[%s0] ss:$0 sm:$0xff]
  %5 = vst [vmem:[%s1] sm:$0xff] %v4
  %s6 = scalar_lea.vmem %s1, 8
  %7 = vst [vmem:[%s6] sm:$0xff] %v4

// kernel: tile.26
$region0: #{tile.26}
  %s0 = inlined_call_operand.vmem [shape: f32[16,8], index: 0, kind: input, shape index: {}]
  %s1 = inlined_call_operand.vmem [shape: f32[1,128], index: 1, kind: output, shape index: {}]
  $region1: #{tile.26} parent=0
    #allocation0 [shape = 'u8[4096]{0}', space=vmem, size = 0x1000, scoped, tag = 'scoped mem for output reshape']
    %v2 = vld [vmem:[%s0] sm:$0x1]
    %vm3 = vcmask 64512
    %4 = vst.msk [vmem:[#allocation0] sm:$0x1] %vm3, %v2
    %s5 = scalar_lea.vmem %s0, 15
    %v6 = vld [vmem:[%s5] sm:$0x1]
    %7 = vrot.lane.b32.xlu0 %v6, 120
    %v8 = vpop.permute.xlu0 %7
    %vm9 = vcmask 1048512
    %10 = vst.msk [vmem:[#allocation0] sm:$0x1] %vm9, %v8
    %s11 = scalar_lea.vmem %s0, 14
    %v12 = vld [vmem:[%s11] sm:$0x1]
    %13 = vrot.lane.b32.xlu0 %v12, 112
    %v14 = vpop.permute.xlu0 %13
    %vm15 = vcmask 982912
    %16 = vst.msk [vmem:[#allocation0] sm:$0x1] %vm15, %v14
    %s17 = scalar_lea.vmem %s0, 13
    %v18 = vld [vmem:[%s17] sm:$0x1]
    %19 = vrot.lane.b32.xlu0 %v18, 104
    %v20 = vpop.permute.xlu0 %19
    %vm21 = vcmask 917312
    %22 = vst.msk [vmem:[#allocation0] sm:$0x1] %vm21, %v20
    %s23 = scalar_lea.vmem %s0, 12
    %v24 = vld [vmem:[%s23] sm:$0x1]
    %25 = vrot.lane.b32.xlu0 %v24, 96
    %v26 = vpop.permute.xlu0 %25
    %vm27 = vcmask 851712
    %28 = vst.msk [vmem:[#allocation0] sm:$0x1] %vm27, %v26
    %s29 = scalar_lea.vmem %s0, 11
    %v30 = vld [vmem:[%s29] sm:$0x1]
    %31 = vrot.lane.b32.xlu0 %v30, 88
    %v32 = vpop.permute.xlu0 %31
    %vm33 = vcmask 786112
    %34 = vst.msk [vmem:[#allocation0] sm:$0x1] %vm33, %v32
    %s35 = scalar_lea.vmem %s0, 10
    %v36 = vld [vmem:[%s35] sm:$0x1]
    %37 = vrot.lane.b32.xlu0 %v36, 80
    %v38 = vpop.permute.xlu0 %37
    %vm39 = vcmask 720512
    %40 = vst.msk [vmem:[#allocation0] sm:$0x1] %vm39, %v38
    %s41 = scalar_lea.vmem %s0, 9
    %v42 = vld [vmem:[%s41] sm:$0x1]
    %43 = vrot.lane.b32.xlu0 %v42, 72
    %v44 = vpop.permute.xlu0 %43
    %vm45 = vcmask 654912
    %46 = vst.msk [vmem:[#allocation0] sm:$0x1] %vm45, %v44
    %s47 = scalar_lea.vmem %s0, 8
    %v48 = vld [vmem:[%s47] sm:$0x1]
    %49 = vrot.lane.b32.xlu0 %v48, 64
    %v50 = vpop.permute.xlu0 %49
    %vm51 = vcmask 589312
    %52 = vst.msk [vmem:[#allocation0] sm:$0x1] %vm51, %v50
    %s53 = scalar_lea.vmem %s0, 7
    %v54 = vld [vmem:[%s53] sm:$0x1]
    %55 = vrot.lane.b32.xlu0 %v54, 56
    %v56 = vpop.permute.xlu0 %55
    %vm57 = vcmask 523712
    %58 = vst.msk [vmem:[#allocation0] sm:$0x1] %vm57, %v56
    %s59 = scalar_lea.vmem %s0, 6
    %v60 = vld [vmem:[%s59] sm:$0x1]
    %61 = vrot.lane.b32.xlu0 %v60, 48
    %v62 = vpop.permute.xlu0 %61
    %vm63 = vcmask 458112
    %64 = vst.msk [vmem:[#allocation0] sm:$0x1] %vm63, %v62
    %s65 = scalar_lea.vmem %s0, 5
    %v66 = vld [vmem:[%s65] sm:$0x1]
    %67 = vrot.lane.b32.xlu0 %v66, 40
    %v68 = vpop.permute.xlu0 %67
    %vm69 = vcmask 392512
    %70 = vst.msk [vmem:[#allocation0] sm:$0x1] %vm69, %v68
    %s71 = scalar_lea.vmem %s0, 4
    %v72 = vld [vmem:[%s71] sm:$0x1]
    %73 = vrot.lane.b32.xlu0 %v72, 32
    %v74 = vpop.permute.xlu0 %73
    %vm75 = vcmask 326912
    %76 = vst.msk [vmem:[#allocation0] sm:$0x1] %vm75, %v74
    %s77 = scalar_lea.vmem %s0, 3
    %v78 = vld [vmem:[%s77] sm:$0x1]
    %79 = vrot.lane.b32.xlu0 %v78, 24
    %v80 = vpop.permute.xlu0 %79
    %vm81 = vcmask 261312
    %82 = vst.msk [vmem:[#allocation0] sm:$0x1] %vm81, %v80
    %s83 = scalar_lea.vmem %s0, 2
    %v84 = vld [vmem:[%s83] sm:$0x1]
    %85 = vrot.lane.b32.xlu0 %v84, 16
    %v86 = vpop.permute.xlu0 %85
    %vm87 = vcmask 195712
    %88 = vst.msk [vmem:[#allocation0] sm:$0x1] %vm87, %v86
    %s89 = scalar_lea.vmem %s0, 1
    %v90 = vld [vmem:[%s89] sm:$0x1]
    %91 = vrot.lane.b32.xlu0 %v90, 8
    %v92 = vpop.permute.xlu0 %91
    %vm93 = vcmask 130112
    %94 = vst.msk [vmem:[#allocation0] sm:$0x1] %vm93, %v92
    %s96 = sshllo.u32 0, 1
    %v98 = vld [vmem:[#allocation0] sm:%s96]
    %s99 = sshllo.u32 0, 1
    %100 = vst [vmem:[%s1] sm:%s99] %v98

// kernel: tile.31
$region0: #{tile.31}
  %s0 = inlined_call_operand.vmem [shape: f32[8,16], index: 0, kind: input, shape index: {}]
  %s1 = inlined_call_operand.vmem [shape: f32[1,128], index: 1, kind: output, shape index: {}]
  $region1: #{tile.31} parent=0
    #allocation0 [shape = 'u8[4096]{0}', space=vmem, size = 0x1000, scoped, tag = 'scoped mem for output reshape']
    %v2 = vld [vmem:[%s0] sm:$0x1]
    %vm3 = vcmask 130048
    %4 = vst.msk [vmem:[#allocation0] sm:$0x1] %vm3, %v2
    %s5 = scalar_lea.vmem %s0, 7
    %v6 = vld [vmem:[%s5] sm:$0x1]
    %7 = vrot.lane.b32.xlu0 %v6, 112
    %v8 = vpop.permute.xlu0 %7
    %vm9 = vcmask 1048448
    %10 = vst.msk [vmem:[#allocation0] sm:$0x1] %vm9, %v8
    %s11 = scalar_lea.vmem %s0, 6
    %v12 = vld [vmem:[%s11] sm:$0x1]
    %13 = vrot.lane.b32.xlu0 %v12, 96
    %v14 = vpop.permute.xlu0 %13
    %vm15 = vcmask 917248
    %16 = vst.msk [vmem:[#allocation0] sm:$0x1] %vm15, %v14
    %s17 = scalar_lea.vmem %s0, 5
    %v18 = vld [vmem:[%s17] sm:$0x1]
    %19 = vrot.lane.b32.xlu0 %v18, 80
    %v20 = vpop.permute.xlu0 %19
    %vm21 = vcmask 786048
    %22 = vst.msk [vmem:[#allocation0] sm:$0x1] %vm21, %v20
    %s23 = scalar_lea.vmem %s0, 4
    %v24 = vld [vmem:[%s23] sm:$0x1]
    %25 = vrot.lane.b32.xlu0 %v24, 64
    %v26 = vpop.permute.xlu0 %25
    %vm27 = vcmask 654848
    %28 = vst.msk [vmem:[#allocation0] sm:$0x1] %vm27, %v26
    %s29 = scalar_lea.vmem %s0, 3
    %v30 = vld [vmem:[%s29] sm:$0x1]
    %31 = vrot.lane.b32.xlu0 %v30, 48
    %v32 = vpop.permute.xlu0 %31
    %vm33 = vcmask 523648
    %34 = vst.msk [vmem:[#allocation0] sm:$0x1] %vm33, %v32
    %s35 = scalar_lea.vmem %s0, 2
    %v36 = vld [vmem:[%s35] sm:$0x1]
    %37 = vrot.lane.b32.xlu0 %v36, 32
    %v38 = vpop.permute.xlu0 %37
    %vm39 = vcmask 392448
    %40 = vst.msk [vmem:[#allocation0] sm:$0x1] %vm39, %v38
    %s41 = scalar_lea.vmem %s0, 1
    %v42 = vld [vmem:[%s41] sm:$0x1]
    %43 = vrot.lane.b32.xlu0 %v42, 16
    %v44 = vpop.permute.xlu0 %43
    %vm45 = vcmask 261248
    %46 = vst.msk [vmem:[#allocation0] sm:$0x1] %vm45, %v44
    %s48 = sshllo.u32 0, 1
    %v50 = vld [vmem:[#allocation0] sm:%s48]
    %s51 = sshllo.u32 0, 1
    %52 = vst [vmem:[%s1] sm:%s51] %v50

// kernel: tile.30
$region0: #{tile.30}
  #allocation0 [shape = 's32[1]{0}', space=sflag, size = 0x4, scoped, tag = 'scoped memory for tile.30']
  %s0 = inlined_call_operand.vmem [shape: f32[16], index: 0, kind: input, shape index: {}]
  %s1 = inlined_call_operand.vmem [shape: f32[8,16], index: 1, kind: output, shape index: {}]
  // Predicated region
  $region2: #{tile.30} parent=0 // pred_check
    _
  $region3: #{tile.30} parent=0 // pred_check_branch
    %3 = sbr.rel (0) target = $region5
  $region4: #{tile.30} parent=0 // pred_region
    _
  $region5: #{tile.30} parent=0 // pred_fallthru
    _
  %v4 = vld [vmem:[%s0] ss:$0 sm:$0xff]
  %5 = vst [vmem:[%s1] sm:$0xff] %v4

// kernel: tile.35
$region0: #{tile.35}
  #allocation0 [shape = 's32[1]{0}', space=sflag, size = 0x4, scoped, tag = 'scoped memory for tile.35']
  %s0 = inlined_call_operand.vmem [shape: f32[32], index: 0, kind: input, shape index: {}]
  %s1 = inlined_call_operand.vmem [shape: f32[4,32], index: 1, kind: output, shape index: {}]
  // Predicated region
  $region2: #{tile.35} parent=0 // pred_check
    _
  $region3: #{tile.35} parent=0 // pred_check_branch
    %3 = sbr.rel (0) target = $region5
  $region4: #{tile.35} parent=0 // pred_region
    _
  $region5: #{tile.35} parent=0 // pred_fallthru
    _
  %v4 = vld [vmem:[%s0] ss:$0 sm:$0xff]
  %5 = vst [vmem:[%s1] sm:$0xf] %v4

// kernel: tile.36
$region0: #{tile.36}
  %s0 = inlined_call_operand.vmem [shape: f32[4,32], index: 0, kind: input, shape index: {}]
  %s1 = inlined_call_operand.vmem [shape: f32[1,128], index: 1, kind: output, shape index: {}]
  $region1: #{tile.36} parent=0
    #allocation0 [shape = 'u8[4096]{0}', space=vmem, size = 0x1000, scoped, tag = 'scoped mem for output reshape']
    #allocation1 [shape = 'u8[4096]{0}', space=vmem, size = 0x1000, scoped, tag = 'scoped mem for input reshape']
    %s3 = sshllo.u32 0, 4
    %v4 = vld [vmem:[%s0] sm:%s3]
    %5 = vst [vmem:[#allocation1] sm:%s3] %v4
    %v6 = vld [vmem:[#allocation1] sm:$0x1]
    %vm7 = vcmask 261120
    %8 = vst.msk [vmem:[#allocation0] sm:$0x1] %vm7, %v6
    %s9 = scalar_lea.vmem [#allocation1], 3
    %v10 = vld [vmem:[%s9] sm:$0x1]
    %11 = vrot.lane.b32.xlu0 %v10, 96
    %v12 = vpop.permute.xlu0 %11
    %vm13 = vcmask 1048320
    %14 = vst.msk [vmem:[#allocation0] sm:$0x1] %vm13, %v12
    %s15 = scalar_lea.vmem [#allocation1], 2
    %v16 = vld [vmem:[%s15] sm:$0x1]
    %17 = vrot.lane.b32.xlu0 %v16, 64
    %v18 = vpop.permute.xlu0 %17
    %vm19 = vcmask 785920
    %20 = vst.msk [vmem:[#allocation0] sm:$0x1] %vm19, %v18
    %s21 = scalar_lea.vmem [#allocation1], 1
    %v22 = vld [vmem:[%s21] sm:$0x1]
    %23 = vrot.lane.b32.xlu0 %v22, 32
    %v24 = vpop.permute.xlu0 %23
    %vm25 = vcmask 523520
    %26 = vst.msk [vmem:[#allocation0] sm:$0x1] %vm25, %v24
    %s28 = sshllo.u32 0, 1
    %v30 = vld [vmem:[#allocation0] sm:%s28]
    %s31 = sshllo.u32 0, 1
    %32 = vst [vmem:[%s1] sm:%s31] %v30

// kernel: tile.40
$region0: #{tile.40}
  #allocation0 [shape = 's32[1]{0}', space=sflag, size = 0x4, scoped, tag = 'scoped memory for tile.40']
  %s0 = inlined_call_operand.vmem [shape: f32[64], index: 0, kind: input, shape index: {}]
  %s1 = inlined_call_operand.vmem [shape: f32[2,64], index: 1, kind: output, shape index: {}]
  // Predicated region
  $region2: #{tile.40} parent=0 // pred_check
    _
  $region3: #{tile.40} parent=0 // pred_check_branch
    %3 = sbr.rel (0) target = $region5
  $region4: #{tile.40} parent=0 // pred_region
    _
  $region5: #{tile.40} parent=0 // pred_fallthru
    _
  %v4 = vld [vmem:[%s0] ss:$0 sm:$0xff]
  %5 = vst [vmem:[%s1] sm:$0x3] %v4

// kernel: tile.41
$region0: #{tile.41}
  %s0 = inlined_call_operand.vmem [shape: f32[2,64], index: 0, kind: input, shape index: {}]
  %s1 = inlined_call_operand.vmem [shape: f32[1,128], index: 1, kind: output, shape index: {}]
  $region1: #{tile.41} parent=0
    #allocation0 [shape = 'u8[4096]{0}', space=vmem, size = 0x1000, scoped, tag = 'scoped mem for output reshape']
    #allocation1 [shape = 'u8[4096]{0}', space=vmem, size = 0x1000, scoped, tag = 'scoped mem for input reshape']
    %s3 = sshllo.u32 0, 2
    %v4 = vld [vmem:[%s0] sm:%s3]
    %5 = vst [vmem:[#allocation1] sm:%s3] %v4
    %v6 = vld [vmem:[#allocation1] sm:$0x1]
    %vm7 = vcmask 523264
    %8 = vst.msk [vmem:[#allocation0] sm:$0x1] %vm7, %v6
    %s9 = scalar_lea.vmem [#allocation1], 1
    %v10 = vld [vmem:[%s9] sm:$0x1]
    %11 = vrot.lane.b32.xlu0 %v10, 64
    %v12 = vpop.permute.xlu0 %11
    %vm13 = vcmask 1048064
    %14 = vst.msk [vmem:[#allocation0] sm:$0x1] %vm13, %v12
    %s16 = sshllo.u32 0, 1
    %v18 = vld [vmem:[#allocation0] sm:%s16]
    %s19 = sshllo.u32 0, 1
    %20 = vst [vmem:[%s1] sm:%s19] %v18

// kernel: net_simple_conv2fc_forward.1
$region0: #{net_simple_conv2fc_forward.1}
  #allocation0 [shape = 'u32[]', space=smem, size = 0x4, offset = 0x4, fixed_abs, tag = 'smem constant byte address 0x4 - core index']
  #allocation1 [shape = 'u32[144,128]{1,0:T(1,128)}', space=vmem, size = 0x12000, scoped, tag = 'internal scratch']
  %s0 = inlined_call_operand.vmem [shape: f32[64,128], index: 0, kind: input, shape index: {}]
  %s1 = inlined_call_operand.vmem [shape: bf16[3,32,64], index: 1, kind: input, shape index: {}]
  %s2 = inlined_call_operand.vmem [shape: bf16[384,128], index: 2, kind: input, shape index: {}]
  %s3 = inlined_call_operand.vmem [shape: f32[1,128], index: 3, kind: input, shape index: {}]
  %s4 = inlined_call_operand.vmem [shape: bf16[3,16,32], index: 4, kind: input, shape index: {}]
  %s5 = inlined_call_operand.vmem [shape: bf16[384,128], index: 5, kind: input, shape index: {}]
  %s6 = inlined_call_operand.vmem [shape: f32[1,128], index: 6, kind: input, shape index: {}]
  %s7 = inlined_call_operand.vmem [shape: bf16[3,8,16], index: 7, kind: input, shape index: {}]
  %s8 = inlined_call_operand.vmem [shape: bf16[384,128], index: 8, kind: input, shape index: {}]
  %s9 = inlined_call_operand.vmem [shape: f32[1,128], index: 9, kind: input, shape index: {}]
  %s10 = inlined_call_operand.vmem [shape: bf16[3,4,8], index: 10, kind: input, shape index: {}]
  %s11 = inlined_call_operand.vmem [shape: bf16[384,128], index: 11, kind: input, shape index: {}]
  %s12 = inlined_call_operand.vmem [shape: f32[1,128], index: 12, kind: input, shape index: {}]
  %s13 = inlined_call_operand.vmem [shape: bf16[2,2,4], index: 13, kind: input, shape index: {}]
  %s14 = inlined_call_operand.vmem [shape: bf16[256,32], index: 14, kind: input, shape index: {}]
  %s15 = inlined_call_operand.vmem [shape: f32[1,32], index: 15, kind: input, shape index: {}]
  %s16 = inlined_call_operand.vmem [shape: bf16[32,10], index: 16, kind: input, shape index: {}]
  %s17 = inlined_call_operand.vmem [shape: f32[1,10], index: 17, kind: input, shape index: {}]
  %s18 = inlined_call_operand.hbm [shape: f32[2,10], index: 18, kind: output, shape index: {}]
  %s19 = sld [smem:[#allocation0]]
  $region82: #{net_simple_conv2fc_forward.1} parent=0
    _
  %s21 = ssub.s32 1, %s19
  %s22 = scalar_select 0, %s21, %s19
  $region1: #{net_simple_conv2fc_forward.1} parent=0
    #allocation2 [shape = 'u8[1024]{0}', space=vmem, size = 0x400, scoped, tag = 'output window, operand 0, single buffered']
    #allocation3 [shape = 's32[1]{0}', space=sflag, size = 0x4, scoped, tag = 'scoped memory for net_simple_conv2fc_forward.1']
    %23 = vsyncpa [#allocation3], 0
    // Predicated region
    $region2: #{net_simple_conv2fc_forward.1} parent=1 // pred_check
      _
    $region3: #{net_simple_conv2fc_forward.1} parent=1 // pred_check_branch
      %25 = sbr.rel (0) target = $region5
    $region4: #{net_simple_conv2fc_forward.1} parent=1 // pred_region
      _
    $region5: #{net_simple_conv2fc_forward.1} parent=1 // pred_fallthru
      _
    // Predicated region
    $region6: #{net_simple_conv2fc_forward.1} parent=1 // pred_check
      _
    $region7: #{net_simple_conv2fc_forward.1} parent=1 // pred_check_branch
      %27 = sbr.rel (0) target = $region9
    $region8: #{net_simple_conv2fc_forward.1} parent=1 // pred_region
      _
    $region9: #{net_simple_conv2fc_forward.1} parent=1 // pred_fallthru
      _
    // Predicated region
    $region10: #{net_simple_conv2fc_forward.1} parent=1 // pred_check
      _
    $region11: #{net_simple_conv2fc_forward.1} parent=1 // pred_check_branch
      %29 = sbr.rel (0) target = $region13
    $region12: #{net_simple_conv2fc_forward.1} parent=1 // pred_region
      _
    $region13: #{net_simple_conv2fc_forward.1} parent=1 // pred_fallthru
      _
    // Predicated region
    $region14: #{net_simple_conv2fc_forward.1} parent=1 // pred_check
      _
    $region15: #{net_simple_conv2fc_forward.1} parent=1 // pred_check_branch
      %31 = sbr.rel (0) target = $region17
    $region16: #{net_simple_conv2fc_forward.1} parent=1 // pred_region
      _
    $region17: #{net_simple_conv2fc_forward.1} parent=1 // pred_fallthru
      _
    // Predicated region
    $region18: #{net_simple_conv2fc_forward.1} parent=1 // pred_check
      _
    $region19: #{net_simple_conv2fc_forward.1} parent=1 // pred_check_branch
      %33 = sbr.rel (0) target = $region21
    $region20: #{net_simple_conv2fc_forward.1} parent=1 // pred_region
      _
    $region21: #{net_simple_conv2fc_forward.1} parent=1 // pred_fallthru
      _
    // Predicated region
    $region22: #{net_simple_conv2fc_forward.1} parent=1 // pred_check
      _
    $region23: #{net_simple_conv2fc_forward.1} parent=1 // pred_check_branch
      %35 = sbr.rel (0) target = $region25
    $region24: #{net_simple_conv2fc_forward.1} parent=1 // pred_region
      _
    $region25: #{net_simple_conv2fc_forward.1} parent=1 // pred_fallthru
      _
    // Predicated region
    $region26: #{net_simple_conv2fc_forward.1} parent=1 // pred_check
      _
    $region27: #{net_simple_conv2fc_forward.1} parent=1 // pred_check_branch
      %37 = sbr.rel (0) target = $region29
    $region28: #{net_simple_conv2fc_forward.1} parent=1 // pred_region
      _
    $region29: #{net_simple_conv2fc_forward.1} parent=1 // pred_fallthru
      _
    // Predicated region
    $region30: #{net_simple_conv2fc_forward.1} parent=1 // pred_check
      _
    $region31: #{net_simple_conv2fc_forward.1} parent=1 // pred_check_branch
      %39 = sbr.rel (0) target = $region33
    $region32: #{net_simple_conv2fc_forward.1} parent=1 // pred_region
      _
    $region33: #{net_simple_conv2fc_forward.1} parent=1 // pred_fallthru
      _
    // Predicated region
    $region34: #{net_simple_conv2fc_forward.1} parent=1 // pred_check
      _
    $region35: #{net_simple_conv2fc_forward.1} parent=1 // pred_check_branch
      %41 = sbr.rel (0) target = $region37
    $region36: #{net_simple_conv2fc_forward.1} parent=1 // pred_region
      _
    $region37: #{net_simple_conv2fc_forward.1} parent=1 // pred_fallthru
      _
    // Predicated region
    $region38: #{net_simple_conv2fc_forward.1} parent=1 // pred_check
      _
    $region39: #{net_simple_conv2fc_forward.1} parent=1 // pred_check_branch
      %43 = sbr.rel (0) target = $region41
    $region40: #{net_simple_conv2fc_forward.1} parent=1 // pred_region
      _
    $region41: #{net_simple_conv2fc_forward.1} parent=1 // pred_fallthru
      _
    // Predicated region
    $region42: #{net_simple_conv2fc_forward.1} parent=1 // pred_check
      _
    $region43: #{net_simple_conv2fc_forward.1} parent=1 // pred_check_branch
      %45 = sbr.rel (0) target = $region45
    $region44: #{net_simple_conv2fc_forward.1} parent=1 // pred_region
      _
    $region45: #{net_simple_conv2fc_forward.1} parent=1 // pred_fallthru
      _
    // Predicated region
    $region46: #{net_simple_conv2fc_forward.1} parent=1 // pred_check
      _
    $region47: #{net_simple_conv2fc_forward.1} parent=1 // pred_check_branch
      %47 = sbr.rel (0) target = $region49
    $region48: #{net_simple_conv2fc_forward.1} parent=1 // pred_region
      _
    $region49: #{net_simple_conv2fc_forward.1} parent=1 // pred_fallthru
      _
    // Predicated region
    $region50: #{net_simple_conv2fc_forward.1} parent=1 // pred_check
      _
    $region51: #{net_simple_conv2fc_forward.1} parent=1 // pred_check_branch
      %49 = sbr.rel (0) target = $region53
    $region52: #{net_simple_conv2fc_forward.1} parent=1 // pred_region
      _
    $region53: #{net_simple_conv2fc_forward.1} parent=1 // pred_fallthru
      _
    // Predicated region
    $region54: #{net_simple_conv2fc_forward.1} parent=1 // pred_check
      _
    $region55: #{net_simple_conv2fc_forward.1} parent=1 // pred_check_branch
      %51 = sbr.rel (0) target = $region57
    $region56: #{net_simple_conv2fc_forward.1} parent=1 // pred_region
      _
    $region57: #{net_simple_conv2fc_forward.1} parent=1 // pred_fallthru
      _
    // Predicated region
    $region58: #{net_simple_conv2fc_forward.1} parent=1 // pred_check
      _
    $region59: #{net_simple_conv2fc_forward.1} parent=1 // pred_check_branch
      %53 = sbr.rel (0) target = $region61
    $region60: #{net_simple_conv2fc_forward.1} parent=1 // pred_region
      _
    $region61: #{net_simple_conv2fc_forward.1} parent=1 // pred_fallthru
      _
    // Predicated region
    $region62: #{net_simple_conv2fc_forward.1} parent=1 // pred_check
      _
    $region63: #{net_simple_conv2fc_forward.1} parent=1 // pred_check_branch
      %55 = sbr.rel (0) target = $region65
    $region64: #{net_simple_conv2fc_forward.1} parent=1 // pred_region
      _
    $region65: #{net_simple_conv2fc_forward.1} parent=1 // pred_fallthru
      _
    // Predicated region
    $region66: #{net_simple_conv2fc_forward.1} parent=1 // pred_check
      _
    $region67: #{net_simple_conv2fc_forward.1} parent=1 // pred_check_branch
      %57 = sbr.rel (0) target = $region69
    $region68: #{net_simple_conv2fc_forward.1} parent=1 // pred_region
      _
    $region69: #{net_simple_conv2fc_forward.1} parent=1 // pred_fallthru
      _
    // Predicated region
    $region70: #{net_simple_conv2fc_forward.1} parent=1 // pred_check
      _
    $region71: #{net_simple_conv2fc_forward.1} parent=1 // pred_check_branch
      %59 = sbr.rel (0) target = $region73
    $region72: #{net_simple_conv2fc_forward.1} parent=1 // pred_region
      _
    $region73: #{net_simple_conv2fc_forward.1} parent=1 // pred_fallthru
      _
    %v61 = vld [vmem:[%s0] sm:$0xff]
    %v62 = vld [vmem:[%s0 + $0x8] sm:$0xff]
    %v63 = vld [vmem:[%s0 + $0x10] sm:$0xff]
    %v64 = vld [vmem:[%s0 + $0x18] sm:$0xff]
    %v65 = vld [vmem:[%s0 + $0x20] sm:$0xff]
    %v66 = vld [vmem:[%s0 + $0x28] sm:$0xff]
    %v67 = vld [vmem:[%s0 + $0x30] sm:$0xff]
    %v68 = vld [vmem:[%s0 + $0x38] sm:$0xff]
    %v69 = vpack.c.bf16 %v62, %v61
    %v70 = vpack.c.bf16 %v64, %v63
    %v71 = vpack.c.bf16 %v66, %v65
    %v72 = vpack.c.bf16 %v68, %v67
    %v73 = vld [vmem:[%s1] sm:$0xf]
    %v74 = vld [vmem:[%s1 + $0x4] sm:$0xf]
    %v75 = vld [vmem:[%s1 + $0x8] sm:$0xf]
    %v76 = vld [vmem:[%s1 + $0xc] sm:$0xf]
    %v81 = vunpack.c.l.b16 %v73
    %v82 = vunpack.c.l.b16 %v74
    %v83 = vunpack.c.l.b16 %v75
    %v84 = vunpack.c.l.b16 %v76
    %v85 = vpack.c.b16 %v82, %v81
    %v86 = vpack.c.b16 %v84, %v83
    %vm87 = vcmask 523264
    %v89 = vsel %vm87, %v85, 0
    %v92 = vsel %vm87, %v86, 0
    %94 = vmatprep.subr.bf16.mxu0 0
    %95 = vmatpush1.bf16.msra.mxu0 %v69
    %96 = vmatprep.subr.bf16.mxu0 0
    %97 = vmatpush1.bf16.msra.mxu0 %v70
    %98 = vmatprep.subr.bf16.mxu0 0
    %99 = vmatpush1.bf16.msra.mxu0 %v71
    %100 = vmatprep.subr.bf16.mxu0 0
    %101 = vmatpush1.bf16.msra.mxu0 %v72
    %102 = vmatprep.subr.bf16.mxu0 0
    %103 = vmatpush1.bf16.msra.mxu0 0
    %104 = vmatprep.subr.bf16.mxu0 0
    %105 = vmatpush1.bf16.msra.mxu0 0
    %106 = vmatprep.subr.bf16.mxu0 0
    %107 = vmatpush1.bf16.msra.mxu0 0
    %108 = vmatprep.subr.bf16.mxu0 0
    %109 = vmatpush1.bf16.msra.mxu0 0
    %110 = vmatprep.subr.bf16.mxu0 0
    %111 = vmatpush1.bf16.msra.mxu0 0
    %112 = vmatprep.subr.bf16.mxu0 0
    %113 = vmatpush1.bf16.msra.mxu0 0
    %114 = vmatprep.subr.bf16.mxu0 0
    %115 = vmatpush1.bf16.msra.mxu0 0
    %116 = vmatprep.subr.bf16.mxu0 0
    %117 = vmatpush1.bf16.msra.mxu0 0
    %118 = vmatprep.subr.bf16.mxu0 0
    %119 = vmatpush1.bf16.msra.mxu0 0
    %120 = vmatprep.subr.bf16.mxu0 0
    %121 = vmatpush1.bf16.msra.mxu0 0
    %122 = vmatprep.subr.bf16.mxu0 0
    %123 = vmatpush1.bf16.msra.mxu0 0
    %124 = vmatprep.subr.bf16.mxu0 0
    %125 = vmatpush1.bf16.msra.mxu0 0
    %126 = vmatprep.mubr.bf16.mxu0 0
    %127 = vmatmul.mubr.bf16.gmra.mrb[0].mxu0 %v89
    %v128 = vpop.f32.mrb[0].mxu0
    %v129 = vadd.f32 0.0, %v128
    %v130 = vpop.f32.mrb[0].mxu0
    %v131 = vpop.f32.mrb[0].mxu0
    %v132 = vadd.f32 0.0, %v131
    %v133 = vpop.f32.mrb[0].mxu0
    %134 = vmatprep.mubr.bf16.mxu0 0
    %135 = vmatmul.mubr.bf16.gmra.mrb[0].mxu0 %v92
    %v136 = vpop.f32.mrb[0].mxu0
    %v137 = vadd.f32 0.0, %v136
    %v138 = vpop.f32.mrb[0].mxu0
    %v139 = vpop.f32.mrb[0].mxu0
    %v140 = vadd.f32 0.0, %v139
    %v141 = vpop.f32.mrb[0].mxu0
    %142 = vdwg.mxu0
    %v143 = vpack.c.bf16 %v132, %v129
    %v144 = vpack.c.bf16 %v140, %v137
    %s145 = scalar_lea.vmem %s1, 16
    %v146 = vld [vmem:[%s145] sm:$0xf]
    %v147 = vld [vmem:[%s145 + $0x4] sm:$0xf]
    %v148 = vld [vmem:[%s145 + $0x8] sm:$0xf]
    %v149 = vld [vmem:[%s145 + $0xc] sm:$0xf]
    %v154 = vunpack.c.l.b16 %v146
    %v155 = vunpack.c.l.b16 %v147
    %v156 = vunpack.c.l.b16 %v148
    %v157 = vunpack.c.l.b16 %v149
    %v158 = vpack.c.b16 %v155, %v154
    %v159 = vpack.c.b16 %v157, %v156
    %v161 = vsel %vm87, %v158, 0
    %v164 = vsel %vm87, %v159, 0
    %166 = vmatprep.subr.bf16.mxu0 0
    %167 = vmatpush1.bf16.msra.mxu0 %v69
    %168 = vmatprep.subr.bf16.mxu0 0
    %169 = vmatpush1.bf16.msra.mxu0 %v70
    %170 = vmatprep.subr.bf16.mxu0 0
    %171 = vmatpush1.bf16.msra.mxu0 %v71
    %172 = vmatprep.subr.bf16.mxu0 0
    %173 = vmatpush1.bf16.msra.mxu0 %v72
    %174 = vmatprep.subr.bf16.mxu0 0
    %175 = vmatpush1.bf16.msra.mxu0 0
    %176 = vmatprep.subr.bf16.mxu0 0
    %177 = vmatpush1.bf16.msra.mxu0 0
    %178 = vmatprep.subr.bf16.mxu0 0
    %179 = vmatpush1.bf16.msra.mxu0 0
    %180 = vmatprep.subr.bf16.mxu0 0
    %181 = vmatpush1.bf16.msra.mxu0 0
    %182 = vmatprep.subr.bf16.mxu0 0
    %183 = vmatpush1.bf16.msra.mxu0 0
    %184 = vmatprep.subr.bf16.mxu0 0
    %185 = vmatpush1.bf16.msra.mxu0 0
    %186 = vmatprep.subr.bf16.mxu0 0
    %187 = vmatpush1.bf16.msra.mxu0 0
    %188 = vmatprep.subr.bf16.mxu0 0
    %189 = vmatpush1.bf16.msra.mxu0 0
    %190 = vmatprep.subr.bf16.mxu0 0
    %191 = vmatpush1.bf16.msra.mxu0 0
    %192 = vmatprep.subr.bf16.mxu0 0
    %193 = vmatpush1.bf16.msra.mxu0 0
    %194 = vmatprep.subr.bf16.mxu0 0
    %195 = vmatpush1.bf16.msra.mxu0 0
    %196 = vmatprep.subr.bf16.mxu0 0
    %197 = vmatpush1.bf16.msra.mxu0 0
    %198 = vmatprep.mubr.bf16.mxu0 0
    %199 = vmatmul.mubr.bf16.gmra.mrb[0].mxu0 %v161
    %v200 = vpop.f32.mrb[0].mxu0
    %v201 = vadd.f32 0.0, %v200
    %v202 = vpop.f32.mrb[0].mxu0
    %v203 = vpop.f32.mrb[0].mxu0
    %v204 = vadd.f32 0.0, %v203
    %v205 = vpop.f32.mrb[0].mxu0
    %206 = vmatprep.mubr.bf16.mxu0 0
    %207 = vmatmul.mubr.bf16.gmra.mrb[0].mxu0 %v164
    %v208 = vpop.f32.mrb[0].mxu0
    %v209 = vadd.f32 0.0, %v208
    %v210 = vpop.f32.mrb[0].mxu0
    %v211 = vpop.f32.mrb[0].mxu0
    %v212 = vadd.f32 0.0, %v211
    %v213 = vpop.f32.mrb[0].mxu0
    %214 = vdwg.mxu0
    %v215 = vpack.c.bf16 %v204, %v201
    %v216 = vpack.c.bf16 %v212, %v209
    %s217 = scalar_lea.vmem %s1, 32
    %v218 = vld [vmem:[%s217] sm:$0xf]
    %v219 = vld [vmem:[%s217 + $0x4] sm:$0xf]
    %v220 = vld [vmem:[%s217 + $0x8] sm:$0xf]
    %v221 = vld [vmem:[%s217 + $0xc] sm:$0xf]
    %v226 = vunpack.c.l.b16 %v218
    %v227 = vunpack.c.l.b16 %v219
    %v228 = vunpack.c.l.b16 %v220
    %v229 = vunpack.c.l.b16 %v221
    %v230 = vpack.c.b16 %v227, %v226
    %v231 = vpack.c.b16 %v229, %v228
    %v233 = vsel %vm87, %v230, 0
    %v236 = vsel %vm87, %v231, 0
    %238 = vmatprep.subr.bf16.mxu0 0
    %239 = vmatpush1.bf16.msra.mxu0 %v69
    %240 = vmatprep.subr.bf16.mxu0 0
    %241 = vmatpush1.bf16.msra.mxu0 %v70
    %242 = vmatprep.subr.bf16.mxu0 0
    %243 = vmatpush1.bf16.msra.mxu0 %v71
    %244 = vmatprep.subr.bf16.mxu0 0
    %245 = vmatpush1.bf16.msra.mxu0 %v72
    %246 = vmatprep.subr.bf16.mxu0 0
    %247 = vmatpush1.bf16.msra.mxu0 0
    %248 = vmatprep.subr.bf16.mxu0 0
    %249 = vmatpush1.bf16.msra.mxu0 0
    %250 = vmatprep.subr.bf16.mxu0 0
    %251 = vmatpush1.bf16.msra.mxu0 0
    %252 = vmatprep.subr.bf16.mxu0 0
    %253 = vmatpush1.bf16.msra.mxu0 0
    %254 = vmatprep.subr.bf16.mxu0 0
    %255 = vmatpush1.bf16.msra.mxu0 0
    %256 = vmatprep.subr.bf16.mxu0 0
    %257 = vmatpush1.bf16.msra.mxu0 0
    %258 = vmatprep.subr.bf16.mxu0 0
    %259 = vmatpush1.bf16.msra.mxu0 0
    %260 = vmatprep.subr.bf16.mxu0 0
    %261 = vmatpush1.bf16.msra.mxu0 0
    %262 = vmatprep.subr.bf16.mxu0 0
    %263 = vmatpush1.bf16.msra.mxu0 0
    %264 = vmatprep.subr.bf16.mxu0 0
    %265 = vmatpush1.bf16.msra.mxu0 0
    %266 = vmatprep.subr.bf16.mxu0 0
    %267 = vmatpush1.bf16.msra.mxu0 0
    %268 = vmatprep.subr.bf16.mxu0 0
    %269 = vmatpush1.bf16.msra.mxu0 0
    %270 = vmatprep.mubr.bf16.mxu0 0
    %271 = vmatmul.mubr.bf16.gmra.mrb[0].mxu0 %v233
    %v272 = vpop.f32.mrb[0].mxu0
    %v273 = vadd.f32 0.0, %v272
    %v274 = vpop.f32.mrb[0].mxu0
    %v275 = vpop.f32.mrb[0].mxu0
    %v276 = vadd.f32 0.0, %v275
    %v277 = vpop.f32.mrb[0].mxu0
    %278 = vmatprep.mubr.bf16.mxu0 0
    %279 = vmatmul.mubr.bf16.gmra.mrb[0].mxu0 %v236
    %v280 = vpop.f32.mrb[0].mxu0
    %v281 = vadd.f32 0.0, %v280
    %v282 = vpop.f32.mrb[0].mxu0
    %v283 = vpop.f32.mrb[0].mxu0
    %v284 = vadd.f32 0.0, %v283
    %v285 = vpop.f32.mrb[0].mxu0
    %286 = vdwg.mxu0
    %v287 = vpack.c.bf16 %v276, %v273
    %v288 = vpack.c.bf16 %v284, %v281
    %v289 = vld [vmem:[%s2] sm:$0xf]
    %v290 = vld [vmem:[%s2 + $0x4] sm:$0xf]
    %v291 = vld [vmem:[%s2 + $0x8] sm:$0xf]
    %v292 = vld [vmem:[%s2 + $0xc] sm:$0xf]
    %v293 = vld [vmem:[%s2 + $0x10] sm:$0xf]
    %v294 = vld [vmem:[%s2 + $0x14] sm:$0xf]
    %v295 = vld [vmem:[%s2 + $0x18] sm:$0xf]
    %v296 = vld [vmem:[%s2 + $0x1c] sm:$0xf]
    %v297 = vld [vmem:[%s2 + $0x20] sm:$0xf]
    %v298 = vld [vmem:[%s2 + $0x24] sm:$0xf]
    %v299 = vld [vmem:[%s2 + $0x28] sm:$0xf]
    %v300 = vld [vmem:[%s2 + $0x2c] sm:$0xf]
    %v301 = vld [vmem:[%s2 + $0x30] sm:$0xf]
    %v302 = vld [vmem:[%s2 + $0x34] sm:$0xf]
    %v303 = vld [vmem:[%s2 + $0x38] sm:$0xf]
    %v304 = vld [vmem:[%s2 + $0x3c] sm:$0xf]
    %v305 = vld [vmem:[%s2 + $0x40] sm:$0xf]
    %v306 = vld [vmem:[%s2 + $0x44] sm:$0xf]
    %v307 = vld [vmem:[%s2 + $0x48] sm:$0xf]
    %v308 = vld [vmem:[%s2 + $0x4c] sm:$0xf]
    %v309 = vld [vmem:[%s2 + $0x50] sm:$0xf]
    %v310 = vld [vmem:[%s2 + $0x54] sm:$0xf]
    %v311 = vld [vmem:[%s2 + $0x58] sm:$0xf]
    %v312 = vld [vmem:[%s2 + $0x5c] sm:$0xf]
    %v313 = vld [vmem:[%s2 + $0x60] sm:$0xf]
    %v314 = vld [vmem:[%s2 + $0x64] sm:$0xf]
    %v315 = vld [vmem:[%s2 + $0x68] sm:$0xf]
    %v316 = vld [vmem:[%s2 + $0x6c] sm:$0xf]
    %v317 = vld [vmem:[%s2 + $0x70] sm:$0xf]
    %v318 = vld [vmem:[%s2 + $0x74] sm:$0xf]
    %v319 = vld [vmem:[%s2 + $0x78] sm:$0xf]
    %v320 = vld [vmem:[%s2 + $0x7c] sm:$0xf]
    %v321 = vld [vmem:[%s2 + $0x80] sm:$0xf]
    %v322 = vld [vmem:[%s2 + $0x84] sm:$0xf]
    %v323 = vld [vmem:[%s2 + $0x88] sm:$0xf]
    %v324 = vld [vmem:[%s2 + $0x8c] sm:$0xf]
    %v325 = vld [vmem:[%s2 + $0x90] sm:$0xf]
    %v326 = vld [vmem:[%s2 + $0x94] sm:$0xf]
    %v327 = vld [vmem:[%s2 + $0x98] sm:$0xf]
    %v328 = vld [vmem:[%s2 + $0x9c] sm:$0xf]
    %v329 = vld [vmem:[%s2 + $0xa0] sm:$0xf]
    %v330 = vld [vmem:[%s2 + $0xa4] sm:$0xf]
    %v331 = vld [vmem:[%s2 + $0xa8] sm:$0xf]
    %v332 = vld [vmem:[%s2 + $0xac] sm:$0xf]
    %v333 = vld [vmem:[%s2 + $0xb0] sm:$0xf]
    %v334 = vld [vmem:[%s2 + $0xb4] sm:$0xf]
    %v335 = vld [vmem:[%s2 + $0xb8] sm:$0xf]
    %v336 = vld [vmem:[%s2 + $0xbc] sm:$0xf]
    %v337 = vld [vmem:[%s3] sm:$0x1]
    %v339 = vlaneseq
    %v340 = vshrl.u32 %v339, 7
    %v341 = vsub.s32 0, %v340
    %v342 = vrot.slane %v337, %v341
    %v392 = vunpack.c.l.b16 %v289
    %v393 = vunpack.c.l.b16 %v290
    %v394 = vunpack.c.l.b16 %v291
    %v395 = vunpack.c.l.b16 %v292
    %v396 = vunpack.c.l.b16 %v293
    %v397 = vunpack.c.l.b16 %v294
    %v398 = vunpack.c.l.b16 %v295
    %v399 = vunpack.c.l.b16 %v296
    %v400 = vunpack.c.l.b16 %v297
    %v401 = vunpack.c.l.b16 %v298
    %v402 = vunpack.c.l.b16 %v299
    %v403 = vunpack.c.l.b16 %v300
    %v404 = vunpack.c.l.b16 %v301
    %v405 = vunpack.c.l.b16 %v302
    %v406 = vunpack.c.l.b16 %v303
    %v407 = vunpack.c.l.b16 %v304
    %v408 = vunpack.c.l.b16 %v305
    %v409 = vunpack.c.l.b16 %v306
    %v410 = vunpack.c.l.b16 %v307
    %v411 = vunpack.c.l.b16 %v308
    %v412 = vunpack.c.l.b16 %v309
    %v413 = vunpack.c.l.b16 %v310
    %v414 = vunpack.c.l.b16 %v311
    %v415 = vunpack.c.l.b16 %v312
    %v416 = vunpack.c.l.b16 %v313
    %v417 = vunpack.c.l.b16 %v314
    %v418 = vunpack.c.l.b16 %v315
    %v419 = vunpack.c.l.b16 %v316
    %v420 = vunpack.c.l.b16 %v317
    %v421 = vunpack.c.l.b16 %v318
    %v422 = vunpack.c.l.b16 %v319
    %v423 = vunpack.c.l.b16 %v320
    %v424 = vunpack.c.l.b16 %v321
    %v425 = vunpack.c.l.b16 %v322
    %v426 = vunpack.c.l.b16 %v323
    %v427 = vunpack.c.l.b16 %v324
    %v428 = vunpack.c.l.b16 %v325
    %v429 = vunpack.c.l.b16 %v326
    %v430 = vunpack.c.l.b16 %v327
    %v431 = vunpack.c.l.b16 %v328
    %v432 = vunpack.c.l.b16 %v329
    %v433 = vunpack.c.l.b16 %v330
    %v434 = vunpack.c.l.b16 %v331
    %v435 = vunpack.c.l.b16 %v332
    %v436 = vunpack.c.l.b16 %v333
    %v437 = vunpack.c.l.b16 %v334
    %v438 = vunpack.c.l.b16 %v335
    %v439 = vunpack.c.l.b16 %v336
    %v440 = vpack.c.b16 %v393, %v392
    %v441 = vpack.c.b16 %v395, %v394
    %v442 = vpack.c.b16 %v397, %v396
    %v443 = vpack.c.b16 %v399, %v398
    %v444 = vpack.c.b16 %v401, %v400
    %v445 = vpack.c.b16 %v403, %v402
    %v446 = vpack.c.b16 %v405, %v404
    %v447 = vpack.c.b16 %v407, %v406
    %v448 = vpack.c.b16 %v409, %v408
    %v449 = vpack.c.b16 %v411, %v410
    %v450 = vpack.c.b16 %v413, %v412
    %v451 = vpack.c.b16 %v415, %v414
    %v452 = vpack.c.b16 %v417, %v416
    %v453 = vpack.c.b16 %v419, %v418
    %v454 = vpack.c.b16 %v421, %v420
    %v455 = vpack.c.b16 %v423, %v422
    %v456 = vpack.c.b16 %v425, %v424
    %v457 = vpack.c.b16 %v427, %v426
    %v458 = vpack.c.b16 %v429, %v428
    %v459 = vpack.c.b16 %v431, %v430
    %v460 = vpack.c.b16 %v433, %v432
    %v461 = vpack.c.b16 %v435, %v434
    %v462 = vpack.c.b16 %v437, %v436
    %v463 = vpack.c.b16 %v439, %v438
    %488 = vmatprep.subr.bf16.mxu0 0
    %489 = vmatpush1.bf16.msra.mxu0 %v440
    %490 = vmatprep.subr.bf16.mxu0 0
    %491 = vmatpush1.bf16.msra.mxu0 %v441
    %492 = vmatprep.subr.bf16.mxu0 0
    %493 = vmatpush1.bf16.msra.mxu0 %v442
    %494 = vmatprep.subr.bf16.mxu0 0
    %495 = vmatpush1.bf16.msra.mxu0 %v443
    %496 = vmatprep.subr.bf16.mxu0 0
    %497 = vmatpush1.bf16.msra.mxu0 %v444
    %498 = vmatprep.subr.bf16.mxu0 0
    %499 = vmatpush1.bf16.msra.mxu0 %v445
    %500 = vmatprep.subr.bf16.mxu0 0
    %501 = vmatpush1.bf16.msra.mxu0 %v446
    %502 = vmatprep.subr.bf16.mxu0 0
    %503 = vmatpush1.bf16.msra.mxu0 %v447
    %504 = vmatprep.subr.bf16.mxu0 0
    %505 = vmatpush1.bf16.msra.mxu0 %v448
    %506 = vmatprep.subr.bf16.mxu0 0
    %507 = vmatpush1.bf16.msra.mxu0 %v449
    %508 = vmatprep.subr.bf16.mxu0 0
    %509 = vmatpush1.bf16.msra.mxu0 %v450
    %510 = vmatprep.subr.bf16.mxu0 0
    %511 = vmatpush1.bf16.msra.mxu0 %v451
    %512 = vmatprep.subr.bf16.mxu0 0
    %513 = vmatpush1.bf16.msra.mxu0 %v452
    %514 = vmatprep.subr.bf16.mxu0 0
    %515 = vmatpush1.bf16.msra.mxu0 %v453
    %516 = vmatprep.subr.bf16.mxu0 0
    %517 = vmatpush1.bf16.msra.mxu0 %v454
    %518 = vmatprep.subr.bf16.mxu0 0
    %519 = vmatpush1.bf16.msra.mxu0 %v455
    %520 = vmatprep.mubr.bf16.mxu0 %v215
    %521 = vmatmul.mubr.bf16.gmra.mrb[0].mxu0 %v143
    %v522 = vpop.f32.mrb[0].mxu0
    %v523 = vadd.f32 %v342, %v522
    %v524 = vpop.f32.mrb[0].mxu0
    %v525 = vpop.f32.mrb[0].mxu0
    %v526 = vadd.f32 %v342, %v525
    %v527 = vpop.f32.mrb[0].mxu0
    %528 = vmatprep.mubr.bf16.mxu0 %v216
    %529 = vmatmul.mubr.bf16.gmra.mrb[0].mxu0 %v144
    %v530 = vpop.f32.mrb[0].mxu0
    %v531 = vadd.f32 %v342, %v530
    %v532 = vpop.f32.mrb[0].mxu0
    %v533 = vpop.f32.mrb[0].mxu0
    %v534 = vadd.f32 %v342, %v533
    %v535 = vpop.f32.mrb[0].mxu0
    %536 = vdwg.mxu0
    %537 = vmatprep.subr.bf16.mxu0 0
    %538 = vmatpush1.bf16.msra.mxu0 %v456
    %539 = vmatprep.subr.bf16.mxu0 0
    %540 = vmatpush1.bf16.msra.mxu0 %v457
    %541 = vmatprep.subr.bf16.mxu0 0
    %542 = vmatpush1.bf16.msra.mxu0 %v458
    %543 = vmatprep.subr.bf16.mxu0 0
    %544 = vmatpush1.bf16.msra.mxu0 %v459
    %545 = vmatprep.subr.bf16.mxu0 0
    %546 = vmatpush1.bf16.msra.mxu0 %v460
    %547 = vmatprep.subr.bf16.mxu0 0
    %548 = vmatpush1.bf16.msra.mxu0 %v461
    %549 = vmatprep.subr.bf16.mxu0 0
    %550 = vmatpush1.bf16.msra.mxu0 %v462
    %551 = vmatprep.subr.bf16.mxu0 0
    %552 = vmatpush1.bf16.msra.mxu0 %v463
    %553 = vmatprep.subr.bf16.mxu0 0
    %554 = vmatpush1.bf16.msra.mxu0 0
    %555 = vmatprep.subr.bf16.mxu0 0
    %556 = vmatpush1.bf16.msra.mxu0 0
    %557 = vmatprep.subr.bf16.mxu0 0
    %558 = vmatpush1.bf16.msra.mxu0 0
    %559 = vmatprep.subr.bf16.mxu0 0
    %560 = vmatpush1.bf16.msra.mxu0 0
    %561 = vmatprep.subr.bf16.mxu0 0
    %562 = vmatpush1.bf16.msra.mxu0 0
    %563 = vmatprep.subr.bf16.mxu0 0
    %564 = vmatpush1.bf16.msra.mxu0 0
    %565 = vmatprep.subr.bf16.mxu0 0
    %566 = vmatpush1.bf16.msra.mxu0 0
    %567 = vmatprep.subr.bf16.mxu0 0
    %568 = vmatpush1.bf16.msra.mxu0 0
    %569 = vmatprep.mubr.bf16.mxu0 0
    %570 = vmatmul.mubr.bf16.gmra.mrb[0].mxu0 %v287
    %v571 = vpop.f32.mrb[0].mxu0
    %v572 = vadd.f32 %v523, %v571
    %v573 = vpop.f32.mrb[0].mxu0
    %v574 = vpop.f32.mrb[0].mxu0
    %v575 = vadd.f32 %v526, %v574
    %v576 = vpop.f32.mrb[0].mxu0
    %577 = vmatprep.mubr.bf16.mxu0 0
    %578 = vmatmul.mubr.bf16.gmra.mrb[0].mxu0 %v288
    %v579 = vpop.f32.mrb[0].mxu0
    %v580 = vadd.f32 %v531, %v579
    %v581 = vpop.f32.mrb[0].mxu0
    %v582 = vpop.f32.mrb[0].mxu0
    %v583 = vadd.f32 %v534, %v582
    %v584 = vpop.f32.mrb[0].mxu0
    %585 = vdwg.mxu0
    %v586 = vadd.f32 %v572, %v575
    %v587 = vadd.f32 %v586, %v580
    %v588 = vadd.f32 %v587, %v583
    %v589 = vrot.slane %v588, 4
    %v590 = vadd.f32 %v588, %v589
    %v591 = vrot.slane %v590, 2
    %v592 = vadd.f32 %v590, %v591
    %v593 = vrot.slane %v592, 1
    %v594 = vadd.f32 %v592, %v593
    %v595 = vmul.f32 %v572, %v572
    %v596 = vmul.f32 %v575, %v575
    %v597 = vmul.f32 %v580, %v580
    %v598 = vmul.f32 %v583, %v583
    %v599 = vadd.f32 %v595, %v596
    %v600 = vadd.f32 %v599, %v597
    %v601 = vadd.f32 %v600, %v598
    %v602 = vrot.slane %v601, 4
    %v603 = vadd.f32 %v601, %v602
    %v604 = vrot.slane %v603, 2
    %v605 = vadd.f32 %v603, %v604
    %v606 = vrot.slane %v605, 1
    %v607 = vadd.f32 %v605, %v606
    %vm608 = vcmask 1040384
    %v609 = vsel %vm608, %v594, %v607
    %610 = vrot.lane.b32.xlu0 %v609, 64
    %v611 = vpop.permute.xlu0 %610
    %v612 = vadd.f32 %v609, %v611
    %613 = vrot.lane.b32.xlu0 %v612, 32
    %v614 = vpop.permute.xlu0 %613
    %v615 = vadd.f32 %v612, %v614
    %616 = vrot.lane.b32.xlu0 %v615, 16
    %v617 = vpop.permute.xlu0 %616
    %v618 = vadd.f32 %v615, %v617
    %619 = vrot.lane.b32.xlu0 %v618, 8
    %v620 = vpop.permute.xlu0 %619
    %v621 = vadd.f32 %v618, %v620
    %v622 = vmul.f32 %v621, 0.001953125
    %v623 = vmul.f32 %v622, %v622
    %v625 = vrot.slane %v623, 7
    %v627 = vsub.f32 %v622, %v625
    %v628 = vmax.f32 %v627, 0.0
    %v629 = vadd.f32 %v628, 1e-05
    %v630 = vrsqrt.pop %v629
    %v631 = vsub.f32 0.0, %v622
    %v633 = vrot.slane %v630, 1
    %v635 = vmul.f32 %v631, %v633
    %v636 = vlaneseq
    %v637 = vshrl.u32 %v636, 7
    %v638 = vsub.s32 1, %v637
    %v639 = vrot.slane %v630, %v638
    %v640 = vmul.f32 %v572, %v639
    %v641 = vmul.f32 %v575, %v639
    %v642 = vmul.f32 %v580, %v639
    %v643 = vmul.f32 %v583, %v639
    %v644 = vlaneseq
    %v645 = vshrl.u32 %v644, 7
    %v646 = vsub.s32 0, %v645
    %v647 = vrot.slane %v635, %v646
    %v648 = vadd.f32 %v640, %v647
    %v649 = vadd.f32 %v641, %v647
    %v650 = vadd.f32 %v642, %v647
    %v651 = vadd.f32 %v643, %v647
    %v652 = vmax.f32 %v648, 0.0
    %v653 = vmax.f32 %v649, 0.0
    %v654 = vmax.f32 %v650, 0.0
    %v655 = vmax.f32 %v651, 0.0
    %v656 = vpack.c.bf16 %v653, %v652
    %v657 = vpack.c.bf16 %v655, %v654
    %v658 = vld [vmem:[%s4] sm:$0xf]
    %v659 = vld [vmem:[%s4 + $0x4] sm:$0xf]
    %v662 = vunpack.c.l.b16 %v658
    %v663 = vunpack.c.l.b16 %v659
    %v664 = vpack.c.b16 %v663, %v662
    %vm665 = vcmask 261120
    %v667 = vsel %vm665, %v664, 0
    %669 = vmatprep.subr.bf16.mxu0 0
    %670 = vmatpush1.bf16.msra.mxu0 %v656
    %671 = vmatprep.subr.bf16.mxu0 0
    %672 = vmatpush1.bf16.msra.mxu0 %v657
    %673 = vmatprep.subr.bf16.mxu0 0
    %674 = vmatpush1.bf16.msra.mxu0 0
    %675 = vmatprep.subr.bf16.mxu0 0
    %676 = vmatpush1.bf16.msra.mxu0 0
    %677 = vmatprep.subr.bf16.mxu0 0
    %678 = vmatpush1.bf16.msra.mxu0 0
    %679 = vmatprep.subr.bf16.mxu0 0
    %680 = vmatpush1.bf16.msra.mxu0 0
    %681 = vmatprep.subr.bf16.mxu0 0
    %682 = vmatpush1.bf16.msra.mxu0 0
    %683 = vmatprep.subr.bf16.mxu0 0
    %684 = vmatpush1.bf16.msra.mxu0 0
    %685 = vmatprep.subr.bf16.mxu0 0
    %686 = vmatpush1.bf16.msra.mxu0 0
    %687 = vmatprep.subr.bf16.mxu0 0
    %688 = vmatpush1.bf16.msra.mxu0 0
    %689 = vmatprep.subr.bf16.mxu0 0
    %690 = vmatpush1.bf16.msra.mxu0 0
    %691 = vmatprep.subr.bf16.mxu0 0
    %692 = vmatpush1.bf16.msra.mxu0 0
    %693 = vmatprep.subr.bf16.mxu0 0
    %694 = vmatpush1.bf16.msra.mxu0 0
    %695 = vmatprep.subr.bf16.mxu0 0
    %696 = vmatpush1.bf16.msra.mxu0 0
    %697 = vmatprep.subr.bf16.mxu0 0
    %698 = vmatpush1.bf16.msra.mxu0 0
    %699 = vmatprep.subr.bf16.mxu0 0
    %700 = vmatpush1.bf16.msra.mxu0 0
    %701 = vmatprep.mubr.bf16.mxu0 0
    %702 = vmatmul.mubr.bf16.gmra.mrb[0].mxu0 %v667
    %v703 = vpop.f32.mrb[0].mxu0
    %v704 = vadd.f32 0.0, %v703
    %v705 = vpop.f32.mrb[0].mxu0
    %v706 = vpop.f32.mrb[0].mxu0
    %v707 = vadd.f32 0.0, %v706
    %v708 = vpop.f32.mrb[0].mxu0
    %709 = vdwg.mxu0
    %v710 = vpack.c.bf16 %v707, %v704
    %s711 = scalar_lea.vmem %s4, 8
    %v712 = vld [vmem:[%s711] sm:$0xf]
    %v713 = vld [vmem:[%s711 + $0x4] sm:$0xf]
    %v716 = vunpack.c.l.b16 %v712
    %v717 = vunpack.c.l.b16 %v713
    %v718 = vpack.c.b16 %v717, %v716
    %v720 = vsel %vm665, %v718, 0
    %722 = vmatprep.subr.bf16.mxu0 0
    %723 = vmatpush1.bf16.msra.mxu0 %v656
    %724 = vmatprep.subr.bf16.mxu0 0
    %725 = vmatpush1.bf16.msra.mxu0 %v657
    %726 = vmatprep.subr.bf16.mxu0 0
    %727 = vmatpush1.bf16.msra.mxu0 0
    %728 = vmatprep.subr.bf16.mxu0 0
    %729 = vmatpush1.bf16.msra.mxu0 0
    %730 = vmatprep.subr.bf16.mxu0 0
    %731 = vmatpush1.bf16.msra.mxu0 0
    %732 = vmatprep.subr.bf16.mxu0 0
    %733 = vmatpush1.bf16.msra.mxu0 0
    %734 = vmatprep.subr.bf16.mxu0 0
    %735 = vmatpush1.bf16.msra.mxu0 0
    %736 = vmatprep.subr.bf16.mxu0 0
    %737 = vmatpush1.bf16.msra.mxu0 0
    %738 = vmatprep.subr.bf16.mxu0 0
    %739 = vmatpush1.bf16.msra.mxu0 0
    %740 = vmatprep.subr.bf16.mxu0 0
    %741 = vmatpush1.bf16.msra.mxu0 0
    %742 = vmatprep.subr.bf16.mxu0 0
    %743 = vmatpush1.bf16.msra.mxu0 0
    %744 = vmatprep.subr.bf16.mxu0 0
    %745 = vmatpush1.bf16.msra.mxu0 0
    %746 = vmatprep.subr.bf16.mxu0 0
    %747 = vmatpush1.bf16.msra.mxu0 0
    %748 = vmatprep.subr.bf16.mxu0 0
    %749 = vmatpush1.bf16.msra.mxu0 0
    %750 = vmatprep.subr.bf16.mxu0 0
    %751 = vmatpush1.bf16.msra.mxu0 0
    %752 = vmatprep.subr.bf16.mxu0 0
    %753 = vmatpush1.bf16.msra.mxu0 0
    %754 = vmatprep.mubr.bf16.mxu0 0
    %755 = vmatmul.mubr.bf16.gmra.mrb[0].mxu0 %v720
    %v756 = vpop.f32.mrb[0].mxu0
    %v757 = vadd.f32 0.0, %v756
    %v758 = vpop.f32.mrb[0].mxu0
    %v759 = vpop.f32.mrb[0].mxu0
    %v760 = vadd.f32 0.0, %v759
    %v761 = vpop.f32.mrb[0].mxu0
    %762 = vdwg.mxu0
    %v763 = vpack.c.bf16 %v760, %v757
    %s764 = scalar_lea.vmem %s4, 16
    %v765 = vld [vmem:[%s764] sm:$0xf]
    %v766 = vld [vmem:[%s764 + $0x4] sm:$0xf]
    %v769 = vunpack.c.l.b16 %v765
    %v770 = vunpack.c.l.b16 %v766
    %v771 = vpack.c.b16 %v770, %v769
    %v773 = vsel %vm665, %v771, 0
    %775 = vmatprep.subr.bf16.mxu0 0
    %776 = vmatpush1.bf16.msra.mxu0 %v656
    %777 = vmatprep.subr.bf16.mxu0 0
    %778 = vmatpush1.bf16.msra.mxu0 %v657
    %779 = vmatprep.subr.bf16.mxu0 0
    %780 = vmatpush1.bf16.msra.mxu0 0
    %781 = vmatprep.subr.bf16.mxu0 0
    %782 = vmatpush1.bf16.msra.mxu0 0
    %783 = vmatprep.subr.bf16.mxu0 0
    %784 = vmatpush1.bf16.msra.mxu0 0
    %785 = vmatprep.subr.bf16.mxu0 0
    %786 = vmatpush1.bf16.msra.mxu0 0
    %787 = vmatprep.subr.bf16.mxu0 0
    %788 = vmatpush1.bf16.msra.mxu0 0
    %789 = vmatprep.subr.bf16.mxu0 0
    %790 = vmatpush1.bf16.msra.mxu0 0
    %791 = vmatprep.subr.bf16.mxu0 0
    %792 = vmatpush1.bf16.msra.mxu0 0
    %793 = vmatprep.subr.bf16.mxu0 0
    %794 = vmatpush1.bf16.msra.mxu0 0
    %795 = vmatprep.subr.bf16.mxu0 0
    %796 = vmatpush1.bf16.msra.mxu0 0
    %797 = vmatprep.subr.bf16.mxu0 0
    %798 = vmatpush1.bf16.msra.mxu0 0
    %799 = vmatprep.subr.bf16.mxu0 0
    %800 = vmatpush1.bf16.msra.mxu0 0
    %801 = vmatprep.subr.bf16.mxu0 0
    %802 = vmatpush1.bf16.msra.mxu0 0
    %803 = vmatprep.subr.bf16.mxu0 0
    %804 = vmatpush1.bf16.msra.mxu0 0
    %805 = vmatprep.subr.bf16.mxu0 0
    %806 = vmatpush1.bf16.msra.mxu0 0
    %807 = vmatprep.mubr.bf16.mxu0 0
    %808 = vmatmul.mubr.bf16.gmra.mrb[0].mxu0 %v773
    %v809 = vpop.f32.mrb[0].mxu0
    %v810 = vadd.f32 0.0, %v809
    %v811 = vpop.f32.mrb[0].mxu0
    %v812 = vpop.f32.mrb[0].mxu0
    %v813 = vadd.f32 0.0, %v812
    %v814 = vpop.f32.mrb[0].mxu0
    %815 = vdwg.mxu0
    %v816 = vpack.c.bf16 %v813, %v810
    %v817 = vld [vmem:[%s5] sm:$0xf]
    %v818 = vld [vmem:[%s5 + $0x4] sm:$0xf]
    %v819 = vld [vmem:[%s5 + $0x8] sm:$0xf]
    %v820 = vld [vmem:[%s5 + $0xc] sm:$0xf]
    %v821 = vld [vmem:[%s5 + $0x10] sm:$0xf]
    %v822 = vld [vmem:[%s5 + $0x14] sm:$0xf]
    %v823 = vld [vmem:[%s5 + $0x18] sm:$0xf]
    %v824 = vld [vmem:[%s5 + $0x1c] sm:$0xf]
    %v825 = vld [vmem:[%s5 + $0x20] sm:$0xf]
    %v826 = vld [vmem:[%s5 + $0x24] sm:$0xf]
    %v827 = vld [vmem:[%s5 + $0x28] sm:$0xf]
    %v828 = vld [vmem:[%s5 + $0x2c] sm:$0xf]
    %v829 = vld [vmem:[%s5 + $0x30] sm:$0xf]
    %v830 = vld [vmem:[%s5 + $0x34] sm:$0xf]
    %v831 = vld [vmem:[%s5 + $0x38] sm:$0xf]
    %v832 = vld [vmem:[%s5 + $0x3c] sm:$0xf]
    %v833 = vld [vmem:[%s5 + $0x40] sm:$0xf]
    %v834 = vld [vmem:[%s5 + $0x44] sm:$0xf]
    %v835 = vld [vmem:[%s5 + $0x48] sm:$0xf]
    %v836 = vld [vmem:[%s5 + $0x4c] sm:$0xf]
    %v837 = vld [vmem:[%s5 + $0x50] sm:$0xf]
    %v838 = vld [vmem:[%s5 + $0x54] sm:$0xf]
    %v839 = vld [vmem:[%s5 + $0x58] sm:$0xf]
    %v840 = vld [vmem:[%s5 + $0x5c] sm:$0xf]
    %v841 = vld [vmem:[%s5 + $0x60] sm:$0xf]
    %v842 = vld [vmem:[%s5 + $0x64] sm:$0xf]
    %v843 = vld [vmem:[%s5 + $0x68] sm:$0xf]
    %v844 = vld [vmem:[%s5 + $0x6c] sm:$0xf]
    %v845 = vld [vmem:[%s5 + $0x70] sm:$0xf]
    %v846 = vld [vmem:[%s5 + $0x74] sm:$0xf]
    %v847 = vld [vmem:[%s5 + $0x78] sm:$0xf]
    %v848 = vld [vmem:[%s5 + $0x7c] sm:$0xf]
    %v849 = vld [vmem:[%s5 + $0x80] sm:$0xf]
    %v850 = vld [vmem:[%s5 + $0x84] sm:$0xf]
    %v851 = vld [vmem:[%s5 + $0x88] sm:$0xf]
    %v852 = vld [vmem:[%s5 + $0x8c] sm:$0xf]
    %v853 = vld [vmem:[%s5 + $0x90] sm:$0xf]
    %v854 = vld [vmem:[%s5 + $0x94] sm:$0xf]
    %v855 = vld [vmem:[%s5 + $0x98] sm:$0xf]
    %v856 = vld [vmem:[%s5 + $0x9c] sm:$0xf]
    %v857 = vld [vmem:[%s5 + $0xa0] sm:$0xf]
    %v858 = vld [vmem:[%s5 + $0xa4] sm:$0xf]
    %v859 = vld [vmem:[%s5 + $0xa8] sm:$0xf]
    %v860 = vld [vmem:[%s5 + $0xac] sm:$0xf]
    %v861 = vld [vmem:[%s5 + $0xb0] sm:$0xf]
    %v862 = vld [vmem:[%s5 + $0xb4] sm:$0xf]
    %v863 = vld [vmem:[%s5 + $0xb8] sm:$0xf]
    %v864 = vld [vmem:[%s5 + $0xbc] sm:$0xf]
    %v865 = vld [vmem:[%s6] sm:$0x1]
    %v867 = vlaneseq
    %v868 = vshrl.u32 %v867, 7
    %v869 = vsub.s32 0, %v868
    %v870 = vrot.slane %v865, %v869
    %v920 = vunpack.c.l.b16 %v817
    %v921 = vunpack.c.l.b16 %v818
    %v922 = vunpack.c.l.b16 %v819
    %v923 = vunpack.c.l.b16 %v820
    %v924 = vunpack.c.l.b16 %v821
    %v925 = vunpack.c.l.b16 %v822
    %v926 = vunpack.c.l.b16 %v823
    %v927 = vunpack.c.l.b16 %v824
    %v928 = vunpack.c.l.b16 %v825
    %v929 = vunpack.c.l.b16 %v826
    %v930 = vunpack.c.l.b16 %v827
    %v931 = vunpack.c.l.b16 %v828
    %v932 = vunpack.c.l.b16 %v829
    %v933 = vunpack.c.l.b16 %v830
    %v934 = vunpack.c.l.b16 %v831
    %v935 = vunpack.c.l.b16 %v832
    %v936 = vunpack.c.l.b16 %v833
    %v937 = vunpack.c.l.b16 %v834
    %v938 = vunpack.c.l.b16 %v835
    %v939 = vunpack.c.l.b16 %v836
    %v940 = vunpack.c.l.b16 %v837
    %v941 = vunpack.c.l.b16 %v838
    %v942 = vunpack.c.l.b16 %v839
    %v943 = vunpack.c.l.b16 %v840
    %v944 = vunpack.c.l.b16 %v841
    %v945 = vunpack.c.l.b16 %v842
    %v946 = vunpack.c.l.b16 %v843
    %v947 = vunpack.c.l.b16 %v844
    %v948 = vunpack.c.l.b16 %v845
    %v949 = vunpack.c.l.b16 %v846
    %v950 = vunpack.c.l.b16 %v847
    %v951 = vunpack.c.l.b16 %v848
    %v952 = vunpack.c.l.b16 %v849
    %v953 = vunpack.c.l.b16 %v850
    %v954 = vunpack.c.l.b16 %v851
    %v955 = vunpack.c.l.b16 %v852
    %v956 = vunpack.c.l.b16 %v853
    %v957 = vunpack.c.l.b16 %v854
    %v958 = vunpack.c.l.b16 %v855
    %v959 = vunpack.c.l.b16 %v856
    %v960 = vunpack.c.l.b16 %v857
    %v961 = vunpack.c.l.b16 %v858
    %v962 = vunpack.c.l.b16 %v859
    %v963 = vunpack.c.l.b16 %v860
    %v964 = vunpack.c.l.b16 %v861
    %v965 = vunpack.c.l.b16 %v862
    %v966 = vunpack.c.l.b16 %v863
    %v967 = vunpack.c.l.b16 %v864
    %v968 = vpack.c.b16 %v921, %v920
    %v969 = vpack.c.b16 %v923, %v922
    %v970 = vpack.c.b16 %v925, %v924
    %v971 = vpack.c.b16 %v927, %v926
    %v972 = vpack.c.b16 %v929, %v928
    %v973 = vpack.c.b16 %v931, %v930
    %v974 = vpack.c.b16 %v933, %v932
    %v975 = vpack.c.b16 %v935, %v934
    %v976 = vpack.c.b16 %v937, %v936
    %v977 = vpack.c.b16 %v939, %v938
    %v978 = vpack.c.b16 %v941, %v940
    %v979 = vpack.c.b16 %v943, %v942
    %v980 = vpack.c.b16 %v945, %v944
    %v981 = vpack.c.b16 %v947, %v946
    %v982 = vpack.c.b16 %v949, %v948
    %v983 = vpack.c.b16 %v951, %v950
    %v984 = vpack.c.b16 %v953, %v952
    %v985 = vpack.c.b16 %v955, %v954
    %v986 = vpack.c.b16 %v957, %v956
    %v987 = vpack.c.b16 %v959, %v958
    %v988 = vpack.c.b16 %v961, %v960
    %v989 = vpack.c.b16 %v963, %v962
    %v990 = vpack.c.b16 %v965, %v964
    %v991 = vpack.c.b16 %v967, %v966
    %1016 = vmatprep.subr.bf16.mxu0 0
    %1017 = vmatpush1.bf16.msra.mxu0 %v968
    %1018 = vmatprep.subr.bf16.mxu0 0
    %1019 = vmatpush1.bf16.msra.mxu0 %v969
    %1020 = vmatprep.subr.bf16.mxu0 0
    %1021 = vmatpush1.bf16.msra.mxu0 %v970
    %1022 = vmatprep.subr.bf16.mxu0 0
    %1023 = vmatpush1.bf16.msra.mxu0 %v971
    %1024 = vmatprep.subr.bf16.mxu0 0
    %1025 = vmatpush1.bf16.msra.mxu0 %v972
    %1026 = vmatprep.subr.bf16.mxu0 0
    %1027 = vmatpush1.bf16.msra.mxu0 %v973
    %1028 = vmatprep.subr.bf16.mxu0 0
    %1029 = vmatpush1.bf16.msra.mxu0 %v974
    %1030 = vmatprep.subr.bf16.mxu0 0
    %1031 = vmatpush1.bf16.msra.mxu0 %v975
    %1032 = vmatprep.subr.bf16.mxu0 0
    %1033 = vmatpush1.bf16.msra.mxu0 %v976
    %1034 = vmatprep.subr.bf16.mxu0 0
    %1035 = vmatpush1.bf16.msra.mxu0 %v977
    %1036 = vmatprep.subr.bf16.mxu0 0
    %1037 = vmatpush1.bf16.msra.mxu0 %v978
    %1038 = vmatprep.subr.bf16.mxu0 0
    %1039 = vmatpush1.bf16.msra.mxu0 %v979
    %1040 = vmatprep.subr.bf16.mxu0 0
    %1041 = vmatpush1.bf16.msra.mxu0 %v980
    %1042 = vmatprep.subr.bf16.mxu0 0
    %1043 = vmatpush1.bf16.msra.mxu0 %v981
    %1044 = vmatprep.subr.bf16.mxu0 0
    %1045 = vmatpush1.bf16.msra.mxu0 %v982
    %1046 = vmatprep.subr.bf16.mxu0 0
    %1047 = vmatpush1.bf16.msra.mxu0 %v983
    %1048 = vmatprep.mubr.bf16.mxu0 %v763
    %1049 = vmatmul.mubr.bf16.gmra.mrb[0].mxu0 %v710
    %v1050 = vpop.f32.mrb[0].mxu0
    %v1051 = vadd.f32 %v870, %v1050
    %v1052 = vpop.f32.mrb[0].mxu0
    %v1053 = vpop.f32.mrb[0].mxu0
    %v1054 = vadd.f32 %v870, %v1053
    %v1055 = vpop.f32.mrb[0].mxu0
    %1056 = vdwg.mxu0
    %1057 = vmatprep.subr.bf16.mxu0 0
    %1058 = vmatpush1.bf16.msra.mxu0 %v984
    %1059 = vmatprep.subr.bf16.mxu0 0
    %1060 = vmatpush1.bf16.msra.mxu0 %v985
    %1061 = vmatprep.subr.bf16.mxu0 0
    %1062 = vmatpush1.bf16.msra.mxu0 %v986
    %1063 = vmatprep.subr.bf16.mxu0 0
    %1064 = vmatpush1.bf16.msra.mxu0 %v987
    %1065 = vmatprep.subr.bf16.mxu0 0
    %1066 = vmatpush1.bf16.msra.mxu0 %v988
    %1067 = vmatprep.subr.bf16.mxu0 0
    %1068 = vmatpush1.bf16.msra.mxu0 %v989
    %1069 = vmatprep.subr.bf16.mxu0 0
    %1070 = vmatpush1.bf16.msra.mxu0 %v990
    %1071 = vmatprep.subr.bf16.mxu0 0
    %1072 = vmatpush1.bf16.msra.mxu0 %v991
    %1073 = vmatprep.subr.bf16.mxu0 0
    %1074 = vmatpush1.bf16.msra.mxu0 0
    %1075 = vmatprep.subr.bf16.mxu0 0
    %1076 = vmatpush1.bf16.msra.mxu0 0
    %1077 = vmatprep.subr.bf16.mxu0 0
    %1078 = vmatpush1.bf16.msra.mxu0 0
    %1079 = vmatprep.subr.bf16.mxu0 0
    %1080 = vmatpush1.bf16.msra.mxu0 0
    %1081 = vmatprep.subr.bf16.mxu0 0
    %1082 = vmatpush1.bf16.msra.mxu0 0
    %1083 = vmatprep.subr.bf16.mxu0 0
    %1084 = vmatpush1.bf16.msra.mxu0 0
    %1085 = vmatprep.subr.bf16.mxu0 0
    %1086 = vmatpush1.bf16.msra.mxu0 0
    %1087 = vmatprep.subr.bf16.mxu0 0
    %1088 = vmatpush1.bf16.msra.mxu0 0
    %1089 = vmatprep.mubr.bf16.mxu0 0
    %1090 = vmatmul.mubr.bf16.gmra.mrb[0].mxu0 %v816
    %v1091 = vpop.f32.mrb[0].mxu0
    %v1092 = vadd.f32 %v1051, %v1091
    %v1093 = vpop.f32.mrb[0].mxu0
    %v1094 = vpop.f32.mrb[0].mxu0
    %v1095 = vadd.f32 %v1054, %v1094
    %v1096 = vpop.f32.mrb[0].mxu0
    %1097 = vdwg.mxu0
    %v1098 = vadd.f32 %v1092, %v1095
    %v1099 = vrot.slane %v1098, 4
    %v1100 = vadd.f32 %v1098, %v1099
    %v1101 = vrot.slane %v1100, 2
    %v1102 = vadd.f32 %v1100, %v1101
    %v1103 = vrot.slane %v1102, 1
    %v1104 = vadd.f32 %v1102, %v1103
    %v1105 = vmul.f32 %v1092, %v1092
    %v1106 = vmul.f32 %v1095, %v1095
    %v1107 = vadd.f32 %v1105, %v1106
    %v1108 = vrot.slane %v1107, 4
    %v1109 = vadd.f32 %v1107, %v1108
    %v1110 = vrot.slane %v1109, 2
    %v1111 = vadd.f32 %v1109, %v1110
    %v1112 = vrot.slane %v1111, 1
    %v1113 = vadd.f32 %v1111, %v1112
    %v1114 = vsel %vm608, %v1104, %v1113
    %1115 = vrot.lane.b32.xlu0 %v1114, 64
    %v1116 = vpop.permute.xlu0 %1115
    %v1117 = vadd.f32 %v1114, %v1116
    %1118 = vrot.lane.b32.xlu0 %v1117, 32
    %v1119 = vpop.permute.xlu0 %1118
    %v1120 = vadd.f32 %v1117, %v1119
    %1121 = vrot.lane.b32.xlu0 %v1120, 16
    %v1122 = vpop.permute.xlu0 %1121
    %v1123 = vadd.f32 %v1120, %v1122
    %v1124 = vmul.f32 %v1123, 0.0078125
    %v1125 = vmul.f32 %v1124, %v1124
    %v1127 = vrot.slane %v1125, 7
    %v1129 = vsub.f32 %v1124, %v1127
    %v1130 = vmax.f32 %v1129, 0.0
    %v1131 = vadd.f32 %v1130, 1e-05
    %v1132 = vrsqrt.pop %v1131
    %v1133 = vsub.f32 0.0, %v1124
    %v1135 = vrot.slane %v1132, 1
    %v1137 = vmul.f32 %v1133, %v1135
    %v1138 = vlaneseq
    %v1139 = vshrl.u32 %v1138, 7
    %v1140 = vsub.s32 1, %v1139
    %v1141 = vrot.slane %v1132, %v1140
    %v1142 = vmul.f32 %v1092, %v1141
    %v1143 = vmul.f32 %v1095, %v1141
    %v1144 = vlaneseq
    %v1145 = vshrl.u32 %v1144, 7
    %v1146 = vsub.s32 0, %v1145
    %v1147 = vrot.slane %v1137, %v1146
    %v1148 = vadd.f32 %v1142, %v1147
    %v1149 = vadd.f32 %v1143, %v1147
    %v1150 = vmax.f32 %v1148, 0.0
    %v1151 = vmax.f32 %v1149, 0.0
    %v1152 = vpack.c.bf16 %v1151, %v1150
    %v1153 = vld [vmem:[%s7] sm:$0xf]
    %vm1154 = vcmask 130048
    %v1156 = vsel %vm1154, %v1153, 0
    %1158 = vmatprep.subr.bf16.mxu0 0
    %1159 = vmatpush1.bf16.msra.mxu0 %v1152
    %1160 = vmatprep.subr.bf16.mxu0 0
    %1161 = vmatpush1.bf16.msra.mxu0 0
    %1162 = vmatprep.subr.bf16.mxu0 0
    %1163 = vmatpush1.bf16.msra.mxu0 0
    %1164 = vmatprep.subr.bf16.mxu0 0
    %1165 = vmatpush1.bf16.msra.mxu0 0
    %1166 = vmatprep.subr.bf16.mxu0 0
    %1167 = vmatpush1.bf16.msra.mxu0 0
    %1168 = vmatprep.subr.bf16.mxu0 0
    %1169 = vmatpush1.bf16.msra.mxu0 0
    %1170 = vmatprep.subr.bf16.mxu0 0
    %1171 = vmatpush1.bf16.msra.mxu0 0
    %1172 = vmatprep.subr.bf16.mxu0 0
    %1173 = vmatpush1.bf16.msra.mxu0 0
    %1174 = vmatprep.subr.bf16.mxu0 0
    %1175 = vmatpush1.bf16.msra.mxu0 0
    %1176 = vmatprep.subr.bf16.mxu0 0
    %1177 = vmatpush1.bf16.msra.mxu0 0
    %1178 = vmatprep.subr.bf16.mxu0 0
    %1179 = vmatpush1.bf16.msra.mxu0 0
    %1180 = vmatprep.subr.bf16.mxu0 0
    %1181 = vmatpush1.bf16.msra.mxu0 0
    %1182 = vmatprep.subr.bf16.mxu0 0
    %1183 = vmatpush1.bf16.msra.mxu0 0
    %1184 = vmatprep.subr.bf16.mxu0 0
    %1185 = vmatpush1.bf16.msra.mxu0 0
    %1186 = vmatprep.subr.bf16.mxu0 0
    %1187 = vmatpush1.bf16.msra.mxu0 0
    %1188 = vmatprep.subr.bf16.mxu0 0
    %1189 = vmatpush1.bf16.msra.mxu0 0
    %1190 = vmatprep.mubr.bf16.mxu0 0
    %1191 = vmatmul.mubr.bf16.gmra.mrb[0].mxu0 %v1156
    %v1192 = vpop.f32.mrb[0].mxu0
    %v1193 = vadd.f32 0.0, %v1192
    %v1194 = vpop.f32.mrb[0].mxu0
    %v1195 = vpop.f32.mrb[0].mxu0
    %v1196 = vpop.f32.mrb[0].mxu0
    %1197 = vdwg.mxu0
    %v1198 = vpack.c.bf16 %v1193, %v1193
    %s1199 = scalar_lea.vmem %s7, 4
    %v1200 = vld [vmem:[%s1199] sm:$0xf]
    %v1202 = vsel %vm1154, %v1200, 0
    %1204 = vmatprep.subr.bf16.mxu0 0
    %1205 = vmatpush1.bf16.msra.mxu0 %v1152
    %1206 = vmatprep.subr.bf16.mxu0 0
    %1207 = vmatpush1.bf16.msra.mxu0 0
    %1208 = vmatprep.subr.bf16.mxu0 0
    %1209 = vmatpush1.bf16.msra.mxu0 0
    %1210 = vmatprep.subr.bf16.mxu0 0
    %1211 = vmatpush1.bf16.msra.mxu0 0
    %1212 = vmatprep.subr.bf16.mxu0 0
    %1213 = vmatpush1.bf16.msra.mxu0 0
    %1214 = vmatprep.subr.bf16.mxu0 0
    %1215 = vmatpush1.bf16.msra.mxu0 0
    %1216 = vmatprep.subr.bf16.mxu0 0
    %1217 = vmatpush1.bf16.msra.mxu0 0
    %1218 = vmatprep.subr.bf16.mxu0 0
    %1219 = vmatpush1.bf16.msra.mxu0 0
    %1220 = vmatprep.subr.bf16.mxu0 0
    %1221 = vmatpush1.bf16.msra.mxu0 0
    %1222 = vmatprep.subr.bf16.mxu0 0
    %1223 = vmatpush1.bf16.msra.mxu0 0
    %1224 = vmatprep.subr.bf16.mxu0 0
    %1225 = vmatpush1.bf16.msra.mxu0 0
    %1226 = vmatprep.subr.bf16.mxu0 0
    %1227 = vmatpush1.bf16.msra.mxu0 0
    %1228 = vmatprep.subr.bf16.mxu0 0
    %1229 = vmatpush1.bf16.msra.mxu0 0
    %1230 = vmatprep.subr.bf16.mxu0 0
    %1231 = vmatpush1.bf16.msra.mxu0 0
    %1232 = vmatprep.subr.bf16.mxu0 0
    %1233 = vmatpush1.bf16.msra.mxu0 0
    %1234 = vmatprep.subr.bf16.mxu0 0
    %1235 = vmatpush1.bf16.msra.mxu0 0
    %1236 = vmatprep.mubr.bf16.mxu0 0
    %1237 = vmatmul.mubr.bf16.gmra.mrb[0].mxu0 %v1202
    %v1238 = vpop.f32.mrb[0].mxu0
    %v1239 = vadd.f32 0.0, %v1238
    %v1240 = vpop.f32.mrb[0].mxu0
    %v1241 = vpop.f32.mrb[0].mxu0
    %v1242 = vpop.f32.mrb[0].mxu0
    %1243 = vdwg.mxu0
    %v1244 = vpack.c.bf16 %v1239, %v1239
    %s1245 = scalar_lea.vmem %s7, 8
    %v1246 = vld [vmem:[%s1245] sm:$0xf]
    %v1248 = vsel %vm1154, %v1246, 0
    %1250 = vmatprep.subr.bf16.mxu0 0
    %1251 = vmatpush1.bf16.msra.mxu0 %v1152
    %1252 = vmatprep.subr.bf16.mxu0 0
    %1253 = vmatpush1.bf16.msra.mxu0 0
    %1254 = vmatprep.subr.bf16.mxu0 0
    %1255 = vmatpush1.bf16.msra.mxu0 0
    %1256 = vmatprep.subr.bf16.mxu0 0
    %1257 = vmatpush1.bf16.msra.mxu0 0
    %1258 = vmatprep.subr.bf16.mxu0 0
    %1259 = vmatpush1.bf16.msra.mxu0 0
    %1260 = vmatprep.subr.bf16.mxu0 0
    %1261 = vmatpush1.bf16.msra.mxu0 0
    %1262 = vmatprep.subr.bf16.mxu0 0
    %1263 = vmatpush1.bf16.msra.mxu0 0
    %1264 = vmatprep.subr.bf16.mxu0 0
    %1265 = vmatpush1.bf16.msra.mxu0 0
    %1266 = vmatprep.subr.bf16.mxu0 0
    %1267 = vmatpush1.bf16.msra.mxu0 0
    %1268 = vmatprep.subr.bf16.mxu0 0
    %1269 = vmatpush1.bf16.msra.mxu0 0
    %1270 = vmatprep.subr.bf16.mxu0 0
    %1271 = vmatpush1.bf16.msra.mxu0 0
    %1272 = vmatprep.subr.bf16.mxu0 0
    %1273 = vmatpush1.bf16.msra.mxu0 0
    %1274 = vmatprep.subr.bf16.mxu0 0
    %1275 = vmatpush1.bf16.msra.mxu0 0
    %1276 = vmatprep.subr.bf16.mxu0 0
    %1277 = vmatpush1.bf16.msra.mxu0 0
    %1278 = vmatprep.subr.bf16.mxu0 0
    %1279 = vmatpush1.bf16.msra.mxu0 0
    %1280 = vmatprep.subr.bf16.mxu0 0
    %1281 = vmatpush1.bf16.msra.mxu0 0
    %1282 = vmatprep.mubr.bf16.mxu0 0
    %1283 = vmatmul.mubr.bf16.gmra.mrb[0].mxu0 %v1248
    %v1284 = vpop.f32.mrb[0].mxu0
    %v1285 = vadd.f32 0.0, %v1284
    %v1286 = vpop.f32.mrb[0].mxu0
    %v1287 = vpop.f32.mrb[0].mxu0
    %v1288 = vpop.f32.mrb[0].mxu0
    %1289 = vdwg.mxu0
    %v1290 = vpack.c.bf16 %v1285, %v1285
    %v1291 = vld [vmem:[%s8] sm:$0xf]
    %v1292 = vld [vmem:[%s8 + $0x4] sm:$0xf]
    %v1293 = vld [vmem:[%s8 + $0x8] sm:$0xf]
    %v1294 = vld [vmem:[%s8 + $0xc] sm:$0xf]
    %v1295 = vld [vmem:[%s8 + $0x10] sm:$0xf]
    %v1296 = vld [vmem:[%s8 + $0x14] sm:$0xf]
    %v1297 = vld [vmem:[%s8 + $0x18] sm:$0xf]
    %v1298 = vld [vmem:[%s8 + $0x1c] sm:$0xf]
    %v1299 = vld [vmem:[%s8 + $0x20] sm:$0xf]
    %v1300 = vld [vmem:[%s8 + $0x24] sm:$0xf]
    %v1301 = vld [vmem:[%s8 + $0x28] sm:$0xf]
    %v1302 = vld [vmem:[%s8 + $0x2c] sm:$0xf]
    %v1303 = vld [vmem:[%s8 + $0x30] sm:$0xf]
    %v1304 = vld [vmem:[%s8 + $0x34] sm:$0xf]
    %v1305 = vld [vmem:[%s8 + $0x38] sm:$0xf]
    %v1306 = vld [vmem:[%s8 + $0x3c] sm:$0xf]
    %v1307 = vld [vmem:[%s8 + $0x40] sm:$0xf]
    %v1308 = vld [vmem:[%s8 + $0x44] sm:$0xf]
    %v1309 = vld [vmem:[%s8 + $0x48] sm:$0xf]
    %v1310 = vld [vmem:[%s8 + $0x4c] sm:$0xf]
    %v1311 = vld [vmem:[%s8 + $0x50] sm:$0xf]
    %v1312 = vld [vmem:[%s8 + $0x54] sm:$0xf]
    %v1313 = vld [vmem:[%s8 + $0x58] sm:$0xf]
    %v1314 = vld [vmem:[%s8 + $0x5c] sm:$0xf]
    %v1315 = vld [vmem:[%s8 + $0x60] sm:$0xf]
    %v1316 = vld [vmem:[%s8 + $0x64] sm:$0xf]
    %v1317 = vld [vmem:[%s8 + $0x68] sm:$0xf]
    %v1318 = vld [vmem:[%s8 + $0x6c] sm:$0xf]
    %v1319 = vld [vmem:[%s8 + $0x70] sm:$0xf]
    %v1320 = vld [vmem:[%s8 + $0x74] sm:$0xf]
    %v1321 = vld [vmem:[%s8 + $0x78] sm:$0xf]
    %v1322 = vld [vmem:[%s8 + $0x7c] sm:$0xf]
    %v1323 = vld [vmem:[%s8 + $0x80] sm:$0xf]
    %v1324 = vld [vmem:[%s8 + $0x84] sm:$0xf]
    %v1325 = vld [vmem:[%s8 + $0x88] sm:$0xf]
    %v1326 = vld [vmem:[%s8 + $0x8c] sm:$0xf]
    %v1327 = vld [vmem:[%s8 + $0x90] sm:$0xf]
    %v1328 = vld [vmem:[%s8 + $0x94] sm:$0xf]
    %v1329 = vld [vmem:[%s8 + $0x98] sm:$0xf]
    %v1330 = vld [vmem:[%s8 + $0x9c] sm:$0xf]
    %v1331 = vld [vmem:[%s8 + $0xa0] sm:$0xf]
    %v1332 = vld [vmem:[%s8 + $0xa4] sm:$0xf]
    %v1333 = vld [vmem:[%s8 + $0xa8] sm:$0xf]
    %v1334 = vld [vmem:[%s8 + $0xac] sm:$0xf]
    %v1335 = vld [vmem:[%s8 + $0xb0] sm:$0xf]
    %v1336 = vld [vmem:[%s8 + $0xb4] sm:$0xf]
    %v1337 = vld [vmem:[%s8 + $0xb8] sm:$0xf]
    %v1338 = vld [vmem:[%s8 + $0xbc] sm:$0xf]
    %v1339 = vld [vmem:[%s9] sm:$0x1]
    %v1341 = vlaneseq
    %v1342 = vshrl.u32 %v1341, 7
    %v1343 = vsub.s32 0, %v1342
    %v1344 = vrot.slane %v1339, %v1343
    %v1394 = vunpack.c.l.b16 %v1291
    %v1395 = vunpack.c.l.b16 %v1292
    %v1396 = vunpack.c.l.b16 %v1293
    %v1397 = vunpack.c.l.b16 %v1294
    %v1398 = vunpack.c.l.b16 %v1295
    %v1399 = vunpack.c.l.b16 %v1296
    %v1400 = vunpack.c.l.b16 %v1297
    %v1401 = vunpack.c.l.b16 %v1298
    %v1402 = vunpack.c.l.b16 %v1299
    %v1403 = vunpack.c.l.b16 %v1300
    %v1404 = vunpack.c.l.b16 %v1301
    %v1405 = vunpack.c.l.b16 %v1302
    %v1406 = vunpack.c.l.b16 %v1303
    %v1407 = vunpack.c.l.b16 %v1304
    %v1408 = vunpack.c.l.b16 %v1305
    %v1409 = vunpack.c.l.b16 %v1306
    %v1410 = vunpack.c.l.b16 %v1307
    %v1411 = vunpack.c.l.b16 %v1308
    %v1412 = vunpack.c.l.b16 %v1309
    %v1413 = vunpack.c.l.b16 %v1310
    %v1414 = vunpack.c.l.b16 %v1311
    %v1415 = vunpack.c.l.b16 %v1312
    %v1416 = vunpack.c.l.b16 %v1313
    %v1417 = vunpack.c.l.b16 %v1314
    %v1418 = vunpack.c.l.b16 %v1315
    %v1419 = vunpack.c.l.b16 %v1316
    %v1420 = vunpack.c.l.b16 %v1317
    %v1421 = vunpack.c.l.b16 %v1318
    %v1422 = vunpack.c.l.b16 %v1319
    %v1423 = vunpack.c.l.b16 %v1320
    %v1424 = vunpack.c.l.b16 %v1321
    %v1425 = vunpack.c.l.b16 %v1322
    %v1426 = vunpack.c.l.b16 %v1323
    %v1427 = vunpack.c.l.b16 %v1324
    %v1428 = vunpack.c.l.b16 %v1325
    %v1429 = vunpack.c.l.b16 %v1326
    %v1430 = vunpack.c.l.b16 %v1327
    %v1431 = vunpack.c.l.b16 %v1328
    %v1432 = vunpack.c.l.b16 %v1329
    %v1433 = vunpack.c.l.b16 %v1330
    %v1434 = vunpack.c.l.b16 %v1331
    %v1435 = vunpack.c.l.b16 %v1332
    %v1436 = vunpack.c.l.b16 %v1333
    %v1437 = vunpack.c.l.b16 %v1334
    %v1438 = vunpack.c.l.b16 %v1335
    %v1439 = vunpack.c.l.b16 %v1336
    %v1440 = vunpack.c.l.b16 %v1337
    %v1441 = vunpack.c.l.b16 %v1338
    %v1442 = vpack.c.b16 %v1395, %v1394
    %v1443 = vpack.c.b16 %v1397, %v1396
    %v1444 = vpack.c.b16 %v1399, %v1398
    %v1445 = vpack.c.b16 %v1401, %v1400
    %v1446 = vpack.c.b16 %v1403, %v1402
    %v1447 = vpack.c.b16 %v1405, %v1404
    %v1448 = vpack.c.b16 %v1407, %v1406
    %v1449 = vpack.c.b16 %v1409, %v1408
    %v1450 = vpack.c.b16 %v1411, %v1410
    %v1451 = vpack.c.b16 %v1413, %v1412
    %v1452 = vpack.c.b16 %v1415, %v1414
    %v1453 = vpack.c.b16 %v1417, %v1416
    %v1454 = vpack.c.b16 %v1419, %v1418
    %v1455 = vpack.c.b16 %v1421, %v1420
    %v1456 = vpack.c.b16 %v1423, %v1422
    %v1457 = vpack.c.b16 %v1425, %v1424
    %v1458 = vpack.c.b16 %v1427, %v1426
    %v1459 = vpack.c.b16 %v1429, %v1428
    %v1460 = vpack.c.b16 %v1431, %v1430
    %v1461 = vpack.c.b16 %v1433, %v1432
    %v1462 = vpack.c.b16 %v1435, %v1434
    %v1463 = vpack.c.b16 %v1437, %v1436
    %v1464 = vpack.c.b16 %v1439, %v1438
    %v1465 = vpack.c.b16 %v1441, %v1440
    %1490 = vmatprep.subr.bf16.mxu0 0
    %1491 = vmatpush1.bf16.msra.mxu0 %v1442
    %1492 = vmatprep.subr.bf16.mxu0 0
    %1493 = vmatpush1.bf16.msra.mxu0 %v1443
    %1494 = vmatprep.subr.bf16.mxu0 0
    %1495 = vmatpush1.bf16.msra.mxu0 %v1444
    %1496 = vmatprep.subr.bf16.mxu0 0
    %1497 = vmatpush1.bf16.msra.mxu0 %v1445
    %1498 = vmatprep.subr.bf16.mxu0 0
    %1499 = vmatpush1.bf16.msra.mxu0 %v1446
    %1500 = vmatprep.subr.bf16.mxu0 0
    %1501 = vmatpush1.bf16.msra.mxu0 %v1447
    %1502 = vmatprep.subr.bf16.mxu0 0
    %1503 = vmatpush1.bf16.msra.mxu0 %v1448
    %1504 = vmatprep.subr.bf16.mxu0 0
    %1505 = vmatpush1.bf16.msra.mxu0 %v1449
    %1506 = vmatprep.subr.bf16.mxu0 0
    %1507 = vmatpush1.bf16.msra.mxu0 %v1450
    %1508 = vmatprep.subr.bf16.mxu0 0
    %1509 = vmatpush1.bf16.msra.mxu0 %v1451
    %1510 = vmatprep.subr.bf16.mxu0 0
    %1511 = vmatpush1.bf16.msra.mxu0 %v1452
    %1512 = vmatprep.subr.bf16.mxu0 0
    %1513 = vmatpush1.bf16.msra.mxu0 %v1453
    %1514 = vmatprep.subr.bf16.mxu0 0
    %1515 = vmatpush1.bf16.msra.mxu0 %v1454
    %1516 = vmatprep.subr.bf16.mxu0 0
    %1517 = vmatpush1.bf16.msra.mxu0 %v1455
    %1518 = vmatprep.subr.bf16.mxu0 0
    %1519 = vmatpush1.bf16.msra.mxu0 %v1456
    %1520 = vmatprep.subr.bf16.mxu0 0
    %1521 = vmatpush1.bf16.msra.mxu0 %v1457
    %1522 = vmatprep.mubr.bf16.mxu0 %v1244
    %1523 = vmatmul.mubr.bf16.gmra.mrb[0].mxu0 %v1198
    %v1524 = vpop.f32.mrb[0].mxu0
    %v1525 = vadd.f32 %v1344, %v1524
    %v1526 = vpop.f32.mrb[0].mxu0
    %v1527 = vpop.f32.mrb[0].mxu0
    %v1528 = vpop.f32.mrb[0].mxu0
    %1529 = vdwg.mxu0
    %1530 = vmatprep.subr.bf16.mxu0 0
    %1531 = vmatpush1.bf16.msra.mxu0 %v1458
    %1532 = vmatprep.subr.bf16.mxu0 0
    %1533 = vmatpush1.bf16.msra.mxu0 %v1459
    %1534 = vmatprep.subr.bf16.mxu0 0
    %1535 = vmatpush1.bf16.msra.mxu0 %v1460
    %1536 = vmatprep.subr.bf16.mxu0 0
    %1537 = vmatpush1.bf16.msra.mxu0 %v1461
    %1538 = vmatprep.subr.bf16.mxu0 0
    %1539 = vmatpush1.bf16.msra.mxu0 %v1462
    %1540 = vmatprep.subr.bf16.mxu0 0
    %1541 = vmatpush1.bf16.msra.mxu0 %v1463
    %1542 = vmatprep.subr.bf16.mxu0 0
    %1543 = vmatpush1.bf16.msra.mxu0 %v1464
    %1544 = vmatprep.subr.bf16.mxu0 0
    %1545 = vmatpush1.bf16.msra.mxu0 %v1465
    %1546 = vmatprep.subr.bf16.mxu0 0
    %1547 = vmatpush1.bf16.msra.mxu0 0
    %1548 = vmatprep.subr.bf16.mxu0 0
    %1549 = vmatpush1.bf16.msra.mxu0 0
    %1550 = vmatprep.subr.bf16.mxu0 0
    %1551 = vmatpush1.bf16.msra.mxu0 0
    %1552 = vmatprep.subr.bf16.mxu0 0
    %1553 = vmatpush1.bf16.msra.mxu0 0
    %1554 = vmatprep.subr.bf16.mxu0 0
    %1555 = vmatpush1.bf16.msra.mxu0 0
    %1556 = vmatprep.subr.bf16.mxu0 0
    %1557 = vmatpush1.bf16.msra.mxu0 0
    %1558 = vmatprep.subr.bf16.mxu0 0
    %1559 = vmatpush1.bf16.msra.mxu0 0
    %1560 = vmatprep.subr.bf16.mxu0 0
    %1561 = vmatpush1.bf16.msra.mxu0 0
    %1562 = vmatprep.mubr.bf16.mxu0 0
    %1563 = vmatmul.mubr.bf16.gmra.mrb[0].mxu0 %v1290
    %v1564 = vpop.f32.mrb[0].mxu0
    %v1565 = vadd.f32 %v1525, %v1564
    %v1566 = vpop.f32.mrb[0].mxu0
    %v1567 = vpop.f32.mrb[0].mxu0
    %v1568 = vpop.f32.mrb[0].mxu0
    %1569 = vdwg.mxu0
    %v1570 = vrot.slane %v1565, 4
    %v1571 = vadd.f32 %v1565, %v1570
    %v1572 = vrot.slane %v1571, 2
    %v1573 = vadd.f32 %v1571, %v1572
    %v1574 = vrot.slane %v1573, 1
    %v1575 = vadd.f32 %v1573, %v1574
    %v1576 = vmul.f32 %v1565, %v1565
    %v1577 = vrot.slane %v1576, 4
    %v1578 = vadd.f32 %v1576, %v1577
    %v1579 = vrot.slane %v1578, 2
    %v1580 = vadd.f32 %v1578, %v1579
    %v1581 = vrot.slane %v1580, 1
    %v1582 = vadd.f32 %v1580, %v1581
    %v1583 = vsel %vm608, %v1575, %v1582
    %1584 = vrot.lane.b32.xlu0 %v1583, 64
    %v1585 = vpop.permute.xlu0 %1584
    %v1586 = vadd.f32 %v1583, %v1585
    %1587 = vrot.lane.b32.xlu0 %v1586, 32
    %v1588 = vpop.permute.xlu0 %1587
    %v1589 = vadd.f32 %v1586, %v1588
    %v1590 = vmul.f32 %v1589, 0.03125
    %v1591 = vmul.f32 %v1590, %v1590
    %v1593 = vrot.slane %v1591, 7
    %v1595 = vsub.f32 %v1590, %v1593
    %v1596 = vmax.f32 %v1595, 0.0
    %v1597 = vadd.f32 %v1596, 1e-05
    %v1598 = vrsqrt.pop %v1597
    %v1599 = vsub.f32 0.0, %v1590
    %v1601 = vrot.slane %v1598, 1
    %v1603 = vmul.f32 %v1599, %v1601
    %v1604 = vlaneseq
    %v1605 = vshrl.u32 %v1604, 7
    %v1606 = vsub.s32 1, %v1605
    %v1607 = vrot.slane %v1598, %v1606
    %v1608 = vmul.f32 %v1565, %v1607
    %v1609 = vlaneseq
    %v1610 = vshrl.u32 %v1609, 7
    %v1611 = vsub.s32 0, %v1610
    %v1612 = vrot.slane %v1603, %v1611
    %v1613 = vadd.f32 %v1608, %v1612
    %v1614 = vmax.f32 %v1613, 0.0
    %v1615 = vpack.c.bf16 %v1614, %v1614
    %v1616 = vld [vmem:[%s10] sm:$0x3]
    %vm1617 = vcmask 64512
    %v1619 = vsel %vm1617, %v1616, 0
    %vm1621 = vcmask 1043456
    %v1623 = vsel %vm1621, %v1615, 0
    %1625 = vmatprep.subr.bf16.mxu0 0
    %1626 = vmatpush1.bf16.msra.mxu0 %v1623
    %1627 = vmatprep.subr.bf16.mxu0 0
    %1628 = vmatpush1.bf16.msra.mxu0 0
    %1629 = vmatprep.subr.bf16.mxu0 0
    %1630 = vmatpush1.bf16.msra.mxu0 0
    %1631 = vmatprep.subr.bf16.mxu0 0
    %1632 = vmatpush1.bf16.msra.mxu0 0
    %1633 = vmatprep.subr.bf16.mxu0 0
    %1634 = vmatpush1.bf16.msra.mxu0 0
    %1635 = vmatprep.subr.bf16.mxu0 0
    %1636 = vmatpush1.bf16.msra.mxu0 0
    %1637 = vmatprep.subr.bf16.mxu0 0
    %1638 = vmatpush1.bf16.msra.mxu0 0
    %1639 = vmatprep.subr.bf16.mxu0 0
    %1640 = vmatpush1.bf16.msra.mxu0 0
    %1641 = vmatprep.subr.bf16.mxu0 0
    %1642 = vmatpush1.bf16.msra.mxu0 0
    %1643 = vmatprep.subr.bf16.mxu0 0
    %1644 = vmatpush1.bf16.msra.mxu0 0
    %1645 = vmatprep.subr.bf16.mxu0 0
    %1646 = vmatpush1.bf16.msra.mxu0 0
    %1647 = vmatprep.subr.bf16.mxu0 0
    %1648 = vmatpush1.bf16.msra.mxu0 0
    %1649 = vmatprep.subr.bf16.mxu0 0
    %1650 = vmatpush1.bf16.msra.mxu0 0
    %1651 = vmatprep.subr.bf16.mxu0 0
    %1652 = vmatpush1.bf16.msra.mxu0 0
    %1653 = vmatprep.subr.bf16.mxu0 0
    %1654 = vmatpush1.bf16.msra.mxu0 0
    %1655 = vmatprep.subr.bf16.mxu0 0
    %1656 = vmatpush1.bf16.msra.mxu0 0
    %1657 = vmatprep.mubr.bf16.mxu0 0
    %1658 = vmatmul.mubr.bf16.gmra.mrb[0].mxu0 %v1619
    %v1659 = vpop.f32.mrb[0].mxu0
    %v1660 = vadd.f32 0.0, %v1659
    %v1661 = vpop.f32.mrb[0].mxu0
    %v1662 = vpop.f32.mrb[0].mxu0
    %v1663 = vpop.f32.mrb[0].mxu0
    %1664 = vdwg.mxu0
    %v1665 = vpack.c.bf16 %v1660, %v1660
    %s1666 = scalar_lea.vmem %s10, 2
    %v1667 = vld [vmem:[%s1666] sm:$0x3]
    %v1669 = vsel %vm1617, %v1667, 0
    %1671 = vmatprep.subr.bf16.mxu0 0
    %1672 = vmatpush1.bf16.msra.mxu0 %v1623
    %1673 = vmatprep.subr.bf16.mxu0 0
    %1674 = vmatpush1.bf16.msra.mxu0 0
    %1675 = vmatprep.subr.bf16.mxu0 0
    %1676 = vmatpush1.bf16.msra.mxu0 0
    %1677 = vmatprep.subr.bf16.mxu0 0
    %1678 = vmatpush1.bf16.msra.mxu0 0
    %1679 = vmatprep.subr.bf16.mxu0 0
    %1680 = vmatpush1.bf16.msra.mxu0 0
    %1681 = vmatprep.subr.bf16.mxu0 0
    %1682 = vmatpush1.bf16.msra.mxu0 0
    %1683 = vmatprep.subr.bf16.mxu0 0
    %1684 = vmatpush1.bf16.msra.mxu0 0
    %1685 = vmatprep.subr.bf16.mxu0 0
    %1686 = vmatpush1.bf16.msra.mxu0 0
    %1687 = vmatprep.subr.bf16.mxu0 0
    %1688 = vmatpush1.bf16.msra.mxu0 0
    %1689 = vmatprep.subr.bf16.mxu0 0
    %1690 = vmatpush1.bf16.msra.mxu0 0
    %1691 = vmatprep.subr.bf16.mxu0 0
    %1692 = vmatpush1.bf16.msra.mxu0 0
    %1693 = vmatprep.subr.bf16.mxu0 0
    %1694 = vmatpush1.bf16.msra.mxu0 0
    %1695 = vmatprep.subr.bf16.mxu0 0
    %1696 = vmatpush1.bf16.msra.mxu0 0
    %1697 = vmatprep.subr.bf16.mxu0 0
    %1698 = vmatpush1.bf16.msra.mxu0 0
    %1699 = vmatprep.subr.bf16.mxu0 0
    %1700 = vmatpush1.bf16.msra.mxu0 0
    %1701 = vmatprep.subr.bf16.mxu0 0
    %1702 = vmatpush1.bf16.msra.mxu0 0
    %1703 = vmatprep.mubr.bf16.mxu0 0
    %1704 = vmatmul.mubr.bf16.gmra.mrb[0].mxu0 %v1669
    %v1705 = vpop.f32.mrb[0].mxu0
    %v1706 = vadd.f32 0.0, %v1705
    %v1707 = vpop.f32.mrb[0].mxu0
    %v1708 = vpop.f32.mrb[0].mxu0
    %v1709 = vpop.f32.mrb[0].mxu0
    %1710 = vdwg.mxu0
    %v1711 = vpack.c.bf16 %v1706, %v1706
    %s1712 = scalar_lea.vmem %s10, 4
    %v1713 = vld [vmem:[%s1712] sm:$0x3]
    %v1715 = vsel %vm1617, %v1713, 0
    %1717 = vmatprep.subr.bf16.mxu0 0
    %1718 = vmatpush1.bf16.msra.mxu0 %v1623
    %1719 = vmatprep.subr.bf16.mxu0 0
    %1720 = vmatpush1.bf16.msra.mxu0 0
    %1721 = vmatprep.subr.bf16.mxu0 0
    %1722 = vmatpush1.bf16.msra.mxu0 0
    %1723 = vmatprep.subr.bf16.mxu0 0
    %1724 = vmatpush1.bf16.msra.mxu0 0
    %1725 = vmatprep.subr.bf16.mxu0 0
    %1726 = vmatpush1.bf16.msra.mxu0 0
    %1727 = vmatprep.subr.bf16.mxu0 0
    %1728 = vmatpush1.bf16.msra.mxu0 0
    %1729 = vmatprep.subr.bf16.mxu0 0
    %1730 = vmatpush1.bf16.msra.mxu0 0
    %1731 = vmatprep.subr.bf16.mxu0 0
    %1732 = vmatpush1.bf16.msra.mxu0 0
    %1733 = vmatprep.subr.bf16.mxu0 0
    %1734 = vmatpush1.bf16.msra.mxu0 0
    %1735 = vmatprep.subr.bf16.mxu0 0
    %1736 = vmatpush1.bf16.msra.mxu0 0
    %1737 = vmatprep.subr.bf16.mxu0 0
    %1738 = vmatpush1.bf16.msra.mxu0 0
    %1739 = vmatprep.subr.bf16.mxu0 0
    %1740 = vmatpush1.bf16.msra.mxu0 0
    %1741 = vmatprep.subr.bf16.mxu0 0
    %1742 = vmatpush1.bf16.msra.mxu0 0
    %1743 = vmatprep.subr.bf16.mxu0 0
    %1744 = vmatpush1.bf16.msra.mxu0 0
    %1745 = vmatprep.subr.bf16.mxu0 0
    %1746 = vmatpush1.bf16.msra.mxu0 0
    %1747 = vmatprep.subr.bf16.mxu0 0
    %1748 = vmatpush1.bf16.msra.mxu0 0
    %1749 = vmatprep.mubr.bf16.mxu0 0
    %1750 = vmatmul.mubr.bf16.gmra.mrb[0].mxu0 %v1715
    %v1751 = vpop.f32.mrb[0].mxu0
    %v1752 = vadd.f32 0.0, %v1751
    %v1753 = vpop.f32.mrb[0].mxu0
    %v1754 = vpop.f32.mrb[0].mxu0
    %v1755 = vpop.f32.mrb[0].mxu0
    %1756 = vdwg.mxu0
    %v1757 = vpack.c.bf16 %v1752, %v1752
    %v1758 = vld [vmem:[%s11] sm:$0xf]
    %v1759 = vld [vmem:[%s11 + $0x4] sm:$0xf]
    %v1760 = vld [vmem:[%s11 + $0x8] sm:$0xf]
    %v1761 = vld [vmem:[%s11 + $0xc] sm:$0xf]
    %v1762 = vld [vmem:[%s11 + $0x10] sm:$0xf]
    %v1763 = vld [vmem:[%s11 + $0x14] sm:$0xf]
    %v1764 = vld [vmem:[%s11 + $0x18] sm:$0xf]
    %v1765 = vld [vmem:[%s11 + $0x1c] sm:$0xf]
    %v1766 = vld [vmem:[%s11 + $0x20] sm:$0xf]
    %v1767 = vld [vmem:[%s11 + $0x24] sm:$0xf]
    %v1768 = vld [vmem:[%s11 + $0x28] sm:$0xf]
    %v1769 = vld [vmem:[%s11 + $0x2c] sm:$0xf]
    %v1770 = vld [vmem:[%s11 + $0x30] sm:$0xf]
    %v1771 = vld [vmem:[%s11 + $0x34] sm:$0xf]
    %v1772 = vld [vmem:[%s11 + $0x38] sm:$0xf]
    %v1773 = vld [vmem:[%s11 + $0x3c] sm:$0xf]
    %v1774 = vld [vmem:[%s11 + $0x40] sm:$0xf]
    %v1775 = vld [vmem:[%s11 + $0x44] sm:$0xf]
    %v1776 = vld [vmem:[%s11 + $0x48] sm:$0xf]
    %v1777 = vld [vmem:[%s11 + $0x4c] sm:$0xf]
    %v1778 = vld [vmem:[%s11 + $0x50] sm:$0xf]
    %v1779 = vld [vmem:[%s11 + $0x54] sm:$0xf]
    %v1780 = vld [vmem:[%s11 + $0x58] sm:$0xf]
    %v1781 = vld [vmem:[%s11 + $0x5c] sm:$0xf]
    %v1782 = vld [vmem:[%s11 + $0x60] sm:$0xf]
    %v1783 = vld [vmem:[%s11 + $0x64] sm:$0xf]
    %v1784 = vld [vmem:[%s11 + $0x68] sm:$0xf]
    %v1785 = vld [vmem:[%s11 + $0x6c] sm:$0xf]
    %v1786 = vld [vmem:[%s11 + $0x70] sm:$0xf]
    %v1787 = vld [vmem:[%s11 + $0x74] sm:$0xf]
    %v1788 = vld [vmem:[%s11 + $0x78] sm:$0xf]
    %v1789 = vld [vmem:[%s11 + $0x7c] sm:$0xf]
    %v1790 = vld [vmem:[%s11 + $0x80] sm:$0xf]
    %v1791 = vld [vmem:[%s11 + $0x84] sm:$0xf]
    %v1792 = vld [vmem:[%s11 + $0x88] sm:$0xf]
    %v1793 = vld [vmem:[%s11 + $0x8c] sm:$0xf]
    %v1794 = vld [vmem:[%s11 + $0x90] sm:$0xf]
    %v1795 = vld [vmem:[%s11 + $0x94] sm:$0xf]
    %v1796 = vld [vmem:[%s11 + $0x98] sm:$0xf]
    %v1797 = vld [vmem:[%s11 + $0x9c] sm:$0xf]
    %v1798 = vld [vmem:[%s11 + $0xa0] sm:$0xf]
    %v1799 = vld [vmem:[%s11 + $0xa4] sm:$0xf]
    %v1800 = vld [vmem:[%s11 + $0xa8] sm:$0xf]
    %v1801 = vld [vmem:[%s11 + $0xac] sm:$0xf]
    %v1802 = vld [vmem:[%s11 + $0xb0] sm:$0xf]
    %v1803 = vld [vmem:[%s11 + $0xb4] sm:$0xf]
    %v1804 = vld [vmem:[%s11 + $0xb8] sm:$0xf]
    %v1805 = vld [vmem:[%s11 + $0xbc] sm:$0xf]
    %v1806 = vld [vmem:[%s12] sm:$0x1]
    %v1808 = vlaneseq
    %v1809 = vshrl.u32 %v1808, 7
    %v1810 = vsub.s32 0, %v1809
    %v1811 = vrot.slane %v1806, %v1810
    %v1861 = vunpack.c.l.b16 %v1758
    %v1862 = vunpack.c.l.b16 %v1759
    %v1863 = vunpack.c.l.b16 %v1760
    %v1864 = vunpack.c.l.b16 %v1761
    %v1865 = vunpack.c.l.b16 %v1762
    %v1866 = vunpack.c.l.b16 %v1763
    %v1867 = vunpack.c.l.b16 %v1764
    %v1868 = vunpack.c.l.b16 %v1765
    %v1869 = vunpack.c.l.b16 %v1766
    %v1870 = vunpack.c.l.b16 %v1767
    %v1871 = vunpack.c.l.b16 %v1768
    %v1872 = vunpack.c.l.b16 %v1769
    %v1873 = vunpack.c.l.b16 %v1770
    %v1874 = vunpack.c.l.b16 %v1771
    %v1875 = vunpack.c.l.b16 %v1772
    %v1876 = vunpack.c.l.b16 %v1773
    %v1877 = vunpack.c.l.b16 %v1774
    %v1878 = vunpack.c.l.b16 %v1775
    %v1879 = vunpack.c.l.b16 %v1776
    %v1880 = vunpack.c.l.b16 %v1777
    %v1881 = vunpack.c.l.b16 %v1778
    %v1882 = vunpack.c.l.b16 %v1779
    %v1883 = vunpack.c.l.b16 %v1780
    %v1884 = vunpack.c.l.b16 %v1781
    %v1885 = vunpack.c.l.b16 %v1782
    %v1886 = vunpack.c.l.b16 %v1783
    %v1887 = vunpack.c.l.b16 %v1784
    %v1888 = vunpack.c.l.b16 %v1785
    %v1889 = vunpack.c.l.b16 %v1786
    %v1890 = vunpack.c.l.b16 %v1787
    %v1891 = vunpack.c.l.b16 %v1788
    %v1892 = vunpack.c.l.b16 %v1789
    %v1893 = vunpack.c.l.b16 %v1790
    %v1894 = vunpack.c.l.b16 %v1791
    %v1895 = vunpack.c.l.b16 %v1792
    %v1896 = vunpack.c.l.b16 %v1793
    %v1897 = vunpack.c.l.b16 %v1794
    %v1898 = vunpack.c.l.b16 %v1795
    %v1899 = vunpack.c.l.b16 %v1796
    %v1900 = vunpack.c.l.b16 %v1797
    %v1901 = vunpack.c.l.b16 %v1798
    %v1902 = vunpack.c.l.b16 %v1799
    %v1903 = vunpack.c.l.b16 %v1800
    %v1904 = vunpack.c.l.b16 %v1801
    %v1905 = vunpack.c.l.b16 %v1802
    %v1906 = vunpack.c.l.b16 %v1803
    %v1907 = vunpack.c.l.b16 %v1804
    %v1908 = vunpack.c.l.b16 %v1805
    %v1909 = vpack.c.b16 %v1862, %v1861
    %v1910 = vpack.c.b16 %v1864, %v1863
    %v1911 = vpack.c.b16 %v1866, %v1865
    %v1912 = vpack.c.b16 %v1868, %v1867
    %v1913 = vpack.c.b16 %v1870, %v1869
    %v1914 = vpack.c.b16 %v1872, %v1871
    %v1915 = vpack.c.b16 %v1874, %v1873
    %v1916 = vpack.c.b16 %v1876, %v1875
    %v1917 = vpack.c.b16 %v1878, %v1877
    %v1918 = vpack.c.b16 %v1880, %v1879
    %v1919 = vpack.c.b16 %v1882, %v1881
    %v1920 = vpack.c.b16 %v1884, %v1883
    %v1921 = vpack.c.b16 %v1886, %v1885
    %v1922 = vpack.c.b16 %v1888, %v1887
    %v1923 = vpack.c.b16 %v1890, %v1889
    %v1924 = vpack.c.b16 %v1892, %v1891
    %v1925 = vpack.c.b16 %v1894, %v1893
    %v1926 = vpack.c.b16 %v1896, %v1895
    %v1927 = vpack.c.b16 %v1898, %v1897
    %v1928 = vpack.c.b16 %v1900, %v1899
    %v1929 = vpack.c.b16 %v1902, %v1901
    %v1930 = vpack.c.b16 %v1904, %v1903
    %v1931 = vpack.c.b16 %v1906, %v1905
    %v1932 = vpack.c.b16 %v1908, %v1907
    %1957 = vmatprep.subr.bf16.mxu0 0
    %1958 = vmatpush1.bf16.msra.mxu0 %v1909
    %1959 = vmatprep.subr.bf16.mxu0 0
    %1960 = vmatpush1.bf16.msra.mxu0 %v1910
    %1961 = vmatprep.subr.bf16.mxu0 0
    %1962 = vmatpush1.bf16.msra.mxu0 %v1911
    %1963 = vmatprep.subr.bf16.mxu0 0
    %1964 = vmatpush1.bf16.msra.mxu0 %v1912
    %1965 = vmatprep.subr.bf16.mxu0 0
    %1966 = vmatpush1.bf16.msra.mxu0 %v1913
    %1967 = vmatprep.subr.bf16.mxu0 0
    %1968 = vmatpush1.bf16.msra.mxu0 %v1914
    %1969 = vmatprep.subr.bf16.mxu0 0
    %1970 = vmatpush1.bf16.msra.mxu0 %v1915
    %1971 = vmatprep.subr.bf16.mxu0 0
    %1972 = vmatpush1.bf16.msra.mxu0 %v1916
    %1973 = vmatprep.subr.bf16.mxu0 0
    %1974 = vmatpush1.bf16.msra.mxu0 %v1917
    %1975 = vmatprep.subr.bf16.mxu0 0
    %1976 = vmatpush1.bf16.msra.mxu0 %v1918
    %1977 = vmatprep.subr.bf16.mxu0 0
    %1978 = vmatpush1.bf16.msra.mxu0 %v1919
    %1979 = vmatprep.subr.bf16.mxu0 0
    %1980 = vmatpush1.bf16.msra.mxu0 %v1920
    %1981 = vmatprep.subr.bf16.mxu0 0
    %1982 = vmatpush1.bf16.msra.mxu0 %v1921
    %1983 = vmatprep.subr.bf16.mxu0 0
    %1984 = vmatpush1.bf16.msra.mxu0 %v1922
    %1985 = vmatprep.subr.bf16.mxu0 0
    %1986 = vmatpush1.bf16.msra.mxu0 %v1923
    %1987 = vmatprep.subr.bf16.mxu0 0
    %1988 = vmatpush1.bf16.msra.mxu0 %v1924
    %1989 = vmatprep.mubr.bf16.mxu0 %v1711
    %1990 = vmatmul.mubr.bf16.gmra.mrb[0].mxu0 %v1665
    %v1991 = vpop.f32.mrb[0].mxu0
    %v1992 = vadd.f32 %v1811, %v1991
    %v1993 = vpop.f32.mrb[0].mxu0
    %v1994 = vpop.f32.mrb[0].mxu0
    %v1995 = vpop.f32.mrb[0].mxu0
    %1996 = vdwg.mxu0
    %1997 = vmatprep.subr.bf16.mxu0 0
    %1998 = vmatpush1.bf16.msra.mxu0 %v1925
    %1999 = vmatprep.subr.bf16.mxu0 0
    %2000 = vmatpush1.bf16.msra.mxu0 %v1926
    %2001 = vmatprep.subr.bf16.mxu0 0
    %2002 = vmatpush1.bf16.msra.mxu0 %v1927
    %2003 = vmatprep.subr.bf16.mxu0 0
    %2004 = vmatpush1.bf16.msra.mxu0 %v1928
    %2005 = vmatprep.subr.bf16.mxu0 0
    %2006 = vmatpush1.bf16.msra.mxu0 %v1929
    %2007 = vmatprep.subr.bf16.mxu0 0
    %2008 = vmatpush1.bf16.msra.mxu0 %v1930
    %2009 = vmatprep.subr.bf16.mxu0 0
    %2010 = vmatpush1.bf16.msra.mxu0 %v1931
    %2011 = vmatprep.subr.bf16.mxu0 0
    %2012 = vmatpush1.bf16.msra.mxu0 %v1932
    %2013 = vmatprep.subr.bf16.mxu0 0
    %2014 = vmatpush1.bf16.msra.mxu0 0
    %2015 = vmatprep.subr.bf16.mxu0 0
    %2016 = vmatpush1.bf16.msra.mxu0 0
    %2017 = vmatprep.subr.bf16.mxu0 0
    %2018 = vmatpush1.bf16.msra.mxu0 0
    %2019 = vmatprep.subr.bf16.mxu0 0
    %2020 = vmatpush1.bf16.msra.mxu0 0
    %2021 = vmatprep.subr.bf16.mxu0 0
    %2022 = vmatpush1.bf16.msra.mxu0 0
    %2023 = vmatprep.subr.bf16.mxu0 0
    %2024 = vmatpush1.bf16.msra.mxu0 0
    %2025 = vmatprep.subr.bf16.mxu0 0
    %2026 = vmatpush1.bf16.msra.mxu0 0
    %2027 = vmatprep.subr.bf16.mxu0 0
    %2028 = vmatpush1.bf16.msra.mxu0 0
    %2029 = vmatprep.mubr.bf16.mxu0 0
    %2030 = vmatmul.mubr.bf16.gmra.mrb[0].mxu0 %v1757
    %v2031 = vpop.f32.mrb[0].mxu0
    %v2032 = vadd.f32 %v1992, %v2031
    %v2033 = vpop.f32.mrb[0].mxu0
    %v2034 = vpop.f32.mrb[0].mxu0
    %v2035 = vpop.f32.mrb[0].mxu0
    %2036 = vdwg.mxu0
    %v2037 = vsel %vm1621, %v2032, 0.0
    %v2038 = vrot.slane %v2037, 4
    %v2039 = vadd.f32 %v2037, %v2038
    %v2040 = vrot.slane %v2039, 2
    %v2041 = vadd.f32 %v2039, %v2040
    %v2042 = vrot.slane %v2041, 1
    %v2043 = vadd.f32 %v2041, %v2042
    %v2044 = vmul.f32 %v2032, %v2032
    %v2045 = vsel %vm1621, %v2044, 0.0
    %v2046 = vrot.slane %v2045, 4
    %v2047 = vadd.f32 %v2045, %v2046
    %v2048 = vrot.slane %v2047, 2
    %v2049 = vadd.f32 %v2047, %v2048
    %v2050 = vrot.slane %v2049, 1
    %v2051 = vadd.f32 %v2049, %v2050
    %v2052 = vsel %vm608, %v2043, %v2051
    %2053 = vrot.lane.b32.xlu0 %v2052, 64
    %v2054 = vpop.permute.xlu0 %2053
    %v2055 = vadd.f32 %v2052, %v2054
    %v2056 = vmul.f32 %v2055, 0.125
    %v2057 = vmul.f32 %v2056, %v2056
    %v2059 = vrot.slane %v2057, 7
    %v2061 = vsub.f32 %v2056, %v2059
    %v2062 = vmax.f32 %v2061, 0.0
    %v2063 = vadd.f32 %v2062, 1e-05
    %v2064 = vrsqrt.pop %v2063
    %v2065 = vsub.f32 0.0, %v2056
    %v2067 = vrot.slane %v2064, 1
    %v2069 = vmul.f32 %v2065, %v2067
    %v2070 = vlaneseq
    %v2071 = vshrl.u32 %v2070, 7
    %v2072 = vsub.s32 1, %v2071
    %v2073 = vrot.slane %v2064, %v2072
    %v2074 = vmul.f32 %v2032, %v2073
    %v2075 = vlaneseq
    %v2076 = vshrl.u32 %v2075, 7
    %v2077 = vsub.s32 0, %v2076
    %v2078 = vrot.slane %v2069, %v2077
    %v2079 = vadd.f32 %v2074, %v2078
    %v2080 = vmax.f32 %v2079, 0.0
    %v2081 = vpack.c.bf16 %v2080, %v2080
    %v2082 = vld [vmem:[%s13] sm:$0x1]
    %vm2083 = vcmask 31744
    %v2085 = vsel %vm2083, %v2082, 0
    %vm2087 = vcmask 1041408
    %v2089 = vsel %vm2087, %v2081, 0
    %2091 = vmatprep.subr.bf16.mxu0 0
    %2092 = vmatpush1.bf16.msra.mxu0 %v2089
    %2093 = vmatprep.subr.bf16.mxu0 0
    %2094 = vmatpush1.bf16.msra.mxu0 0
    %2095 = vmatprep.subr.bf16.mxu0 0
    %2096 = vmatpush1.bf16.msra.mxu0 0
    %2097 = vmatprep.subr.bf16.mxu0 0
    %2098 = vmatpush1.bf16.msra.mxu0 0
    %2099 = vmatprep.subr.bf16.mxu0 0
    %2100 = vmatpush1.bf16.msra.mxu0 0
    %2101 = vmatprep.subr.bf16.mxu0 0
    %2102 = vmatpush1.bf16.msra.mxu0 0
    %2103 = vmatprep.subr.bf16.mxu0 0
    %2104 = vmatpush1.bf16.msra.mxu0 0
    %2105 = vmatprep.subr.bf16.mxu0 0
    %2106 = vmatpush1.bf16.msra.mxu0 0
    %2107 = vmatprep.subr.bf16.mxu0 0
    %2108 = vmatpush1.bf16.msra.mxu0 0
    %2109 = vmatprep.subr.bf16.mxu0 0
    %2110 = vmatpush1.bf16.msra.mxu0 0
    %2111 = vmatprep.subr.bf16.mxu0 0
    %2112 = vmatpush1.bf16.msra.mxu0 0
    %2113 = vmatprep.subr.bf16.mxu0 0
    %2114 = vmatpush1.bf16.msra.mxu0 0
    %2115 = vmatprep.subr.bf16.mxu0 0
    %2116 = vmatpush1.bf16.msra.mxu0 0
    %2117 = vmatprep.subr.bf16.mxu0 0
    %2118 = vmatpush1.bf16.msra.mxu0 0
    %2119 = vmatprep.subr.bf16.mxu0 0
    %2120 = vmatpush1.bf16.msra.mxu0 0
    %2121 = vmatprep.subr.bf16.mxu0 0
    %2122 = vmatpush1.bf16.msra.mxu0 0
    %2123 = vmatprep.mubr.bf16.mxu0 0
    %2124 = vmatmul.mubr.bf16.gmra.mrb[0].mxu0 %v2085
    %v2125 = vpop.f32.mrb[0].mxu0
    %v2126 = vadd.f32 0.0, %v2125
    %v2127 = vpop.f32.mrb[0].mxu0
    %v2128 = vpop.f32.mrb[0].mxu0
    %v2129 = vpop.f32.mrb[0].mxu0
    %2130 = vdwg.mxu0
    %v2131 = vpack.c.bf16 %v2126, %v2126
    %s2132 = scalar_lea.vmem %s13, 1
    %v2133 = vld [vmem:[%s2132] sm:$0x1]
    %v2135 = vsel %vm2083, %v2133, 0
    %2137 = vmatprep.subr.bf16.mxu0 0
    %2138 = vmatpush1.bf16.msra.mxu0 %v2089
    %2139 = vmatprep.subr.bf16.mxu0 0
    %2140 = vmatpush1.bf16.msra.mxu0 0
    %2141 = vmatprep.subr.bf16.mxu0 0
    %2142 = vmatpush1.bf16.msra.mxu0 0
    %2143 = vmatprep.subr.bf16.mxu0 0
    %2144 = vmatpush1.bf16.msra.mxu0 0
    %2145 = vmatprep.subr.bf16.mxu0 0
    %2146 = vmatpush1.bf16.msra.mxu0 0
    %2147 = vmatprep.subr.bf16.mxu0 0
    %2148 = vmatpush1.bf16.msra.mxu0 0
    %2149 = vmatprep.subr.bf16.mxu0 0
    %2150 = vmatpush1.bf16.msra.mxu0 0
    %2151 = vmatprep.subr.bf16.mxu0 0
    %2152 = vmatpush1.bf16.msra.mxu0 0
    %2153 = vmatprep.subr.bf16.mxu0 0
    %2154 = vmatpush1.bf16.msra.mxu0 0
    %2155 = vmatprep.subr.bf16.mxu0 0
    %2156 = vmatpush1.bf16.msra.mxu0 0
    %2157 = vmatprep.subr.bf16.mxu0 0
    %2158 = vmatpush1.bf16.msra.mxu0 0
    %2159 = vmatprep.subr.bf16.mxu0 0
    %2160 = vmatpush1.bf16.msra.mxu0 0
    %2161 = vmatprep.subr.bf16.mxu0 0
    %2162 = vmatpush1.bf16.msra.mxu0 0
    %2163 = vmatprep.subr.bf16.mxu0 0
    %2164 = vmatpush1.bf16.msra.mxu0 0
    %2165 = vmatprep.subr.bf16.mxu0 0
    %2166 = vmatpush1.bf16.msra.mxu0 0
    %2167 = vmatprep.subr.bf16.mxu0 0
    %2168 = vmatpush1.bf16.msra.mxu0 0
    %2169 = vmatprep.mubr.bf16.mxu0 0
    %2170 = vmatmul.mubr.bf16.gmra.mrb[0].mxu0 %v2135
    %v2171 = vpop.f32.mrb[0].mxu0
    %v2172 = vadd.f32 0.0, %v2171
    %v2173 = vpop.f32.mrb[0].mxu0
    %v2174 = vpop.f32.mrb[0].mxu0
    %v2175 = vpop.f32.mrb[0].mxu0
    %2176 = vdwg.mxu0
    %v2177 = vpack.c.bf16 %v2172, %v2172
    %v2178 = vld [vmem:[%s14] sm:$0xf]
    %v2179 = vld [vmem:[%s14 + $0x4] sm:$0xf]
    %v2180 = vld [vmem:[%s14 + $0x8] sm:$0xf]
    %v2181 = vld [vmem:[%s14 + $0xc] sm:$0xf]
    %v2182 = vld [vmem:[%s14 + $0x10] sm:$0xf]
    %v2183 = vld [vmem:[%s14 + $0x14] sm:$0xf]
    %v2184 = vld [vmem:[%s14 + $0x18] sm:$0xf]
    %v2185 = vld [vmem:[%s14 + $0x1c] sm:$0xf]
    %v2186 = vld [vmem:[%s14 + $0x20] sm:$0xf]
    %v2187 = vld [vmem:[%s14 + $0x24] sm:$0xf]
    %v2188 = vld [vmem:[%s14 + $0x28] sm:$0xf]
    %v2189 = vld [vmem:[%s14 + $0x2c] sm:$0xf]
    %v2190 = vld [vmem:[%s14 + $0x30] sm:$0xf]
    %v2191 = vld [vmem:[%s14 + $0x34] sm:$0xf]
    %v2192 = vld [vmem:[%s14 + $0x38] sm:$0xf]
    %v2193 = vld [vmem:[%s14 + $0x3c] sm:$0xf]
    %v2194 = vld [vmem:[%s14 + $0x40] sm:$0xf]
    %v2195 = vld [vmem:[%s14 + $0x44] sm:$0xf]
    %v2196 = vld [vmem:[%s14 + $0x48] sm:$0xf]
    %v2197 = vld [vmem:[%s14 + $0x4c] sm:$0xf]
    %v2198 = vld [vmem:[%s14 + $0x50] sm:$0xf]
    %v2199 = vld [vmem:[%s14 + $0x54] sm:$0xf]
    %v2200 = vld [vmem:[%s14 + $0x58] sm:$0xf]
    %v2201 = vld [vmem:[%s14 + $0x5c] sm:$0xf]
    %v2202 = vld [vmem:[%s14 + $0x60] sm:$0xf]
    %v2203 = vld [vmem:[%s14 + $0x64] sm:$0xf]
    %v2204 = vld [vmem:[%s14 + $0x68] sm:$0xf]
    %v2205 = vld [vmem:[%s14 + $0x6c] sm:$0xf]
    %v2206 = vld [vmem:[%s14 + $0x70] sm:$0xf]
    %v2207 = vld [vmem:[%s14 + $0x74] sm:$0xf]
    %v2208 = vld [vmem:[%s14 + $0x78] sm:$0xf]
    %v2209 = vld [vmem:[%s14 + $0x7c] sm:$0xf]
    %v2210 = vld [vmem:[%s15] sm:$0x1]
    %v2212 = vlaneseq
    %v2213 = vshrl.u32 %v2212, 7
    %v2214 = vsub.s32 0, %v2213
    %v2215 = vrot.slane %v2210, %v2214
    %v2249 = vunpack.c.l.b16 %v2178
    %v2250 = vunpack.c.l.b16 %v2179
    %v2251 = vunpack.c.l.b16 %v2180
    %v2252 = vunpack.c.l.b16 %v2181
    %v2253 = vunpack.c.l.b16 %v2182
    %v2254 = vunpack.c.l.b16 %v2183
    %v2255 = vunpack.c.l.b16 %v2184
    %v2256 = vunpack.c.l.b16 %v2185
    %v2257 = vunpack.c.l.b16 %v2186
    %v2258 = vunpack.c.l.b16 %v2187
    %v2259 = vunpack.c.l.b16 %v2188
    %v2260 = vunpack.c.l.b16 %v2189
    %v2261 = vunpack.c.l.b16 %v2190
    %v2262 = vunpack.c.l.b16 %v2191
    %v2263 = vunpack.c.l.b16 %v2192
    %v2264 = vunpack.c.l.b16 %v2193
    %v2265 = vunpack.c.l.b16 %v2194
    %v2266 = vunpack.c.l.b16 %v2195
    %v2267 = vunpack.c.l.b16 %v2196
    %v2268 = vunpack.c.l.b16 %v2197
    %v2269 = vunpack.c.l.b16 %v2198
    %v2270 = vunpack.c.l.b16 %v2199
    %v2271 = vunpack.c.l.b16 %v2200
    %v2272 = vunpack.c.l.b16 %v2201
    %v2273 = vunpack.c.l.b16 %v2202
    %v2274 = vunpack.c.l.b16 %v2203
    %v2275 = vunpack.c.l.b16 %v2204
    %v2276 = vunpack.c.l.b16 %v2205
    %v2277 = vunpack.c.l.b16 %v2206
    %v2278 = vunpack.c.l.b16 %v2207
    %v2279 = vunpack.c.l.b16 %v2208
    %v2280 = vunpack.c.l.b16 %v2209
    %v2281 = vpack.c.b16 %v2250, %v2249
    %v2282 = vpack.c.b16 %v2252, %v2251
    %v2283 = vpack.c.b16 %v2254, %v2253
    %v2284 = vpack.c.b16 %v2256, %v2255
    %v2285 = vpack.c.b16 %v2258, %v2257
    %v2286 = vpack.c.b16 %v2260, %v2259
    %v2287 = vpack.c.b16 %v2262, %v2261
    %v2288 = vpack.c.b16 %v2264, %v2263
    %v2289 = vpack.c.b16 %v2266, %v2265
    %v2290 = vpack.c.b16 %v2268, %v2267
    %v2291 = vpack.c.b16 %v2270, %v2269
    %v2292 = vpack.c.b16 %v2272, %v2271
    %v2293 = vpack.c.b16 %v2274, %v2273
    %v2294 = vpack.c.b16 %v2276, %v2275
    %v2295 = vpack.c.b16 %v2278, %v2277
    %v2296 = vpack.c.b16 %v2280, %v2279
    %2313 = vmatprep.subr.bf16.mxu0 0
    %2314 = vmatpush1.bf16.msra.mxu0 %v2281
    %2315 = vmatprep.subr.bf16.mxu0 0
    %2316 = vmatpush1.bf16.msra.mxu0 %v2282
    %2317 = vmatprep.subr.bf16.mxu0 0
    %2318 = vmatpush1.bf16.msra.mxu0 %v2283
    %2319 = vmatprep.subr.bf16.mxu0 0
    %2320 = vmatpush1.bf16.msra.mxu0 %v2284
    %2321 = vmatprep.subr.bf16.mxu0 0
    %2322 = vmatpush1.bf16.msra.mxu0 %v2285
    %2323 = vmatprep.subr.bf16.mxu0 0
    %2324 = vmatpush1.bf16.msra.mxu0 %v2286
    %2325 = vmatprep.subr.bf16.mxu0 0
    %2326 = vmatpush1.bf16.msra.mxu0 %v2287
    %2327 = vmatprep.subr.bf16.mxu0 0
    %2328 = vmatpush1.bf16.msra.mxu0 %v2288
    %2329 = vmatprep.subr.bf16.mxu0 0
    %2330 = vmatpush1.bf16.msra.mxu0 %v2289
    %2331 = vmatprep.subr.bf16.mxu0 0
    %2332 = vmatpush1.bf16.msra.mxu0 %v2290
    %2333 = vmatprep.subr.bf16.mxu0 0
    %2334 = vmatpush1.bf16.msra.mxu0 %v2291
    %2335 = vmatprep.subr.bf16.mxu0 0
    %2336 = vmatpush1.bf16.msra.mxu0 %v2292
    %2337 = vmatprep.subr.bf16.mxu0 0
    %2338 = vmatpush1.bf16.msra.mxu0 %v2293
    %2339 = vmatprep.subr.bf16.mxu0 0
    %2340 = vmatpush1.bf16.msra.mxu0 %v2294
    %2341 = vmatprep.subr.bf16.mxu0 0
    %2342 = vmatpush1.bf16.msra.mxu0 %v2295
    %2343 = vmatprep.subr.bf16.mxu0 0
    %2344 = vmatpush1.bf16.msra.mxu0 %v2296
    %2345 = vmatprep.mubr.bf16.mxu0 %v2177
    %2346 = vmatmul.mubr.bf16.gmra.mrb[0].mxu0 %v2131
    %v2347 = vpop.f32.mrb[0].mxu0
    %v2348 = vadd.f32 %v2215, %v2347
    %v2349 = vpop.f32.mrb[0].mxu0
    %v2350 = vpop.f32.mrb[0].mxu0
    %v2351 = vpop.f32.mrb[0].mxu0
    %2352 = vdwg.mxu0
    %vm2353 = vcmask 254976
    %v2354 = vsel %vm2353, %v2348, 0.0
    %v2355 = vrot.slane %v2354, 4
    %v2356 = vadd.f32 %v2354, %v2355
    %v2357 = vrot.slane %v2356, 2
    %v2358 = vadd.f32 %v2356, %v2357
    %v2359 = vrot.slane %v2358, 1
    %v2360 = vadd.f32 %v2358, %v2359
    %v2361 = vmul.f32 %v2348, %v2348
    %v2362 = vsel %vm2353, %v2361, 0.0
    %v2363 = vrot.slane %v2362, 4
    %v2364 = vadd.f32 %v2362, %v2363
    %v2365 = vrot.slane %v2364, 2
    %v2366 = vadd.f32 %v2364, %v2365
    %v2367 = vrot.slane %v2366, 1
    %v2368 = vadd.f32 %v2366, %v2367
    %v2369 = vsel %vm608, %v2360, %v2368
    %v2370 = vmul.f32 %v2369, 0.5
    %v2371 = vmul.f32 %v2370, %v2370
    %v2373 = vrot.slane %v2371, 7
    %v2375 = vsub.f32 %v2370, %v2373
    %v2376 = vmax.f32 %v2375, 0.0
    %v2377 = vadd.f32 %v2376, 1e-05
    %v2378 = vrsqrt.pop %v2377
    %v2379 = vsub.f32 0.0, %v2370
    %v2381 = vrot.slane %v2378, 1
    %v2383 = vmul.f32 %v2379, %v2381
    %v2384 = vlaneseq
    %v2385 = vshrl.u32 %v2384, 7
    %v2386 = vsub.s32 1, %v2385
    %v2387 = vrot.slane %v2378, %v2386
    %v2388 = vmul.f32 %v2348, %v2387
    %v2389 = vlaneseq
    %v2390 = vshrl.u32 %v2389, 7
    %v2391 = vsub.s32 0, %v2390
    %v2392 = vrot.slane %v2383, %v2391
    %v2393 = vadd.f32 %v2388, %v2392
    %v2394 = vmax.f32 %v2393, 0.0
    %v2395 = vpack.c.bf16 %v2394, %v2394
    %v2396 = vld [vmem:[%s16] sm:$0xf]
    %v2397 = vld [vmem:[%s16 + $0x4] sm:$0xf]
    %v2398 = vld [vmem:[%s16 + $0x8] sm:$0xf]
    %v2399 = vld [vmem:[%s16 + $0xc] sm:$0xf]
    %v2400 = vld [vmem:[%s17] sm:$0x1]
    %v2402 = vlaneseq
    %v2403 = vshrl.u32 %v2402, 7
    %v2404 = vsub.s32 0, %v2403
    %v2405 = vrot.slane %v2400, %v2404
    %v2411 = vunpack.c.l.b16 %v2396
    %v2412 = vunpack.c.l.b16 %v2397
    %v2413 = vunpack.c.l.b16 %v2398
    %v2414 = vunpack.c.l.b16 %v2399
    %v2415 = vpack.c.b16 %v2412, %v2411
    %v2416 = vpack.c.b16 %v2414, %v2413
    %v2420 = vsel %vm665, %v2395, 0
    %2422 = vmatprep.subr.bf16.mxu0 0
    %2423 = vmatpush1.bf16.msra.mxu0 %v2415
    %2424 = vmatprep.subr.bf16.mxu0 0
    %2425 = vmatpush1.bf16.msra.mxu0 %v2416
    %2426 = vmatprep.subr.bf16.mxu0 0
    %2427 = vmatpush1.bf16.msra.mxu0 0
    %2428 = vmatprep.subr.bf16.mxu0 0
    %2429 = vmatpush1.bf16.msra.mxu0 0
    %2430 = vmatprep.subr.bf16.mxu0 0
    %2431 = vmatpush1.bf16.msra.mxu0 0
    %2432 = vmatprep.subr.bf16.mxu0 0
    %2433 = vmatpush1.bf16.msra.mxu0 0
    %2434 = vmatprep.subr.bf16.mxu0 0
    %2435 = vmatpush1.bf16.msra.mxu0 0
    %2436 = vmatprep.subr.bf16.mxu0 0
    %2437 = vmatpush1.bf16.msra.mxu0 0
    %2438 = vmatprep.subr.bf16.mxu0 0
    %2439 = vmatpush1.bf16.msra.mxu0 0
    %2440 = vmatprep.subr.bf16.mxu0 0
    %2441 = vmatpush1.bf16.msra.mxu0 0
    %2442 = vmatprep.subr.bf16.mxu0 0
    %2443 = vmatpush1.bf16.msra.mxu0 0
    %2444 = vmatprep.subr.bf16.mxu0 0
    %2445 = vmatpush1.bf16.msra.mxu0 0
    %2446 = vmatprep.subr.bf16.mxu0 0
    %2447 = vmatpush1.bf16.msra.mxu0 0
    %2448 = vmatprep.subr.bf16.mxu0 0
    %2449 = vmatpush1.bf16.msra.mxu0 0
    %2450 = vmatprep.subr.bf16.mxu0 0
    %2451 = vmatpush1.bf16.msra.mxu0 0
    %2452 = vmatprep.subr.bf16.mxu0 0
    %2453 = vmatpush1.bf16.msra.mxu0 0
    %2454 = vmatprep.mubr.bf16.mxu0 0
    %2455 = vmatmul.mubr.bf16.gmra.mrb[0].mxu0 %v2420
    %v2456 = vpop.f32.mrb[0].mxu0
    %v2457 = vadd.f32 %v2405, %v2456
    %v2458 = vpop.f32.mrb[0].mxu0
    %v2459 = vpop.f32.mrb[0].mxu0
    %v2460 = vpop.f32.mrb[0].mxu0
    %2461 = vdwg.mxu0
    %vm2462 = vcmask 74752
    %v2463 = vsel %vm2462, %v2457, -inf
    %2464 = vmax.xlane.f32.xlu0 %v2463
    %v2465 = vpop.xlane.xlu0 %2464
    %v2466 = vsub.f32 %v2457, %v2465
    %v2467 = vmul.f32 %v2466, 1.442695
    %v2468 = vpow.pop %v2467
    %v2469 = vsel %vm2462, %v2468, 0.0
    %2470 = vadd.xlane.f32.xlu0 %v2469
    %v2471 = vpop.xlane.xlu0 %2470
    %v2472 = vrcp.pop %v2471
    %v2473 = vmul.f32 %v2468, %v2472
    %2474 = vst.msk [vmem:[#allocation2] sm:$0x3] %vm2462, %v2473
    // Predicated region
    $region74: #{net_simple_conv2fc_forward.1} parent=1 // pred_check
      _
    $region75: #{net_simple_conv2fc_forward.1} parent=1 // pred_check_branch
      %2476 = sbr.rel (0) target = $region77
    $region76: #{net_simple_conv2fc_forward.1} parent=1 // pred_region
      %s2478 = ssub.s32 32, 32
      %2479 = vsyncadd [#allocation3], %s2478
      %s2481 = sshll.u32 [#allocation2], 4
      %s2482 = int_to_ptr.vmem [resolvable:$true] %s2481
      %2484 = dma.vmem_to_hbm [thread:$0]  %s2482, 32, %s18, [#allocation3]
    $region77: #{net_simple_conv2fc_forward.1} parent=1 // pred_fallthru
      _
    // Predicated region
    $region78: #{net_simple_conv2fc_forward.1} parent=1 // pred_check
      _
    $region79: #{net_simple_conv2fc_forward.1} parent=1 // pred_check_branch
      %2486 = sbr.rel (0) target = $region81
    $region80: #{net_simple_conv2fc_forward.1} parent=1 // pred_region
      %2487 = dma.done [#allocation3], 32
    $region81: #{net_simple_conv2fc_forward.1} parent=1 // pred_fallthru
      _
    %2488 = vsyncpa [#allocation3], 1

</llo_original>
